<compile_context>
chip_gen: v5e
topology: v5e:2x2
jax: 0.10.0
libtpu: 0.0.40
codegen_flags: <defaults>
</compile_context>

<pallas_src>
import math
import functools

import jax
import jax.numpy as jnp
from jax import lax
from jax.experimental import pallas as pl
from jax.experimental.pallas import tpu as pltpu


_OUT_PAD = 128  # padded lane width of the action-head output


# ----------------------------------------------------------------------------
# The single fused kernel: encoder + decoder + final norm + action head
# ----------------------------------------------------------------------------
def _fused_transformer_kernel(tokens_ref, w_ref, v_ref, out_ref, *, w_off, v_off, cfg):
    D = cfg["dim_model"]
    H = cfg["n_heads"]
    dh = D // H
    chunk = cfg["chunk_size"]
    n_enc = cfg["n_encoder_layers"]
    n_dec = cfg["n_decoder_layers"]
    bf16 = jnp.bfloat16

    def rw(name):                       # static-offset read from the bf16 weight slab
        off, r, c = w_off[name]
        return w_ref[off:off + r, 0:c]

    def rv(name):                       # static-offset read from the f32 vector slab
        off, r, c = v_off[name]
        return v_ref[off:off + r, 0:c]

    def layernorm(x, name):
        gb = rv(name)                   # (2, D): row0 = gamma, row1 = beta
        mean = jnp.mean(x, axis=-1, keepdims=True)
        cen = x - mean
        var = jnp.mean(cen * cen, axis=-1, keepdims=True)
        return cen * lax.rsqrt(var + 1e-5) * gb[0:1, :] + gb[1:2, :]

    def attend(q, k, v, tag):
        # q/k/v are bf16 with biases, pos and the 1/sqrt(dh) scale already folded in.
        heads = []
        for h in range(H):
            sl = slice(h * dh, (h + 1) * dh)
            sc = lax.dot_general(q[:, sl], k[:, sl], (((1,), (1,)), ((), ())),
                                 preferred_element_type=jnp.float32)
            sc = sc - jnp.max(sc, axis=-1, keepdims=True)
            ex = jnp.exp(sc)
            inv = pl.reciprocal(jnp.sum(ex, axis=-1, keepdims=True), approx=True)
            heads.append(jnp.dot((ex * inv).astype(bf16), v[:, sl],
                                 preferred_element_type=jnp.float32))
        o = jnp.concatenate(heads, axis=-1).astype(bf16)        # (Sq, D)
        return (jnp.dot(o, rw(f"{tag}_wo"), preferred_element_type=jnp.float32)
                + rv(f"{tag}_bo"))

    def self_attn(x, tag):
        # One fused (S,D)@(D,3D) projection; pos-dependent bias precomputed.
        qkv = (jnp.dot(x.astype(bf16), rw(f"{tag}_wqkv"),
                       preferred_element_type=jnp.float32)
               + rv(f"{tag}_qkvb")).astype(bf16)                # (S, 3D)
        return attend(qkv[:, 0:D], qkv[:, D:2 * D], qkv[:, 2 * D:3 * D], tag)

    def cross_attn(y, mem, tag):
        q = (jnp.dot(y.astype(bf16), rw(f"{tag}_wq"),
                     preferred_element_type=jnp.float32)
             + rv(f"{tag}_qb")).astype(bf16)                    # (chunk, D)
        kv = (jnp.dot(mem.astype(bf16), rw(f"{tag}_wkv"),
                      preferred_element_type=jnp.float32)
              + rv(f"{tag}_kvb")).astype(bf16)                  # (S, 2D)
        return attend(q, kv[:, 0:D], kv[:, D:2 * D], tag)

    def ffn(x, tag):
        h1 = (jnp.dot(x.astype(bf16), rw(f"{tag}_w1"),
                      preferred_element_type=jnp.float32) + rv(f"{tag}_b1"))
        h1 = jnp.maximum(h1, 0.0).astype(bf16)                  # ACT FFN activation: ReLU
        return (jnp.dot(h1, rw(f"{tag}_w2"),
                        preferred_element_type=jnp.float32) + rv(f"{tag}_b2"))

    # ---------------- encoder (post-norm) ----------------
    x = tokens_ref[...]                                         # (S, D) f32
    for l in range(n_enc):
        x = layernorm(x + self_attn(x, f"enc{l}_sa"), f"enc{l}_n1")
        x = layernorm(x + ffn(x, f"enc{l}_ffn"), f"enc{l}_n2")
    enc_out = x

    # ---------------- decoder (post-norm) ----------------
    y = jnp.zeros((chunk, D), jnp.float32)
    for l in range(n_dec):
        if l == 0:
            # decoder input is exactly zero => V rows are all bv => self-attention
            # output is the precomputed constant bv@wo + bo for every query.
            y = jnp.broadcast_to(rv("dec0_sa_const"), (chunk, D))
        else:
            y = y + self_attn(y, f"dec{l}_sa")
        y = layernorm(y, f"dec{l}_n1")
        y = layernorm(y + cross_attn(y, enc_out, f"dec{l}_ca"), f"dec{l}_n2")
        y = layernorm(y + ffn(y, f"dec{l}_ffn"), f"dec{l}_n3")

    # ACTDecoder final LayerNorm + action head (output padded to 128 lanes)
    y = layernorm(y, "dec_norm")
    out_ref[...] = (jnp.dot(y.astype(bf16), rw("action_w"),
                            preferred_element_type=jnp.float32) + rv("action_b"))


def _fused_transformer_call(fused, tokens, cfg):
    kern = functools.partial(_fused_transformer_kernel,
                             w_off=fused["w_off"], v_off=fused["v_off"], cfg=cfg)
    vmem = pl.BlockSpec(memory_space=pltpu.MemorySpace.VMEM)
    out = pl.pallas_call(
        kern,
        out_shape=jax.ShapeDtypeStruct((cfg["chunk_size"], _OUT_PAD), jnp.float32),
        in_specs=[vmem, vmem, vmem],
        out_specs=vmem,
        compiler_params=pltpu.CompilerParams(vmem_limit_bytes=32 * 1024 * 1024),
    )(tokens, fused["w_slab"], fused["v_slab"])
    return out[:, : cfg["action_dim"]]


# ----------------------------------------------------------------------------
# ACT sinusoidal 2D positional embedding (prep-time only; input-independent)
# ----------------------------------------------------------------------------
def sinusoidal_pos_embed_2d(h, w, dim_model):
    d = dim_model // 2
    two_pi = 2.0 * math.pi
    eps = 1e-6
    temperature = 10000.0
    not_mask = jnp.ones((1, h, w), dtype=jnp.float32)
    y_range = jnp.cumsum(not_mask, axis=1)
    x_range = jnp.cumsum(not_mask, axis=2)
    y_range = y_range / (y_range[:, -1:, :] + eps) * two_pi
    x_range = x_range / (x_range[:, :, -1:] + eps) * two_pi
    inv_freq = temperature ** (2 * (jnp.arange(d) // 2) / d)
    x_r = x_range[..., None] / inv_freq
    y_r = y_range[..., None] / inv_freq
    pe_x = jnp.stack((jnp.sin(x_r[..., 0::2]), jnp.cos(x_r[..., 1::2])), axis=-1
                     ).reshape(1, h, w, d)
    pe_y = jnp.stack((jnp.sin(y_r[..., 0::2]), jnp.cos(y_r[..., 1::2])), axis=-1
                     ).reshape(1, h, w, d)
    pe = jnp.concatenate((pe_y, pe_x), axis=3)
    return jnp.transpose(pe, (0, 3, 1, 2))                      # (1, dim_model, h, w)


# ----------------------------------------------------------------------------
# Prep-time parameter packing: fold pos / scale / zero-input algebra, build slabs
# ----------------------------------------------------------------------------
def _pack_slab(items, width, dtype, row_align):
    offsets, blocks, row = {}, [], 0
    for name, arr in items:
        arr = jnp.asarray(arr, jnp.float32)
        r, c = arr.shape
        assert c <= width, (name, arr.shape)
        rp = ((r + row_align - 1) // row_align) * row_align
        block = jnp.zeros((rp, width), jnp.float32).at[:r, :c].set(arr)
        blocks.append(block)
        offsets[name] = (row, r, c)
        row += rp
    return jnp.concatenate(blocks, axis=0).astype(dtype), offsets


def prepare_fused_params(params, cfg, cam_shapes):
    D = cfg["dim_model"]
    H = cfg["n_heads"]
    dh = D // H
    scale = 1.0 / math.sqrt(dh)
    chunk = cfg["chunk_size"]
    Le, Ld = cfg["n_encoder_layers"], cfg["n_decoder_layers"]

    # --- precompute encoder pos embedding (input-independent) ---
    cam_pos = [sinusoidal_pos_embed_2d(h, w, c) for (c, h, w) in cam_shapes]
    cam_pos_cat = jnp.concatenate(cam_pos, axis=-1)
    cam_pos_tok = jnp.transpose(cam_pos_cat, (2, 3, 0, 1)).reshape(-1, D)
    pos = jnp.concatenate([params["enc_1d_pos"], cam_pos_tok], axis=0)   # (S, D)
    S = pos.shape[0]
    dec_pos = params["dec_pos"]                                          # (chunk, D)

    w_items, v_items = [], []

    def fold_self_attn(tag, a, l, pos_arr):
        wq, wk, wv = a["wq"][l], a["wk"][l], a["wv"][l]
        bq, bk, bv = a["bq"][l], a["bk"][l], a["bv"][l]
        wq_s, bq_s = wq * scale, bq * scale       # fold 1/sqrt(dh) into W_q AND b_q
        n = pos_arr.shape[0]
        w_items.append((f"{tag}_wqkv", jnp.concatenate([wq_s, wk, wv], axis=1)))
        w_items.append((f"{tag}_wo", a["wo"][l]))
        v_items.append((f"{tag}_qkvb", jnp.concatenate(
            [pos_arr @ wq_s + bq_s,               # q = (x+pos)@wq*scale + bq*scale
             pos_arr @ wk + bk,                   # k = (x+pos)@wk + bk
             jnp.broadcast_to(bv, (n, D))],       # v = x@wv + bv   (no pos)
            axis=1)))
        v_items.append((f"{tag}_bo", a["bo"][l]))

    def fold_ffn(tag, f, l):
        w_items.append((f"{tag}_w1", f["w1"][l]))
        w_items.append((f"{tag}_w2", f["w2"][l]))
        v_items.append((f"{tag}_b1", f["b1"][l]))
        v_items.append((f"{tag}_b2", f["b2"][l]))

    def fold_ln(tag, n, l=None):
        g = n["g"] if l is None else n["g"][l]
        b = n["b"] if l is None else n["b"][l]
        v_items.append((tag, jnp.concatenate([g, b], axis=0)))   # (2, D)

    e = params["enc"]
    for l in range(Le):
        fold_self_attn(f"enc{l}_sa", e["sa"], l, pos)
        fold_ffn(f"enc{l}_ffn", e["ffn"], l)
        fold_ln(f"enc{l}_n1", e["n1"], l)
        fold_ln(f"enc{l}_n2", e["n2"], l)

    d = params["dec"]
    for l in range(Ld):
        if l == 0:
            # zero decoder input: self-attention output == bv @ wo + bo (constant)
            sa = d["sa"]
            v_items.append((f"dec{l}_sa_const",
                            sa["bv"][l] @ sa["wo"][l] + sa["bo"][l]))
        else:
            fold_self_attn(f"dec{l}_sa", d["sa"], l, dec_pos)
        ca = d["ca"]
        wq_s, bq_s = ca["wq"][l] * scale, ca["bq"][l] * scale
        w_items.append((f"dec{l}_ca_wq", wq_s))
        w_items.append((f"dec{l}_ca_wkv",
                        jnp.concatenate([ca["wk"][l], ca["wv"][l]], axis=1)))
        w_items.append((f"dec{l}_ca_wo", ca["wo"][l]))
        v_items.append((f"dec{l}_ca_qb", dec_pos @ wq_s + bq_s))          # (chunk, D)
        v_items.append((f"dec{l}_ca_kvb", jnp.concatenate(
            [pos @ ca["wk"][l] + ca["bk"][l],
             jnp.broadcast_to(ca["bv"][l], (S, D))], axis=1)))            # (S, 2D)
        v_items.append((f"dec{l}_ca_bo", ca["bo"][l]))
        fold_ffn(f"dec{l}_ffn", d["ffn"], l)
        fold_ln(f"dec{l}_n1", d["n1"], l)
        fold_ln(f"dec{l}_n2", d["n2"], l)
        fold_ln(f"dec{l}_n3", d["n3"], l)

    fold_ln("dec_norm", params["dec_norm"])

    A = cfg["action_dim"]
    wa = jnp.zeros((D, _OUT_PAD), jnp.float32).at[:, :A].set(params["action_head"]["w"])
    ba = jnp.zeros((1, _OUT_PAD), jnp.float32).at[:, :A].set(params["action_head"]["b"])
    w_items.append(("action_w", wa))
    v_items.append(("action_b", ba))

    w_slab, w_off = _pack_slab(w_items, 128, jnp.bfloat16, 16)
    v_slab, v_off = _pack_slab(v_items, 128, jnp.float32, 8)
    return {"w_slab": w_slab, "w_off": w_off,
            "v_slab": v_slab, "v_off": v_off,
            "pos": pos, "seq_len": int(S)}


# ----------------------------------------------------------------------------
# Token assembly (plain-JAX glue under jit; matches torch cat/permute/view order)
# ----------------------------------------------------------------------------
def _assemble_tokens(params, states, vision_features, cfg):
    D = cfg["dim_model"]
    latent_tok = params["latent_proj"]["b"]                         # zeros @ W + b == b
    state_tok = states @ params["state_proj"]["w"] + params["state_proj"]["b"]
    cam_cat = jnp.concatenate(vision_features, axis=-1)             # (1, D, H, Wtot)
    cam_tok = jnp.transpose(cam_cat, (2, 3, 0, 1)).reshape(-1, D)
    return jnp.concatenate([latent_tok, state_tok, cam_tok], axis=0)  # (S, D)


def bpu_act_transformer_forward(params, fused, states, vision_feature1,
                                vision_feature2, cfg):
    tokens = _assemble_tokens(params, states, (vision_feature1, vision_feature2), cfg)
    actions = _fused_transformer_call(fused, tokens, cfg)
    return actions[None]                                             # (1, chunk, action_dim)


# ----------------------------------------------------------------------------
# Pure-JAX f32 reference of the transformer stack (numerical validation only)
# ----------------------------------------------------------------------------
def _jnp_reference(params, tokens, pos, cfg):
    D = cfg["dim_model"]
    H = cfg["n_heads"]
    dh = D // H

    def ln(x, g, b):
        m = jnp.mean(x, -1, keepdims=True)
        c = x - m
        v = jnp.mean(c * c, -1, keepdims=True)
        return c / jnp.sqrt(v + 1e-5) * g + b

    def mha(qi, ki, vi, w, l):
        q = (qi @ w["wq"][l] + w["bq"][l]) / math.sqrt(dh)
        k = ki @ w["wk"][l] + w["bk"][l]
        v = vi @ w["wv"][l] + w["bv"][l]
        outs = []
        for h in range(H):
            s = slice(h * dh, (h + 1) * dh)
            sc = q[:, s] @ k[:, s].T
            a = jax.nn.softmax(sc, axis=-1)
            outs.append(a @ v[:, s])
        return jnp.concatenate(outs, -1) @ w["wo"][l] + w["bo"][l]

    def ffn(x, f, l):
        return jnp.maximum(x @ f["w1"][l] + f["b1"][l], 0.0) @ f["w2"][l] + f["b2"][l]

    x = tokens
    e = params["enc"]
    for l in range(cfg["n_encoder_layers"]):
        qk = x + pos
        x = ln(x + mha(qk, qk, x, e["sa"], l), e["n1"]["g"][l], e["n1"]["b"][l])
        x = ln(x + ffn(x, e["ffn"], l), e["n2"]["g"][l], e["n2"]["b"][l])
    enc_out = x

    d = params["dec"]
    dec_pos = params["dec_pos"]
    y = jnp.zeros((cfg["chunk_size"], D), jnp.float32)
    for l in range(cfg["n_decoder_layers"]):
        q = y + dec_pos
        y = ln(y + mha(q, q, y, d["sa"], l), d["n1"]["g"][l], d["n1"]["b"][l])
        y = ln(y + mha(y + dec_pos, enc_out + pos, enc_out, d["ca"], l),
               d["n2"]["g"][l], d["n2"]["b"][l])
        y = ln(y + ffn(y, d["ffn"], l), d["n3"]["g"][l], d["n3"]["b"][l])
    y = ln(y, params["dec_norm"]["g"], params["dec_norm"]["b"])
    return y @ params["action_head"]["w"] + params["action_head"]["b"]


# ----------------------------------------------------------------------------
# Deterministic parameter init (synthetic — stacked per-layer layout)
# ----------------------------------------------------------------------------
def init_params(key, cfg):
    D = cfg["dim_model"]
    F = cfg["dim_feedforward"]
    Le = cfg["n_encoder_layers"]
    Ld = cfg["n_decoder_layers"]
    keys = iter(jax.random.split(key, 256))

    def rnd(shape, s=0.02):
        return jax.random.normal(next(keys), shape, jnp.float32) * s

    def attn_stack(L):
        return {
            "wq": rnd((L, D, D)), "wk": rnd((L, D, D)), "wv": rnd((L, D, D)),
            "bq": rnd((L, 1, D), 0.01), "bk": rnd((L, 1, D), 0.01),
            "bv": rnd((L, 1, D), 0.01),
            "wo": rnd((L, D, D)), "bo": rnd((L, 1, D), 0.01),
        }

    def ffn_stack(L):
        return {"w1": rnd((L, D, F)), "b1": rnd((L, 1, F), 0.01),
                "w2": rnd((L, F, D)), "b2": rnd((L, 1, D), 0.01)}

    def ln_stack(L):
        return {"g": jnp.ones((L, 1, D), jnp.float32),
                "b": jnp.zeros((L, 1, D), jnp.float32)}

    return {
        "latent_proj": {"w": rnd((cfg["latent_dim"], D)), "b": rnd((1, D), 0.01)},
        "state_proj": {"w": rnd((cfg["state_dim"], D)), "b": rnd((1, D), 0.01)},
        "enc_1d_pos": rnd((2, D)),
        "dec_pos": rnd((cfg["chunk_size"], D)),
        "enc": {"sa": attn_stack(Le), "ffn": ffn_stack(Le),
                "n1": ln_stack(Le), "n2": ln_stack(Le)},
        "dec": {"sa": attn_stack(Ld), "ca": attn_stack(Ld), "ffn": ffn_stack(Ld),
                "n1": ln_stack(Ld), "n2": ln_stack(Ld), "n3": ln_stack(Ld)},
        "dec_norm": {"g": jnp.ones((1, D), jnp.float32),
                     "b": jnp.zeros((1, D), jnp.float32)},
        "action_head": {"w": rnd((D, cfg["action_dim"])),
                        "b": rnd((1, cfg["action_dim"]), 0.01)},
    }


if __name__ == "__main__":
    cfg = dict(
        dim_model=32,
        n_heads=4,
        dim_feedforward=64,
        n_encoder_layers=2,
        n_decoder_layers=1,
        chunk_size=8,
        latent_dim=8,
        state_dim=6,
        action_dim=6,
    )
    key = jax.random.PRNGKey(0)
    k_param, k_states, k_v1, k_v2 = jax.random.split(key, 4)
    params = init_params(k_param, cfg)

    # Inputs mirror the torch module: states (1, state_dim); vision features are
    # the already-projected camera feature maps in NCHW (1, dim_model, H, W).
    states = jax.random.normal(k_states, (1, cfg["state_dim"]), jnp.float32)
    vision_feature1 = jax.random.normal(k_v1, (1, cfg["dim_model"], 4, 4), jnp.float32)
    vision_feature2 = jax.random.normal(k_v2, (1, cfg["dim_model"], 4, 4), jnp.float32)

    # One-time prep: fold pos / scale / zero-input algebra, pack the two slabs.
    cam_shapes = [tuple(vf.shape[1:]) for vf in (vision_feature1, vision_feature2)]
    fused = prepare_fused_params(params, cfg, cam_shapes)

    fwd = jax.jit(lambda s, v1, v2: bpu_act_transformer_forward(
        params, fused, s, v1, v2, cfg))
    actions = fwd(states, vision_feature1, vision_feature2)
    jax.block_until_ready(actions)

    assert actions.shape == (1, cfg["chunk_size"], cfg["action_dim"])
    assert bool(jnp.all(jnp.isfinite(actions)))

    # Numerical check against a pure-f32 JAX reference (bf16 matmuls + approx
    # reciprocal in the kernel keep the deviation well under 1e-2).
    tokens = _assemble_tokens(params, states, (vision_feature1, vision_feature2), cfg)
    ref = _jnp_reference(params, tokens, fused["pos"], cfg)[None]
    assert bool(jnp.allclose(actions, ref, atol=1e-2, rtol=1e-2)), (
        "max abs diff %g" % float(jnp.max(jnp.abs(actions - ref))))

    print("KERNEL_OK")
</pallas_src>

<mosaic_0001>
module attributes {stable_mosaic.version = 11 : i64} {
  func.func @_fused_transformer_kernel(%arg0: memref<34x32xf32, #tpu.memory_space<vmem>>, %arg1: memref<544x128xbf16, #tpu.memory_space<vmem>>, %arg2: memref<280x128xf32, #tpu.memory_space<vmem>>, %arg3: memref<8x128xf32, #tpu.memory_space<vmem>>) attributes {dimension_semantics = [], scalar_prefetch = 0 : i64, scratch_operands = 0 : i64, tpu.core_type = #tpu.core_type<tc>} {
    %c0 = arith.constant 0 : index
    %c0_0 = arith.constant 0 : index
    %0 = vector.load %arg0[%c0, %c0_0] : memref<34x32xf32, #tpu.memory_space<vmem>>, vector<34x32xf32>
    %1 = arith.truncf %0 : vector<34x32xf32> to vector<34x32xbf16>
    %c0_1 = arith.constant 0 : index
    %c0_2 = arith.constant 0 : index
    %2 = vector.load %arg1[%c0_1, %c0_2] : memref<544x128xbf16, #tpu.memory_space<vmem>>, vector<32x96xbf16>
    %cst = arith.constant dense<0.000000e+00> : vector<34x96xf32>
    %3 = tpu.matmul %1, %2, %cst {dimension_numbers = #tpu.dot_dimension_numbers<[1], [0], [0], [1], [0, 0, 1, 1], [], []>} : vector<34x32xbf16>, vector<32x96xbf16>, vector<34x96xf32> -> vector<34x96xf32>
    %c0_3 = arith.constant 0 : index
    %c0_4 = arith.constant 0 : index
    %4 = vector.load %arg2[%c0_3, %c0_4] : memref<280x128xf32, #tpu.memory_space<vmem>>, vector<34x96xf32>
    %5 = arith.addf %3, %4 : vector<34x96xf32>
    %6 = arith.truncf %5 : vector<34x96xf32> to vector<34x96xbf16>
    %7 = vector.extract_strided_slice %6 {offsets = [0, 0], sizes = [34, 32], strides = [1, 1]} : vector<34x96xbf16> to vector<34x32xbf16>
    %8 = vector.extract_strided_slice %6 {offsets = [0, 32], sizes = [34, 32], strides = [1, 1]} : vector<34x96xbf16> to vector<34x32xbf16>
    %9 = vector.extract_strided_slice %6 {offsets = [0, 64], sizes = [34, 32], strides = [1, 1]} : vector<34x96xbf16> to vector<34x32xbf16>
    %10 = vector.extract_strided_slice %7 {offsets = [0, 0], sizes = [34, 8], strides = [1, 1]} : vector<34x32xbf16> to vector<34x8xbf16>
    %11 = vector.extract_strided_slice %8 {offsets = [0, 0], sizes = [34, 8], strides = [1, 1]} : vector<34x32xbf16> to vector<34x8xbf16>
    %cst_5 = arith.constant dense<0.000000e+00> : vector<34x34xf32>
    %12 = tpu.matmul %10, %11, %cst_5 {dimension_numbers = #tpu.dot_dimension_numbers<[1], [1], [0], [0], [0, 0, 1, 0], [], []>} : vector<34x8xbf16>, vector<34x8xbf16>, vector<34x34xf32> -> vector<34x34xf32>
    %cst_6 = arith.constant dense<0xFF800000> : vector<34xf32>
    %13 = vector.multi_reduction <maximumf>, %12, %cst_6 [1] : vector<34x34xf32> to vector<34xf32>
    %14 = vector.shape_cast %13 : vector<34xf32> to vector<34x1xf32>
    %15 = vector.broadcast %14 : vector<34x1xf32> to vector<34x34xf32>
    %16 = arith.subf %12, %15 : vector<34x34xf32>
    %17 = math.exp %16 : vector<34x34xf32>
    %cst_7 = arith.constant dense<0.000000e+00> : vector<34xf32>
    %18 = vector.multi_reduction <add>, %17, %cst_7 [1] : vector<34x34xf32> to vector<34xf32>
    %19 = vector.shape_cast %18 : vector<34xf32> to vector<34x1xf32>
    %20 = tpu.reciprocal %19 {approx = true} : vector<34x1xf32> -> vector<34x1xf32>
    %21 = vector.broadcast %20 : vector<34x1xf32> to vector<34x34xf32>
    %22 = arith.mulf %17, %21 : vector<34x34xf32>
    %23 = arith.truncf %22 : vector<34x34xf32> to vector<34x34xbf16>
    %24 = vector.extract_strided_slice %9 {offsets = [0, 0], sizes = [34, 8], strides = [1, 1]} : vector<34x32xbf16> to vector<34x8xbf16>
    %cst_8 = arith.constant dense<0.000000e+00> : vector<34x8xf32>
    %25 = tpu.matmul %23, %24, %cst_8 {dimension_numbers = #tpu.dot_dimension_numbers<[1], [0], [0], [1], [0, 0, 1, 1], [], []>} : vector<34x34xbf16>, vector<34x8xbf16>, vector<34x8xf32> -> vector<34x8xf32>
    %26 = vector.extract_strided_slice %7 {offsets = [0, 8], sizes = [34, 8], strides = [1, 1]} : vector<34x32xbf16> to vector<34x8xbf16>
    %27 = vector.extract_strided_slice %8 {offsets = [0, 8], sizes = [34, 8], strides = [1, 1]} : vector<34x32xbf16> to vector<34x8xbf16>
    %cst_9 = arith.constant dense<0.000000e+00> : vector<34x34xf32>
    %28 = tpu.matmul %26, %27, %cst_9 {dimension_numbers = #tpu.dot_dimension_numbers<[1], [1], [0], [0], [0, 0, 1, 0], [], []>} : vector<34x8xbf16>, vector<34x8xbf16>, vector<34x34xf32> -> vector<34x34xf32>
    %cst_10 = arith.constant dense<0xFF800000> : vector<34xf32>
    %29 = vector.multi_reduction <maximumf>, %28, %cst_10 [1] : vector<34x34xf32> to vector<34xf32>
    %30 = vector.shape_cast %29 : vector<34xf32> to vector<34x1xf32>
    %31 = vector.broadcast %30 : vector<34x1xf32> to vector<34x34xf32>
    %32 = arith.subf %28, %31 : vector<34x34xf32>
    %33 = math.exp %32 : vector<34x34xf32>
    %cst_11 = arith.constant dense<0.000000e+00> : vector<34xf32>
    %34 = vector.multi_reduction <add>, %33, %cst_11 [1] : vector<34x34xf32> to vector<34xf32>
    %35 = vector.shape_cast %34 : vector<34xf32> to vector<34x1xf32>
    %36 = tpu.reciprocal %35 {approx = true} : vector<34x1xf32> -> vector<34x1xf32>
    %37 = vector.broadcast %36 : vector<34x1xf32> to vector<34x34xf32>
    %38 = arith.mulf %33, %37 : vector<34x34xf32>
    %39 = arith.truncf %38 : vector<34x34xf32> to vector<34x34xbf16>
    %40 = vector.extract_strided_slice %9 {offsets = [0, 8], sizes = [34, 8], strides = [1, 1]} : vector<34x32xbf16> to vector<34x8xbf16>
    %cst_12 = arith.constant dense<0.000000e+00> : vector<34x8xf32>
    %41 = tpu.matmul %39, %40, %cst_12 {dimension_numbers = #tpu.dot_dimension_numbers<[1], [0], [0], [1], [0, 0, 1, 1], [], []>} : vector<34x34xbf16>, vector<34x8xbf16>, vector<34x8xf32> -> vector<34x8xf32>
    %42 = vector.extract_strided_slice %7 {offsets = [0, 16], sizes = [34, 8], strides = [1, 1]} : vector<34x32xbf16> to vector<34x8xbf16>
    %43 = vector.extract_strided_slice %8 {offsets = [0, 16], sizes = [34, 8], strides = [1, 1]} : vector<34x32xbf16> to vector<34x8xbf16>
    %cst_13 = arith.constant dense<0.000000e+00> : vector<34x34xf32>
    %44 = tpu.matmul %42, %43, %cst_13 {dimension_numbers = #tpu.dot_dimension_numbers<[1], [1], [0], [0], [0, 0, 1, 0], [], []>} : vector<34x8xbf16>, vector<34x8xbf16>, vector<34x34xf32> -> vector<34x34xf32>
    %cst_14 = arith.constant dense<0xFF800000> : vector<34xf32>
    %45 = vector.multi_reduction <maximumf>, %44, %cst_14 [1] : vector<34x34xf32> to vector<34xf32>
    %46 = vector.shape_cast %45 : vector<34xf32> to vector<34x1xf32>
    %47 = vector.broadcast %46 : vector<34x1xf32> to vector<34x34xf32>
    %48 = arith.subf %44, %47 : vector<34x34xf32>
    %49 = math.exp %48 : vector<34x34xf32>
    %cst_15 = arith.constant dense<0.000000e+00> : vector<34xf32>
    %50 = vector.multi_reduction <add>, %49, %cst_15 [1] : vector<34x34xf32> to vector<34xf32>
    %51 = vector.shape_cast %50 : vector<34xf32> to vector<34x1xf32>
    %52 = tpu.reciprocal %51 {approx = true} : vector<34x1xf32> -> vector<34x1xf32>
    %53 = vector.broadcast %52 : vector<34x1xf32> to vector<34x34xf32>
    %54 = arith.mulf %49, %53 : vector<34x34xf32>
    %55 = arith.truncf %54 : vector<34x34xf32> to vector<34x34xbf16>
    %56 = vector.extract_strided_slice %9 {offsets = [0, 16], sizes = [34, 8], strides = [1, 1]} : vector<34x32xbf16> to vector<34x8xbf16>
    %cst_16 = arith.constant dense<0.000000e+00> : vector<34x8xf32>
    %57 = tpu.matmul %55, %56, %cst_16 {dimension_numbers = #tpu.dot_dimension_numbers<[1], [0], [0], [1], [0, 0, 1, 1], [], []>} : vector<34x34xbf16>, vector<34x8xbf16>, vector<34x8xf32> -> vector<34x8xf32>
    %58 = vector.extract_strided_slice %7 {offsets = [0, 24], sizes = [34, 8], strides = [1, 1]} : vector<34x32xbf16> to vector<34x8xbf16>
    %59 = vector.extract_strided_slice %8 {offsets = [0, 24], sizes = [34, 8], strides = [1, 1]} : vector<34x32xbf16> to vector<34x8xbf16>
    %cst_17 = arith.constant dense<0.000000e+00> : vector<34x34xf32>
    %60 = tpu.matmul %58, %59, %cst_17 {dimension_numbers = #tpu.dot_dimension_numbers<[1], [1], [0], [0], [0, 0, 1, 0], [], []>} : vector<34x8xbf16>, vector<34x8xbf16>, vector<34x34xf32> -> vector<34x34xf32>
    %cst_18 = arith.constant dense<0xFF800000> : vector<34xf32>
    %61 = vector.multi_reduction <maximumf>, %60, %cst_18 [1] : vector<34x34xf32> to vector<34xf32>
    %62 = vector.shape_cast %61 : vector<34xf32> to vector<34x1xf32>
    %63 = vector.broadcast %62 : vector<34x1xf32> to vector<34x34xf32>
    %64 = arith.subf %60, %63 : vector<34x34xf32>
    %65 = math.exp %64 : vector<34x34xf32>
    %cst_19 = arith.constant dense<0.000000e+00> : vector<34xf32>
    %66 = vector.multi_reduction <add>, %65, %cst_19 [1] : vector<34x34xf32> to vector<34xf32>
    %67 = vector.shape_cast %66 : vector<34xf32> to vector<34x1xf32>
    %68 = tpu.reciprocal %67 {approx = true} : vector<34x1xf32> -> vector<34x1xf32>
    %69 = vector.broadcast %68 : vector<34x1xf32> to vector<34x34xf32>
    %70 = arith.mulf %65, %69 : vector<34x34xf32>
    %71 = arith.truncf %70 : vector<34x34xf32> to vector<34x34xbf16>
    %72 = vector.extract_strided_slice %9 {offsets = [0, 24], sizes = [34, 8], strides = [1, 1]} : vector<34x32xbf16> to vector<34x8xbf16>
    %cst_20 = arith.constant dense<0.000000e+00> : vector<34x8xf32>
    %73 = tpu.matmul %71, %72, %cst_20 {dimension_numbers = #tpu.dot_dimension_numbers<[1], [0], [0], [1], [0, 0, 1, 1], [], []>} : vector<34x34xbf16>, vector<34x8xbf16>, vector<34x8xf32> -> vector<34x8xf32>
    %74 = tpu.concatenate %25, %41, %57, %73 in 1 : vector<34x8xf32>, vector<34x8xf32>, vector<34x8xf32>, vector<34x8xf32> -> vector<34x32xf32>
    %75 = arith.truncf %74 : vector<34x32xf32> to vector<34x32xbf16>
    %c32 = arith.constant 32 : index
    %c0_21 = arith.constant 0 : index
    %76 = vector.load %arg1[%c32, %c0_21] : memref<544x128xbf16, #tpu.memory_space<vmem>>, vector<32x32xbf16>
    %cst_22 = arith.constant dense<0.000000e+00> : vector<34x32xf32>
    %77 = tpu.matmul %75, %76, %cst_22 {dimension_numbers = #tpu.dot_dimension_numbers<[1], [0], [0], [1], [0, 0, 1, 1], [], []>} : vector<34x32xbf16>, vector<32x32xbf16>, vector<34x32xf32> -> vector<34x32xf32>
    %c40 = arith.constant 40 : index
    %c0_23 = arith.constant 0 : index
    %78 = vector.load %arg2[%c40, %c0_23] : memref<280x128xf32, #tpu.memory_space<vmem>>, vector<1x32xf32>
    %79 = vector.broadcast %78 : vector<1x32xf32> to vector<34x32xf32>
    %80 = arith.addf %77, %79 : vector<34x32xf32>
    %81 = arith.addf %0, %80 : vector<34x32xf32>
    %c64 = arith.constant 64 : index
    %c0_24 = arith.constant 0 : index
    %82 = vector.load %arg2[%c64, %c0_24] : memref<280x128xf32, #tpu.memory_space<vmem>>, vector<2x32xf32>
    %cst_25 = arith.constant dense<0.000000e+00> : vector<34xf32>
    %83 = vector.multi_reduction <add>, %81, %cst_25 [1] : vector<34x32xf32> to vector<34xf32>
    %84 = vector.shape_cast %83 : vector<34xf32> to vector<34x1xf32>
    %cst_26 = arith.constant 3.200000e+01 : f32
    %85 = vector.broadcast %cst_26 : f32 to vector<34x1xf32>
    %86 = arith.divf %84, %85 : vector<34x1xf32>
    %87 = vector.broadcast %86 : vector<34x1xf32> to vector<34x32xf32>
    %88 = arith.subf %81, %87 : vector<34x32xf32>
    %89 = arith.mulf %88, %88 : vector<34x32xf32>
    %cst_27 = arith.constant dense<0.000000e+00> : vector<34xf32>
    %90 = vector.multi_reduction <add>, %89, %cst_27 [1] : vector<34x32xf32> to vector<34xf32>
    %91 = vector.shape_cast %90 : vector<34xf32> to vector<34x1xf32>
    %cst_28 = arith.constant 3.200000e+01 : f32
    %92 = vector.broadcast %cst_28 : f32 to vector<34x1xf32>
    %93 = arith.divf %91, %92 : vector<34x1xf32>
    %cst_29 = arith.constant 9.99999974E-6 : f32
    %94 = vector.broadcast %cst_29 : f32 to vector<34x1xf32>
    %95 = arith.addf %93, %94 : vector<34x1xf32>
    %96 = math.rsqrt %95 : vector<34x1xf32>
    %97 = vector.broadcast %96 : vector<34x1xf32> to vector<34x32xf32>
    %98 = arith.mulf %88, %97 : vector<34x32xf32>
    %99 = vector.extract_strided_slice %82 {offsets = [0, 0], sizes = [1, 32], strides = [1, 1]} : vector<2x32xf32> to vector<1x32xf32>
    %100 = vector.broadcast %99 : vector<1x32xf32> to vector<34x32xf32>
    %101 = arith.mulf %98, %100 : vector<34x32xf32>
    %102 = vector.extract_strided_slice %82 {offsets = [1, 0], sizes = [1, 32], strides = [1, 1]} : vector<2x32xf32> to vector<1x32xf32>
    %103 = vector.broadcast %102 : vector<1x32xf32> to vector<34x32xf32>
    %104 = arith.addf %101, %103 : vector<34x32xf32>
    %105 = arith.truncf %104 : vector<34x32xf32> to vector<34x32xbf16>
    %c64_30 = arith.constant 64 : index
    %c0_31 = arith.constant 0 : index
    %106 = vector.load %arg1[%c64_30, %c0_31] : memref<544x128xbf16, #tpu.memory_space<vmem>>, vector<32x64xbf16>
    %cst_32 = arith.constant dense<0.000000e+00> : vector<34x64xf32>
    %107 = tpu.matmul %105, %106, %cst_32 {dimension_numbers = #tpu.dot_dimension_numbers<[1], [0], [0], [1], [0, 0, 1, 1], [], []>} : vector<34x32xbf16>, vector<32x64xbf16>, vector<34x64xf32> -> vector<34x64xf32>
    %c48 = arith.constant 48 : index
    %c0_33 = arith.constant 0 : index
    %108 = vector.load %arg2[%c48, %c0_33] : memref<280x128xf32, #tpu.memory_space<vmem>>, vector<1x64xf32>
    %109 = vector.broadcast %108 : vector<1x64xf32> to vector<34x64xf32>
    %110 = arith.addf %107, %109 : vector<34x64xf32>
    %cst_34 = arith.constant 0.000000e+00 : f32
    %111 = vector.broadcast %cst_34 : f32 to vector<34x64xf32>
    %112 = arith.maximumf %110, %111 : vector<34x64xf32>
    %113 = arith.truncf %112 : vector<34x64xf32> to vector<34x64xbf16>
    %c96 = arith.constant 96 : index
    %c0_35 = arith.constant 0 : index
    %114 = vector.load %arg1[%c96, %c0_35] : memref<544x128xbf16, #tpu.memory_space<vmem>>, vector<64x32xbf16>
    %cst_36 = arith.constant dense<0.000000e+00> : vector<34x32xf32>
    %115 = tpu.matmul %113, %114, %cst_36 {dimension_numbers = #tpu.dot_dimension_numbers<[1], [0], [0], [1], [0, 0, 1, 1], [], []>} : vector<34x64xbf16>, vector<64x32xbf16>, vector<34x32xf32> -> vector<34x32xf32>
    %c56 = arith.constant 56 : index
    %c0_37 = arith.constant 0 : index
    %116 = vector.load %arg2[%c56, %c0_37] : memref<280x128xf32, #tpu.memory_space<vmem>>, vector<1x32xf32>
    %117 = vector.broadcast %116 : vector<1x32xf32> to vector<34x32xf32>
    %118 = arith.addf %115, %117 : vector<34x32xf32>
    %119 = arith.addf %104, %118 : vector<34x32xf32>
    %c72 = arith.constant 72 : index
    %c0_38 = arith.constant 0 : index
    %120 = vector.load %arg2[%c72, %c0_38] : memref<280x128xf32, #tpu.memory_space<vmem>>, vector<2x32xf32>
    %cst_39 = arith.constant dense<0.000000e+00> : vector<34xf32>
    %121 = vector.multi_reduction <add>, %119, %cst_39 [1] : vector<34x32xf32> to vector<34xf32>
    %122 = vector.shape_cast %121 : vector<34xf32> to vector<34x1xf32>
    %cst_40 = arith.constant 3.200000e+01 : f32
    %123 = vector.broadcast %cst_40 : f32 to vector<34x1xf32>
    %124 = arith.divf %122, %123 : vector<34x1xf32>
    %125 = vector.broadcast %124 : vector<34x1xf32> to vector<34x32xf32>
    %126 = arith.subf %119, %125 : vector<34x32xf32>
    %127 = arith.mulf %126, %126 : vector<34x32xf32>
    %cst_41 = arith.constant dense<0.000000e+00> : vector<34xf32>
    %128 = vector.multi_reduction <add>, %127, %cst_41 [1] : vector<34x32xf32> to vector<34xf32>
    %129 = vector.shape_cast %128 : vector<34xf32> to vector<34x1xf32>
    %cst_42 = arith.constant 3.200000e+01 : f32
    %130 = vector.broadcast %cst_42 : f32 to vector<34x1xf32>
    %131 = arith.divf %129, %130 : vector<34x1xf32>
    %cst_43 = arith.constant 9.99999974E-6 : f32
    %132 = vector.broadcast %cst_43 : f32 to vector<34x1xf32>
    %133 = arith.addf %131, %132 : vector<34x1xf32>
    %134 = math.rsqrt %133 : vector<34x1xf32>
    %135 = vector.broadcast %134 : vector<34x1xf32> to vector<34x32xf32>
    %136 = arith.mulf %126, %135 : vector<34x32xf32>
    %137 = vector.extract_strided_slice %120 {offsets = [0, 0], sizes = [1, 32], strides = [1, 1]} : vector<2x32xf32> to vector<1x32xf32>
    %138 = vector.broadcast %137 : vector<1x32xf32> to vector<34x32xf32>
    %139 = arith.mulf %136, %138 : vector<34x32xf32>
    %140 = vector.extract_strided_slice %120 {offsets = [1, 0], sizes = [1, 32], strides = [1, 1]} : vector<2x32xf32> to vector<1x32xf32>
    %141 = vector.broadcast %140 : vector<1x32xf32> to vector<34x32xf32>
    %142 = arith.addf %139, %141 : vector<34x32xf32>
    %143 = arith.truncf %142 : vector<34x32xf32> to vector<34x32xbf16>
    %c160 = arith.constant 160 : index
    %c0_44 = arith.constant 0 : index
    %144 = vector.load %arg1[%c160, %c0_44] : memref<544x128xbf16, #tpu.memory_space<vmem>>, vector<32x96xbf16>
    %cst_45 = arith.constant dense<0.000000e+00> : vector<34x96xf32>
    %145 = tpu.matmul %143, %144, %cst_45 {dimension_numbers = #tpu.dot_dimension_numbers<[1], [0], [0], [1], [0, 0, 1, 1], [], []>} : vector<34x32xbf16>, vector<32x96xbf16>, vector<34x96xf32> -> vector<34x96xf32>
    %c80 = arith.constant 80 : index
    %c0_46 = arith.constant 0 : index
    %146 = vector.load %arg2[%c80, %c0_46] : memref<280x128xf32, #tpu.memory_space<vmem>>, vector<34x96xf32>
    %147 = arith.addf %145, %146 : vector<34x96xf32>
    %148 = arith.truncf %147 : vector<34x96xf32> to vector<34x96xbf16>
    %149 = vector.extract_strided_slice %148 {offsets = [0, 0], sizes = [34, 32], strides = [1, 1]} : vector<34x96xbf16> to vector<34x32xbf16>
    %150 = vector.extract_strided_slice %148 {offsets = [0, 32], sizes = [34, 32], strides = [1, 1]} : vector<34x96xbf16> to vector<34x32xbf16>
    %151 = vector.extract_strided_slice %148 {offsets = [0, 64], sizes = [34, 32], strides = [1, 1]} : vector<34x96xbf16> to vector<34x32xbf16>
    %152 = vector.extract_strided_slice %149 {offsets = [0, 0], sizes = [34, 8], strides = [1, 1]} : vector<34x32xbf16> to vector<34x8xbf16>
    %153 = vector.extract_strided_slice %150 {offsets = [0, 0], sizes = [34, 8], strides = [1, 1]} : vector<34x32xbf16> to vector<34x8xbf16>
    %cst_47 = arith.constant dense<0.000000e+00> : vector<34x34xf32>
    %154 = tpu.matmul %152, %153, %cst_47 {dimension_numbers = #tpu.dot_dimension_numbers<[1], [1], [0], [0], [0, 0, 1, 0], [], []>} : vector<34x8xbf16>, vector<34x8xbf16>, vector<34x34xf32> -> vector<34x34xf32>
    %cst_48 = arith.constant dense<0xFF800000> : vector<34xf32>
    %155 = vector.multi_reduction <maximumf>, %154, %cst_48 [1] : vector<34x34xf32> to vector<34xf32>
    %156 = vector.shape_cast %155 : vector<34xf32> to vector<34x1xf32>
    %157 = vector.broadcast %156 : vector<34x1xf32> to vector<34x34xf32>
    %158 = arith.subf %154, %157 : vector<34x34xf32>
    %159 = math.exp %158 : vector<34x34xf32>
    %cst_49 = arith.constant dense<0.000000e+00> : vector<34xf32>
    %160 = vector.multi_reduction <add>, %159, %cst_49 [1] : vector<34x34xf32> to vector<34xf32>
    %161 = vector.shape_cast %160 : vector<34xf32> to vector<34x1xf32>
    %162 = tpu.reciprocal %161 {approx = true} : vector<34x1xf32> -> vector<34x1xf32>
    %163 = vector.broadcast %162 : vector<34x1xf32> to vector<34x34xf32>
    %164 = arith.mulf %159, %163 : vector<34x34xf32>
    %165 = arith.truncf %164 : vector<34x34xf32> to vector<34x34xbf16>
    %166 = vector.extract_strided_slice %151 {offsets = [0, 0], sizes = [34, 8], strides = [1, 1]} : vector<34x32xbf16> to vector<34x8xbf16>
    %cst_50 = arith.constant dense<0.000000e+00> : vector<34x8xf32>
    %167 = tpu.matmul %165, %166, %cst_50 {dimension_numbers = #tpu.dot_dimension_numbers<[1], [0], [0], [1], [0, 0, 1, 1], [], []>} : vector<34x34xbf16>, vector<34x8xbf16>, vector<34x8xf32> -> vector<34x8xf32>
    %168 = vector.extract_strided_slice %149 {offsets = [0, 8], sizes = [34, 8], strides = [1, 1]} : vector<34x32xbf16> to vector<34x8xbf16>
    %169 = vector.extract_strided_slice %150 {offsets = [0, 8], sizes = [34, 8], strides = [1, 1]} : vector<34x32xbf16> to vector<34x8xbf16>
    %cst_51 = arith.constant dense<0.000000e+00> : vector<34x34xf32>
    %170 = tpu.matmul %168, %169, %cst_51 {dimension_numbers = #tpu.dot_dimension_numbers<[1], [1], [0], [0], [0, 0, 1, 0], [], []>} : vector<34x8xbf16>, vector<34x8xbf16>, vector<34x34xf32> -> vector<34x34xf32>
    %cst_52 = arith.constant dense<0xFF800000> : vector<34xf32>
    %171 = vector.multi_reduction <maximumf>, %170, %cst_52 [1] : vector<34x34xf32> to vector<34xf32>
    %172 = vector.shape_cast %171 : vector<34xf32> to vector<34x1xf32>
    %173 = vector.broadcast %172 : vector<34x1xf32> to vector<34x34xf32>
    %174 = arith.subf %170, %173 : vector<34x34xf32>
    %175 = math.exp %174 : vector<34x34xf32>
    %cst_53 = arith.constant dense<0.000000e+00> : vector<34xf32>
    %176 = vector.multi_reduction <add>, %175, %cst_53 [1] : vector<34x34xf32> to vector<34xf32>
    %177 = vector.shape_cast %176 : vector<34xf32> to vector<34x1xf32>
    %178 = tpu.reciprocal %177 {approx = true} : vector<34x1xf32> -> vector<34x1xf32>
    %179 = vector.broadcast %178 : vector<34x1xf32> to vector<34x34xf32>
    %180 = arith.mulf %175, %179 : vector<34x34xf32>
    %181 = arith.truncf %180 : vector<34x34xf32> to vector<34x34xbf16>
    %182 = vector.extract_strided_slice %151 {offsets = [0, 8], sizes = [34, 8], strides = [1, 1]} : vector<34x32xbf16> to vector<34x8xbf16>
    %cst_54 = arith.constant dense<0.000000e+00> : vector<34x8xf32>
    %183 = tpu.matmul %181, %182, %cst_54 {dimension_numbers = #tpu.dot_dimension_numbers<[1], [0], [0], [1], [0, 0, 1, 1], [], []>} : vector<34x34xbf16>, vector<34x8xbf16>, vector<34x8xf32> -> vector<34x8xf32>
    %184 = vector.extract_strided_slice %149 {offsets = [0, 16], sizes = [34, 8], strides = [1, 1]} : vector<34x32xbf16> to vector<34x8xbf16>
    %185 = vector.extract_strided_slice %150 {offsets = [0, 16], sizes = [34, 8], strides = [1, 1]} : vector<34x32xbf16> to vector<34x8xbf16>
    %cst_55 = arith.constant dense<0.000000e+00> : vector<34x34xf32>
    %186 = tpu.matmul %184, %185, %cst_55 {dimension_numbers = #tpu.dot_dimension_numbers<[1], [1], [0], [0], [0, 0, 1, 0], [], []>} : vector<34x8xbf16>, vector<34x8xbf16>, vector<34x34xf32> -> vector<34x34xf32>
    %cst_56 = arith.constant dense<0xFF800000> : vector<34xf32>
    %187 = vector.multi_reduction <maximumf>, %186, %cst_56 [1] : vector<34x34xf32> to vector<34xf32>
    %188 = vector.shape_cast %187 : vector<34xf32> to vector<34x1xf32>
    %189 = vector.broadcast %188 : vector<34x1xf32> to vector<34x34xf32>
    %190 = arith.subf %186, %189 : vector<34x34xf32>
    %191 = math.exp %190 : vector<34x34xf32>
    %cst_57 = arith.constant dense<0.000000e+00> : vector<34xf32>
    %192 = vector.multi_reduction <add>, %191, %cst_57 [1] : vector<34x34xf32> to vector<34xf32>
    %193 = vector.shape_cast %192 : vector<34xf32> to vector<34x1xf32>
    %194 = tpu.reciprocal %193 {approx = true} : vector<34x1xf32> -> vector<34x1xf32>
    %195 = vector.broadcast %194 : vector<34x1xf32> to vector<34x34xf32>
    %196 = arith.mulf %191, %195 : vector<34x34xf32>
    %197 = arith.truncf %196 : vector<34x34xf32> to vector<34x34xbf16>
    %198 = vector.extract_strided_slice %151 {offsets = [0, 16], sizes = [34, 8], strides = [1, 1]} : vector<34x32xbf16> to vector<34x8xbf16>
    %cst_58 = arith.constant dense<0.000000e+00> : vector<34x8xf32>
    %199 = tpu.matmul %197, %198, %cst_58 {dimension_numbers = #tpu.dot_dimension_numbers<[1], [0], [0], [1], [0, 0, 1, 1], [], []>} : vector<34x34xbf16>, vector<34x8xbf16>, vector<34x8xf32> -> vector<34x8xf32>
    %200 = vector.extract_strided_slice %149 {offsets = [0, 24], sizes = [34, 8], strides = [1, 1]} : vector<34x32xbf16> to vector<34x8xbf16>
    %201 = vector.extract_strided_slice %150 {offsets = [0, 24], sizes = [34, 8], strides = [1, 1]} : vector<34x32xbf16> to vector<34x8xbf16>
    %cst_59 = arith.constant dense<0.000000e+00> : vector<34x34xf32>
    %202 = tpu.matmul %200, %201, %cst_59 {dimension_numbers = #tpu.dot_dimension_numbers<[1], [1], [0], [0], [0, 0, 1, 0], [], []>} : vector<34x8xbf16>, vector<34x8xbf16>, vector<34x34xf32> -> vector<34x34xf32>
    %cst_60 = arith.constant dense<0xFF800000> : vector<34xf32>
    %203 = vector.multi_reduction <maximumf>, %202, %cst_60 [1] : vector<34x34xf32> to vector<34xf32>
    %204 = vector.shape_cast %203 : vector<34xf32> to vector<34x1xf32>
    %205 = vector.broadcast %204 : vector<34x1xf32> to vector<34x34xf32>
    %206 = arith.subf %202, %205 : vector<34x34xf32>
    %207 = math.exp %206 : vector<34x34xf32>
    %cst_61 = arith.constant dense<0.000000e+00> : vector<34xf32>
    %208 = vector.multi_reduction <add>, %207, %cst_61 [1] : vector<34x34xf32> to vector<34xf32>
    %209 = vector.shape_cast %208 : vector<34xf32> to vector<34x1xf32>
    %210 = tpu.reciprocal %209 {approx = true} : vector<34x1xf32> -> vector<34x1xf32>
    %211 = vector.broadcast %210 : vector<34x1xf32> to vector<34x34xf32>
    %212 = arith.mulf %207, %211 : vector<34x34xf32>
    %213 = arith.truncf %212 : vector<34x34xf32> to vector<34x34xbf16>
    %214 = vector.extract_strided_slice %151 {offsets = [0, 24], sizes = [34, 8], strides = [1, 1]} : vector<34x32xbf16> to vector<34x8xbf16>
    %cst_62 = arith.constant dense<0.000000e+00> : vector<34x8xf32>
    %215 = tpu.matmul %213, %214, %cst_62 {dimension_numbers = #tpu.dot_dimension_numbers<[1], [0], [0], [1], [0, 0, 1, 1], [], []>} : vector<34x34xbf16>, vector<34x8xbf16>, vector<34x8xf32> -> vector<34x8xf32>
    %216 = tpu.concatenate %167, %183, %199, %215 in 1 : vector<34x8xf32>, vector<34x8xf32>, vector<34x8xf32>, vector<34x8xf32> -> vector<34x32xf32>
    %217 = arith.truncf %216 : vector<34x32xf32> to vector<34x32xbf16>
    %c192 = arith.constant 192 : index
    %c0_63 = arith.constant 0 : index
    %218 = vector.load %arg1[%c192, %c0_63] : memref<544x128xbf16, #tpu.memory_space<vmem>>, vector<32x32xbf16>
    %cst_64 = arith.constant dense<0.000000e+00> : vector<34x32xf32>
    %219 = tpu.matmul %217, %218, %cst_64 {dimension_numbers = #tpu.dot_dimension_numbers<[1], [0], [0], [1], [0, 0, 1, 1], [], []>} : vector<34x32xbf16>, vector<32x32xbf16>, vector<34x32xf32> -> vector<34x32xf32>
    %c120 = arith.constant 120 : index
    %c0_65 = arith.constant 0 : index
    %220 = vector.load %arg2[%c120, %c0_65] : memref<280x128xf32, #tpu.memory_space<vmem>>, vector<1x32xf32>
    %221 = vector.broadcast %220 : vector<1x32xf32> to vector<34x32xf32>
    %222 = arith.addf %219, %221 : vector<34x32xf32>
    %223 = arith.addf %142, %222 : vector<34x32xf32>
    %c144 = arith.constant 144 : index
    %c0_66 = arith.constant 0 : index
    %224 = vector.load %arg2[%c144, %c0_66] : memref<280x128xf32, #tpu.memory_space<vmem>>, vector<2x32xf32>
    %cst_67 = arith.constant dense<0.000000e+00> : vector<34xf32>
    %225 = vector.multi_reduction <add>, %223, %cst_67 [1] : vector<34x32xf32> to vector<34xf32>
    %226 = vector.shape_cast %225 : vector<34xf32> to vector<34x1xf32>
    %cst_68 = arith.constant 3.200000e+01 : f32
    %227 = vector.broadcast %cst_68 : f32 to vector<34x1xf32>
    %228 = arith.divf %226, %227 : vector<34x1xf32>
    %229 = vector.broadcast %228 : vector<34x1xf32> to vector<34x32xf32>
    %230 = arith.subf %223, %229 : vector<34x32xf32>
    %231 = arith.mulf %230, %230 : vector<34x32xf32>
    %cst_69 = arith.constant dense<0.000000e+00> : vector<34xf32>
    %232 = vector.multi_reduction <add>, %231, %cst_69 [1] : vector<34x32xf32> to vector<34xf32>
    %233 = vector.shape_cast %232 : vector<34xf32> to vector<34x1xf32>
    %cst_70 = arith.constant 3.200000e+01 : f32
    %234 = vector.broadcast %cst_70 : f32 to vector<34x1xf32>
    %235 = arith.divf %233, %234 : vector<34x1xf32>
    %cst_71 = arith.constant 9.99999974E-6 : f32
    %236 = vector.broadcast %cst_71 : f32 to vector<34x1xf32>
    %237 = arith.addf %235, %236 : vector<34x1xf32>
    %238 = math.rsqrt %237 : vector<34x1xf32>
    %239 = vector.broadcast %238 : vector<34x1xf32> to vector<34x32xf32>
    %240 = arith.mulf %230, %239 : vector<34x32xf32>
    %241 = vector.extract_strided_slice %224 {offsets = [0, 0], sizes = [1, 32], strides = [1, 1]} : vector<2x32xf32> to vector<1x32xf32>
    %242 = vector.broadcast %241 : vector<1x32xf32> to vector<34x32xf32>
    %243 = arith.mulf %240, %242 : vector<34x32xf32>
    %244 = vector.extract_strided_slice %224 {offsets = [1, 0], sizes = [1, 32], strides = [1, 1]} : vector<2x32xf32> to vector<1x32xf32>
    %245 = vector.broadcast %244 : vector<1x32xf32> to vector<34x32xf32>
    %246 = arith.addf %243, %245 : vector<34x32xf32>
    %247 = arith.truncf %246 : vector<34x32xf32> to vector<34x32xbf16>
    %c224 = arith.constant 224 : index
    %c0_72 = arith.constant 0 : index
    %248 = vector.load %arg1[%c224, %c0_72] : memref<544x128xbf16, #tpu.memory_space<vmem>>, vector<32x64xbf16>
    %cst_73 = arith.constant dense<0.000000e+00> : vector<34x64xf32>
    %249 = tpu.matmul %247, %248, %cst_73 {dimension_numbers = #tpu.dot_dimension_numbers<[1], [0], [0], [1], [0, 0, 1, 1], [], []>} : vector<34x32xbf16>, vector<32x64xbf16>, vector<34x64xf32> -> vector<34x64xf32>
    %c128 = arith.constant 128 : index
    %c0_74 = arith.constant 0 : index
    %250 = vector.load %arg2[%c128, %c0_74] : memref<280x128xf32, #tpu.memory_space<vmem>>, vector<1x64xf32>
    %251 = vector.broadcast %250 : vector<1x64xf32> to vector<34x64xf32>
    %252 = arith.addf %249, %251 : vector<34x64xf32>
    %cst_75 = arith.constant 0.000000e+00 : f32
    %253 = vector.broadcast %cst_75 : f32 to vector<34x64xf32>
    %254 = arith.maximumf %252, %253 : vector<34x64xf32>
    %255 = arith.truncf %254 : vector<34x64xf32> to vector<34x64xbf16>
    %c256 = arith.constant 256 : index
    %c0_76 = arith.constant 0 : index
    %256 = vector.load %arg1[%c256, %c0_76] : memref<544x128xbf16, #tpu.memory_space<vmem>>, vector<64x32xbf16>
    %cst_77 = arith.constant dense<0.000000e+00> : vector<34x32xf32>
    %257 = tpu.matmul %255, %256, %cst_77 {dimension_numbers = #tpu.dot_dimension_numbers<[1], [0], [0], [1], [0, 0, 1, 1], [], []>} : vector<34x64xbf16>, vector<64x32xbf16>, vector<34x32xf32> -> vector<34x32xf32>
    %c136 = arith.constant 136 : index
    %c0_78 = arith.constant 0 : index
    %258 = vector.load %arg2[%c136, %c0_78] : memref<280x128xf32, #tpu.memory_space<vmem>>, vector<1x32xf32>
    %259 = vector.broadcast %258 : vector<1x32xf32> to vector<34x32xf32>
    %260 = arith.addf %257, %259 : vector<34x32xf32>
    %261 = arith.addf %246, %260 : vector<34x32xf32>
    %c152 = arith.constant 152 : index
    %c0_79 = arith.constant 0 : index
    %262 = vector.load %arg2[%c152, %c0_79] : memref<280x128xf32, #tpu.memory_space<vmem>>, vector<2x32xf32>
    %cst_80 = arith.constant dense<0.000000e+00> : vector<34xf32>
    %263 = vector.multi_reduction <add>, %261, %cst_80 [1] : vector<34x32xf32> to vector<34xf32>
    %264 = vector.shape_cast %263 : vector<34xf32> to vector<34x1xf32>
    %cst_81 = arith.constant 3.200000e+01 : f32
    %265 = vector.broadcast %cst_81 : f32 to vector<34x1xf32>
    %266 = arith.divf %264, %265 : vector<34x1xf32>
    %267 = vector.broadcast %266 : vector<34x1xf32> to vector<34x32xf32>
    %268 = arith.subf %261, %267 : vector<34x32xf32>
    %269 = arith.mulf %268, %268 : vector<34x32xf32>
    %cst_82 = arith.constant dense<0.000000e+00> : vector<34xf32>
    %270 = vector.multi_reduction <add>, %269, %cst_82 [1] : vector<34x32xf32> to vector<34xf32>
    %271 = vector.shape_cast %270 : vector<34xf32> to vector<34x1xf32>
    %cst_83 = arith.constant 3.200000e+01 : f32
    %272 = vector.broadcast %cst_83 : f32 to vector<34x1xf32>
    %273 = arith.divf %271, %272 : vector<34x1xf32>
    %cst_84 = arith.constant 9.99999974E-6 : f32
    %274 = vector.broadcast %cst_84 : f32 to vector<34x1xf32>
    %275 = arith.addf %273, %274 : vector<34x1xf32>
    %276 = math.rsqrt %275 : vector<34x1xf32>
    %277 = vector.broadcast %276 : vector<34x1xf32> to vector<34x32xf32>
    %278 = arith.mulf %268, %277 : vector<34x32xf32>
    %279 = vector.extract_strided_slice %262 {offsets = [0, 0], sizes = [1, 32], strides = [1, 1]} : vector<2x32xf32> to vector<1x32xf32>
    %280 = vector.broadcast %279 : vector<1x32xf32> to vector<34x32xf32>
    %281 = arith.mulf %278, %280 : vector<34x32xf32>
    %282 = vector.extract_strided_slice %262 {offsets = [1, 0], sizes = [1, 32], strides = [1, 1]} : vector<2x32xf32> to vector<1x32xf32>
    %283 = vector.broadcast %282 : vector<1x32xf32> to vector<34x32xf32>
    %284 = arith.addf %281, %283 : vector<34x32xf32>
    %c160_85 = arith.constant 160 : index
    %c0_86 = arith.constant 0 : index
    %285 = vector.load %arg2[%c160_85, %c0_86] : memref<280x128xf32, #tpu.memory_space<vmem>>, vector<1x32xf32>
    %286 = vector.shape_cast %285 : vector<1x32xf32> to vector<1x32xf32>
    %287 = vector.broadcast %286 : vector<1x32xf32> to vector<8x32xf32>
    %c240 = arith.constant 240 : index
    %c0_87 = arith.constant 0 : index
    %288 = vector.load %arg2[%c240, %c0_87] : memref<280x128xf32, #tpu.memory_space<vmem>>, vector<2x32xf32>
    %cst_88 = arith.constant dense<0.000000e+00> : vector<8xf32>
    %289 = vector.multi_reduction <add>, %287, %cst_88 [1] : vector<8x32xf32> to vector<8xf32>
    %290 = vector.shape_cast %289 : vector<8xf32> to vector<8x1xf32>
    %cst_89 = arith.constant 3.200000e+01 : f32
    %291 = vector.broadcast %cst_89 : f32 to vector<8x1xf32>
    %292 = arith.divf %290, %291 : vector<8x1xf32>
    %293 = vector.broadcast %292 : vector<8x1xf32> to vector<8x32xf32>
    %294 = arith.subf %287, %293 : vector<8x32xf32>
    %295 = arith.mulf %294, %294 : vector<8x32xf32>
    %cst_90 = arith.constant dense<0.000000e+00> : vector<8xf32>
    %296 = vector.multi_reduction <add>, %295, %cst_90 [1] : vector<8x32xf32> to vector<8xf32>
    %297 = vector.shape_cast %296 : vector<8xf32> to vector<8x1xf32>
    %cst_91 = arith.constant 3.200000e+01 : f32
    %298 = vector.broadcast %cst_91 : f32 to vector<8x1xf32>
    %299 = arith.divf %297, %298 : vector<8x1xf32>
    %cst_92 = arith.constant 9.99999974E-6 : f32
    %300 = vector.broadcast %cst_92 : f32 to vector<8x1xf32>
    %301 = arith.addf %299, %300 : vector<8x1xf32>
    %302 = math.rsqrt %301 : vector<8x1xf32>
    %303 = vector.broadcast %302 : vector<8x1xf32> to vector<8x32xf32>
    %304 = arith.mulf %294, %303 : vector<8x32xf32>
    %305 = vector.extract_strided_slice %288 {offsets = [0, 0], sizes = [1, 32], strides = [1, 1]} : vector<2x32xf32> to vector<1x32xf32>
    %306 = vector.broadcast %305 : vector<1x32xf32> to vector<8x32xf32>
    %307 = arith.mulf %304, %306 : vector<8x32xf32>
    %308 = vector.extract_strided_slice %288 {offsets = [1, 0], sizes = [1, 32], strides = [1, 1]} : vector<2x32xf32> to vector<1x32xf32>
    %309 = vector.broadcast %308 : vector<1x32xf32> to vector<8x32xf32>
    %310 = arith.addf %307, %309 : vector<8x32xf32>
    %311 = arith.truncf %310 : vector<8x32xf32> to vector<8x32xbf16>
    %c320 = arith.constant 320 : index
    %c0_93 = arith.constant 0 : index
    %312 = vector.load %arg1[%c320, %c0_93] : memref<544x128xbf16, #tpu.memory_space<vmem>>, vector<32x32xbf16>
    %cst_94 = arith.constant dense<0.000000e+00> : vector<8x32xf32>
    %313 = tpu.matmul %311, %312, %cst_94 {dimension_numbers = #tpu.dot_dimension_numbers<[1], [0], [0], [1], [0, 0, 1, 1], [], []>} : vector<8x32xbf16>, vector<32x32xbf16>, vector<8x32xf32> -> vector<8x32xf32>
    %c168 = arith.constant 168 : index
    %c0_95 = arith.constant 0 : index
    %314 = vector.load %arg2[%c168, %c0_95] : memref<280x128xf32, #tpu.memory_space<vmem>>, vector<8x32xf32>
    %315 = arith.addf %313, %314 : vector<8x32xf32>
    %316 = arith.truncf %315 : vector<8x32xf32> to vector<8x32xbf16>
    %317 = arith.truncf %284 : vector<34x32xf32> to vector<34x32xbf16>
    %c352 = arith.constant 352 : index
    %c0_96 = arith.constant 0 : index
    %318 = vector.load %arg1[%c352, %c0_96] : memref<544x128xbf16, #tpu.memory_space<vmem>>, vector<32x64xbf16>
    %cst_97 = arith.constant dense<0.000000e+00> : vector<34x64xf32>
    %319 = tpu.matmul %317, %318, %cst_97 {dimension_numbers = #tpu.dot_dimension_numbers<[1], [0], [0], [1], [0, 0, 1, 1], [], []>} : vector<34x32xbf16>, vector<32x64xbf16>, vector<34x64xf32> -> vector<34x64xf32>
    %c176 = arith.constant 176 : index
    %c0_98 = arith.constant 0 : index
    %320 = vector.load %arg2[%c176, %c0_98] : memref<280x128xf32, #tpu.memory_space<vmem>>, vector<34x64xf32>
    %321 = arith.addf %319, %320 : vector<34x64xf32>
    %322 = arith.truncf %321 : vector<34x64xf32> to vector<34x64xbf16>
    %323 = vector.extract_strided_slice %322 {offsets = [0, 0], sizes = [34, 32], strides = [1, 1]} : vector<34x64xbf16> to vector<34x32xbf16>
    %324 = vector.extract_strided_slice %322 {offsets = [0, 32], sizes = [34, 32], strides = [1, 1]} : vector<34x64xbf16> to vector<34x32xbf16>
    %325 = vector.extract_strided_slice %316 {offsets = [0, 0], sizes = [8, 8], strides = [1, 1]} : vector<8x32xbf16> to vector<8x8xbf16>
    %326 = vector.extract_strided_slice %323 {offsets = [0, 0], sizes = [34, 8], strides = [1, 1]} : vector<34x32xbf16> to vector<34x8xbf16>
    %cst_99 = arith.constant dense<0.000000e+00> : vector<8x34xf32>
    %327 = tpu.matmul %325, %326, %cst_99 {dimension_numbers = #tpu.dot_dimension_numbers<[1], [1], [0], [0], [0, 0, 1, 0], [], []>} : vector<8x8xbf16>, vector<34x8xbf16>, vector<8x34xf32> -> vector<8x34xf32>
    %cst_100 = arith.constant dense<0xFF800000> : vector<8xf32>
    %328 = vector.multi_reduction <maximumf>, %327, %cst_100 [1] : vector<8x34xf32> to vector<8xf32>
    %329 = vector.shape_cast %328 : vector<8xf32> to vector<8x1xf32>
    %330 = vector.broadcast %329 : vector<8x1xf32> to vector<8x34xf32>
    %331 = arith.subf %327, %330 : vector<8x34xf32>
    %332 = math.exp %331 : vector<8x34xf32>
    %cst_101 = arith.constant dense<0.000000e+00> : vector<8xf32>
    %333 = vector.multi_reduction <add>, %332, %cst_101 [1] : vector<8x34xf32> to vector<8xf32>
    %334 = vector.shape_cast %333 : vector<8xf32> to vector<8x1xf32>
    %335 = tpu.reciprocal %334 {approx = true} : vector<8x1xf32> -> vector<8x1xf32>
    %336 = vector.broadcast %335 : vector<8x1xf32> to vector<8x34xf32>
    %337 = arith.mulf %332, %336 : vector<8x34xf32>
    %338 = arith.truncf %337 : vector<8x34xf32> to vector<8x34xbf16>
    %339 = vector.extract_strided_slice %324 {offsets = [0, 0], sizes = [34, 8], strides = [1, 1]} : vector<34x32xbf16> to vector<34x8xbf16>
    %cst_102 = arith.constant dense<0.000000e+00> : vector<8x8xf32>
    %340 = tpu.matmul %338, %339, %cst_102 {dimension_numbers = #tpu.dot_dimension_numbers<[1], [0], [0], [1], [0, 0, 1, 1], [], []>} : vector<8x34xbf16>, vector<34x8xbf16>, vector<8x8xf32> -> vector<8x8xf32>
    %341 = vector.extract_strided_slice %316 {offsets = [0, 8], sizes = [8, 8], strides = [1, 1]} : vector<8x32xbf16> to vector<8x8xbf16>
    %342 = vector.extract_strided_slice %323 {offsets = [0, 8], sizes = [34, 8], strides = [1, 1]} : vector<34x32xbf16> to vector<34x8xbf16>
    %cst_103 = arith.constant dense<0.000000e+00> : vector<8x34xf32>
    %343 = tpu.matmul %341, %342, %cst_103 {dimension_numbers = #tpu.dot_dimension_numbers<[1], [1], [0], [0], [0, 0, 1, 0], [], []>} : vector<8x8xbf16>, vector<34x8xbf16>, vector<8x34xf32> -> vector<8x34xf32>
    %cst_104 = arith.constant dense<0xFF800000> : vector<8xf32>
    %344 = vector.multi_reduction <maximumf>, %343, %cst_104 [1] : vector<8x34xf32> to vector<8xf32>
    %345 = vector.shape_cast %344 : vector<8xf32> to vector<8x1xf32>
    %346 = vector.broadcast %345 : vector<8x1xf32> to vector<8x34xf32>
    %347 = arith.subf %343, %346 : vector<8x34xf32>
    %348 = math.exp %347 : vector<8x34xf32>
    %cst_105 = arith.constant dense<0.000000e+00> : vector<8xf32>
    %349 = vector.multi_reduction <add>, %348, %cst_105 [1] : vector<8x34xf32> to vector<8xf32>
    %350 = vector.shape_cast %349 : vector<8xf32> to vector<8x1xf32>
    %351 = tpu.reciprocal %350 {approx = true} : vector<8x1xf32> -> vector<8x1xf32>
    %352 = vector.broadcast %351 : vector<8x1xf32> to vector<8x34xf32>
    %353 = arith.mulf %348, %352 : vector<8x34xf32>
    %354 = arith.truncf %353 : vector<8x34xf32> to vector<8x34xbf16>
    %355 = vector.extract_strided_slice %324 {offsets = [0, 8], sizes = [34, 8], strides = [1, 1]} : vector<34x32xbf16> to vector<34x8xbf16>
    %cst_106 = arith.constant dense<0.000000e+00> : vector<8x8xf32>
    %356 = tpu.matmul %354, %355, %cst_106 {dimension_numbers = #tpu.dot_dimension_numbers<[1], [0], [0], [1], [0, 0, 1, 1], [], []>} : vector<8x34xbf16>, vector<34x8xbf16>, vector<8x8xf32> -> vector<8x8xf32>
    %357 = vector.extract_strided_slice %316 {offsets = [0, 16], sizes = [8, 8], strides = [1, 1]} : vector<8x32xbf16> to vector<8x8xbf16>
    %358 = vector.extract_strided_slice %323 {offsets = [0, 16], sizes = [34, 8], strides = [1, 1]} : vector<34x32xbf16> to vector<34x8xbf16>
    %cst_107 = arith.constant dense<0.000000e+00> : vector<8x34xf32>
    %359 = tpu.matmul %357, %358, %cst_107 {dimension_numbers = #tpu.dot_dimension_numbers<[1], [1], [0], [0], [0, 0, 1, 0], [], []>} : vector<8x8xbf16>, vector<34x8xbf16>, vector<8x34xf32> -> vector<8x34xf32>
    %cst_108 = arith.constant dense<0xFF800000> : vector<8xf32>
    %360 = vector.multi_reduction <maximumf>, %359, %cst_108 [1] : vector<8x34xf32> to vector<8xf32>
    %361 = vector.shape_cast %360 : vector<8xf32> to vector<8x1xf32>
    %362 = vector.broadcast %361 : vector<8x1xf32> to vector<8x34xf32>
    %363 = arith.subf %359, %362 : vector<8x34xf32>
    %364 = math.exp %363 : vector<8x34xf32>
    %cst_109 = arith.constant dense<0.000000e+00> : vector<8xf32>
    %365 = vector.multi_reduction <add>, %364, %cst_109 [1] : vector<8x34xf32> to vector<8xf32>
    %366 = vector.shape_cast %365 : vector<8xf32> to vector<8x1xf32>
    %367 = tpu.reciprocal %366 {approx = true} : vector<8x1xf32> -> vector<8x1xf32>
    %368 = vector.broadcast %367 : vector<8x1xf32> to vector<8x34xf32>
    %369 = arith.mulf %364, %368 : vector<8x34xf32>
    %370 = arith.truncf %369 : vector<8x34xf32> to vector<8x34xbf16>
    %371 = vector.extract_strided_slice %324 {offsets = [0, 16], sizes = [34, 8], strides = [1, 1]} : vector<34x32xbf16> to vector<34x8xbf16>
    %cst_110 = arith.constant dense<0.000000e+00> : vector<8x8xf32>
    %372 = tpu.matmul %370, %371, %cst_110 {dimension_numbers = #tpu.dot_dimension_numbers<[1], [0], [0], [1], [0, 0, 1, 1], [], []>} : vector<8x34xbf16>, vector<34x8xbf16>, vector<8x8xf32> -> vector<8x8xf32>
    %373 = vector.extract_strided_slice %316 {offsets = [0, 24], sizes = [8, 8], strides = [1, 1]} : vector<8x32xbf16> to vector<8x8xbf16>
    %374 = vector.extract_strided_slice %323 {offsets = [0, 24], sizes = [34, 8], strides = [1, 1]} : vector<34x32xbf16> to vector<34x8xbf16>
    %cst_111 = arith.constant dense<0.000000e+00> : vector<8x34xf32>
    %375 = tpu.matmul %373, %374, %cst_111 {dimension_numbers = #tpu.dot_dimension_numbers<[1], [1], [0], [0], [0, 0, 1, 0], [], []>} : vector<8x8xbf16>, vector<34x8xbf16>, vector<8x34xf32> -> vector<8x34xf32>
    %cst_112 = arith.constant dense<0xFF800000> : vector<8xf32>
    %376 = vector.multi_reduction <maximumf>, %375, %cst_112 [1] : vector<8x34xf32> to vector<8xf32>
    %377 = vector.shape_cast %376 : vector<8xf32> to vector<8x1xf32>
    %378 = vector.broadcast %377 : vector<8x1xf32> to vector<8x34xf32>
    %379 = arith.subf %375, %378 : vector<8x34xf32>
    %380 = math.exp %379 : vector<8x34xf32>
    %cst_113 = arith.constant dense<0.000000e+00> : vector<8xf32>
    %381 = vector.multi_reduction <add>, %380, %cst_113 [1] : vector<8x34xf32> to vector<8xf32>
    %382 = vector.shape_cast %381 : vector<8xf32> to vector<8x1xf32>
    %383 = tpu.reciprocal %382 {approx = true} : vector<8x1xf32> -> vector<8x1xf32>
    %384 = vector.broadcast %383 : vector<8x1xf32> to vector<8x34xf32>
    %385 = arith.mulf %380, %384 : vector<8x34xf32>
    %386 = arith.truncf %385 : vector<8x34xf32> to vector<8x34xbf16>
    %387 = vector.extract_strided_slice %324 {offsets = [0, 24], sizes = [34, 8], strides = [1, 1]} : vector<34x32xbf16> to vector<34x8xbf16>
    %cst_114 = arith.constant dense<0.000000e+00> : vector<8x8xf32>
    %388 = tpu.matmul %386, %387, %cst_114 {dimension_numbers = #tpu.dot_dimension_numbers<[1], [0], [0], [1], [0, 0, 1, 1], [], []>} : vector<8x34xbf16>, vector<34x8xbf16>, vector<8x8xf32> -> vector<8x8xf32>
    %389 = tpu.concatenate %340, %356, %372, %388 in 1 : vector<8x8xf32>, vector<8x8xf32>, vector<8x8xf32>, vector<8x8xf32> -> vector<8x32xf32>
    %390 = arith.truncf %389 : vector<8x32xf32> to vector<8x32xbf16>
    %c384 = arith.constant 384 : index
    %c0_115 = arith.constant 0 : index
    %391 = vector.load %arg1[%c384, %c0_115] : memref<544x128xbf16, #tpu.memory_space<vmem>>, vector<32x32xbf16>
    %cst_116 = arith.constant dense<0.000000e+00> : vector<8x32xf32>
    %392 = tpu.matmul %390, %391, %cst_116 {dimension_numbers = #tpu.dot_dimension_numbers<[1], [0], [0], [1], [0, 0, 1, 1], [], []>} : vector<8x32xbf16>, vector<32x32xbf16>, vector<8x32xf32> -> vector<8x32xf32>
    %c216 = arith.constant 216 : index
    %c0_117 = arith.constant 0 : index
    %393 = vector.load %arg2[%c216, %c0_117] : memref<280x128xf32, #tpu.memory_space<vmem>>, vector<1x32xf32>
    %394 = vector.broadcast %393 : vector<1x32xf32> to vector<8x32xf32>
    %395 = arith.addf %392, %394 : vector<8x32xf32>
    %396 = arith.addf %310, %395 : vector<8x32xf32>
    %c248 = arith.constant 248 : index
    %c0_118 = arith.constant 0 : index
    %397 = vector.load %arg2[%c248, %c0_118] : memref<280x128xf32, #tpu.memory_space<vmem>>, vector<2x32xf32>
    %cst_119 = arith.constant dense<0.000000e+00> : vector<8xf32>
    %398 = vector.multi_reduction <add>, %396, %cst_119 [1] : vector<8x32xf32> to vector<8xf32>
    %399 = vector.shape_cast %398 : vector<8xf32> to vector<8x1xf32>
    %cst_120 = arith.constant 3.200000e+01 : f32
    %400 = vector.broadcast %cst_120 : f32 to vector<8x1xf32>
    %401 = arith.divf %399, %400 : vector<8x1xf32>
    %402 = vector.broadcast %401 : vector<8x1xf32> to vector<8x32xf32>
    %403 = arith.subf %396, %402 : vector<8x32xf32>
    %404 = arith.mulf %403, %403 : vector<8x32xf32>
    %cst_121 = arith.constant dense<0.000000e+00> : vector<8xf32>
    %405 = vector.multi_reduction <add>, %404, %cst_121 [1] : vector<8x32xf32> to vector<8xf32>
    %406 = vector.shape_cast %405 : vector<8xf32> to vector<8x1xf32>
    %cst_122 = arith.constant 3.200000e+01 : f32
    %407 = vector.broadcast %cst_122 : f32 to vector<8x1xf32>
    %408 = arith.divf %406, %407 : vector<8x1xf32>
    %cst_123 = arith.constant 9.99999974E-6 : f32
    %409 = vector.broadcast %cst_123 : f32 to vector<8x1xf32>
    %410 = arith.addf %408, %409 : vector<8x1xf32>
    %411 = math.rsqrt %410 : vector<8x1xf32>
    %412 = vector.broadcast %411 : vector<8x1xf32> to vector<8x32xf32>
    %413 = arith.mulf %403, %412 : vector<8x32xf32>
    %414 = vector.extract_strided_slice %397 {offsets = [0, 0], sizes = [1, 32], strides = [1, 1]} : vector<2x32xf32> to vector<1x32xf32>
    %415 = vector.broadcast %414 : vector<1x32xf32> to vector<8x32xf32>
    %416 = arith.mulf %413, %415 : vector<8x32xf32>
    %417 = vector.extract_strided_slice %397 {offsets = [1, 0], sizes = [1, 32], strides = [1, 1]} : vector<2x32xf32> to vector<1x32xf32>
    %418 = vector.broadcast %417 : vector<1x32xf32> to vector<8x32xf32>
    %419 = arith.addf %416, %418 : vector<8x32xf32>
    %420 = arith.truncf %419 : vector<8x32xf32> to vector<8x32xbf16>
    %c416 = arith.constant 416 : index
    %c0_124 = arith.constant 0 : index
    %421 = vector.load %arg1[%c416, %c0_124] : memref<544x128xbf16, #tpu.memory_space<vmem>>, vector<32x64xbf16>
    %cst_125 = arith.constant dense<0.000000e+00> : vector<8x64xf32>
    %422 = tpu.matmul %420, %421, %cst_125 {dimension_numbers = #tpu.dot_dimension_numbers<[1], [0], [0], [1], [0, 0, 1, 1], [], []>} : vector<8x32xbf16>, vector<32x64xbf16>, vector<8x64xf32> -> vector<8x64xf32>
    %c224_126 = arith.constant 224 : index
    %c0_127 = arith.constant 0 : index
    %423 = vector.load %arg2[%c224_126, %c0_127] : memref<280x128xf32, #tpu.memory_space<vmem>>, vector<1x64xf32>
    %424 = vector.broadcast %423 : vector<1x64xf32> to vector<8x64xf32>
    %425 = arith.addf %422, %424 : vector<8x64xf32>
    %cst_128 = arith.constant 0.000000e+00 : f32
    %426 = vector.broadcast %cst_128 : f32 to vector<8x64xf32>
    %427 = arith.maximumf %425, %426 : vector<8x64xf32>
    %428 = arith.truncf %427 : vector<8x64xf32> to vector<8x64xbf16>
    %c448 = arith.constant 448 : index
    %c0_129 = arith.constant 0 : index
    %429 = vector.load %arg1[%c448, %c0_129] : memref<544x128xbf16, #tpu.memory_space<vmem>>, vector<64x32xbf16>
    %cst_130 = arith.constant dense<0.000000e+00> : vector<8x32xf32>
    %430 = tpu.matmul %428, %429, %cst_130 {dimension_numbers = #tpu.dot_dimension_numbers<[1], [0], [0], [1], [0, 0, 1, 1], [], []>} : vector<8x64xbf16>, vector<64x32xbf16>, vector<8x32xf32> -> vector<8x32xf32>
    %c232 = arith.constant 232 : index
    %c0_131 = arith.constant 0 : index
    %431 = vector.load %arg2[%c232, %c0_131] : memref<280x128xf32, #tpu.memory_space<vmem>>, vector<1x32xf32>
    %432 = vector.broadcast %431 : vector<1x32xf32> to vector<8x32xf32>
    %433 = arith.addf %430, %432 : vector<8x32xf32>
    %434 = arith.addf %419, %433 : vector<8x32xf32>
    %c256_132 = arith.constant 256 : index
    %c0_133 = arith.constant 0 : index
    %435 = vector.load %arg2[%c256_132, %c0_133] : memref<280x128xf32, #tpu.memory_space<vmem>>, vector<2x32xf32>
    %cst_134 = arith.constant dense<0.000000e+00> : vector<8xf32>
    %436 = vector.multi_reduction <add>, %434, %cst_134 [1] : vector<8x32xf32> to vector<8xf32>
    %437 = vector.shape_cast %436 : vector<8xf32> to vector<8x1xf32>
    %cst_135 = arith.constant 3.200000e+01 : f32
    %438 = vector.broadcast %cst_135 : f32 to vector<8x1xf32>
    %439 = arith.divf %437, %438 : vector<8x1xf32>
    %440 = vector.broadcast %439 : vector<8x1xf32> to vector<8x32xf32>
    %441 = arith.subf %434, %440 : vector<8x32xf32>
    %442 = arith.mulf %441, %441 : vector<8x32xf32>
    %cst_136 = arith.constant dense<0.000000e+00> : vector<8xf32>
    %443 = vector.multi_reduction <add>, %442, %cst_136 [1] : vector<8x32xf32> to vector<8xf32>
    %444 = vector.shape_cast %443 : vector<8xf32> to vector<8x1xf32>
    %cst_137 = arith.constant 3.200000e+01 : f32
    %445 = vector.broadcast %cst_137 : f32 to vector<8x1xf32>
    %446 = arith.divf %444, %445 : vector<8x1xf32>
    %cst_138 = arith.constant 9.99999974E-6 : f32
    %447 = vector.broadcast %cst_138 : f32 to vector<8x1xf32>
    %448 = arith.addf %446, %447 : vector<8x1xf32>
    %449 = math.rsqrt %448 : vector<8x1xf32>
    %450 = vector.broadcast %449 : vector<8x1xf32> to vector<8x32xf32>
    %451 = arith.mulf %441, %450 : vector<8x32xf32>
    %452 = vector.extract_strided_slice %435 {offsets = [0, 0], sizes = [1, 32], strides = [1, 1]} : vector<2x32xf32> to vector<1x32xf32>
    %453 = vector.broadcast %452 : vector<1x32xf32> to vector<8x32xf32>
    %454 = arith.mulf %451, %453 : vector<8x32xf32>
    %455 = vector.extract_strided_slice %435 {offsets = [1, 0], sizes = [1, 32], strides = [1, 1]} : vector<2x32xf32> to vector<1x32xf32>
    %456 = vector.broadcast %455 : vector<1x32xf32> to vector<8x32xf32>
    %457 = arith.addf %454, %456 : vector<8x32xf32>
    %c264 = arith.constant 264 : index
    %c0_139 = arith.constant 0 : index
    %458 = vector.load %arg2[%c264, %c0_139] : memref<280x128xf32, #tpu.memory_space<vmem>>, vector<2x32xf32>
    %cst_140 = arith.constant dense<0.000000e+00> : vector<8xf32>
    %459 = vector.multi_reduction <add>, %457, %cst_140 [1] : vector<8x32xf32> to vector<8xf32>
    %460 = vector.shape_cast %459 : vector<8xf32> to vector<8x1xf32>
    %cst_141 = arith.constant 3.200000e+01 : f32
    %461 = vector.broadcast %cst_141 : f32 to vector<8x1xf32>
    %462 = arith.divf %460, %461 : vector<8x1xf32>
    %463 = vector.broadcast %462 : vector<8x1xf32> to vector<8x32xf32>
    %464 = arith.subf %457, %463 : vector<8x32xf32>
    %465 = arith.mulf %464, %464 : vector<8x32xf32>
    %cst_142 = arith.constant dense<0.000000e+00> : vector<8xf32>
    %466 = vector.multi_reduction <add>, %465, %cst_142 [1] : vector<8x32xf32> to vector<8xf32>
    %467 = vector.shape_cast %466 : vector<8xf32> to vector<8x1xf32>
    %cst_143 = arith.constant 3.200000e+01 : f32
    %468 = vector.broadcast %cst_143 : f32 to vector<8x1xf32>
    %469 = arith.divf %467, %468 : vector<8x1xf32>
    %cst_144 = arith.constant 9.99999974E-6 : f32
    %470 = vector.broadcast %cst_144 : f32 to vector<8x1xf32>
    %471 = arith.addf %469, %470 : vector<8x1xf32>
    %472 = math.rsqrt %471 : vector<8x1xf32>
    %473 = vector.broadcast %472 : vector<8x1xf32> to vector<8x32xf32>
    %474 = arith.mulf %464, %473 : vector<8x32xf32>
    %475 = vector.extract_strided_slice %458 {offsets = [0, 0], sizes = [1, 32], strides = [1, 1]} : vector<2x32xf32> to vector<1x32xf32>
    %476 = vector.broadcast %475 : vector<1x32xf32> to vector<8x32xf32>
    %477 = arith.mulf %474, %476 : vector<8x32xf32>
    %478 = vector.extract_strided_slice %458 {offsets = [1, 0], sizes = [1, 32], strides = [1, 1]} : vector<2x32xf32> to vector<1x32xf32>
    %479 = vector.broadcast %478 : vector<1x32xf32> to vector<8x32xf32>
    %480 = arith.addf %477, %479 : vector<8x32xf32>
    %481 = arith.truncf %480 : vector<8x32xf32> to vector<8x32xbf16>
    %c512 = arith.constant 512 : index
    %c0_145 = arith.constant 0 : index
    %482 = vector.load %arg1[%c512, %c0_145] : memref<544x128xbf16, #tpu.memory_space<vmem>>, vector<32x128xbf16>
    %cst_146 = arith.constant dense<0.000000e+00> : vector<8x128xf32>
    %483 = tpu.matmul %481, %482, %cst_146 {dimension_numbers = #tpu.dot_dimension_numbers<[1], [0], [0], [1], [0, 0, 1, 1], [], []>} : vector<8x32xbf16>, vector<32x128xbf16>, vector<8x128xf32> -> vector<8x128xf32>
    %c272 = arith.constant 272 : index
    %c0_147 = arith.constant 0 : index
    %484 = vector.load %arg2[%c272, %c0_147] : memref<280x128xf32, #tpu.memory_space<vmem>>, vector<1x128xf32>
    %485 = vector.broadcast %484 : vector<1x128xf32> to vector<8x128xf32>
    %486 = arith.addf %483, %485 : vector<8x128xf32>
    %c0_148 = arith.constant 0 : index
    %c0_149 = arith.constant 0 : index
    %487 = vector.load %arg3[%c0_148, %c0_149] : memref<8x128xf32, #tpu.memory_space<vmem>>, vector<8x128xf32>
    tpu.vector_store %arg3[%c0_148, %c0_149], %486 {strides = array<i32>} : memref<8x128xf32, #tpu.memory_space<vmem>>, vector<8x128xf32>,
    return
  }
}

</mosaic_0001>

<llo_original>
// kernel: _lambda_.1
$region0: #{_lambda_.1}
  #allocation0 [shape = 'u32[]', space=smem, size = 0x4, offset = 0x4, fixed_abs, tag = 'smem constant byte address 0x4 - core index']
  #allocation1 [shape = 'u32[72,128]{1,0:T(1,128)}', space=vmem, size = 0x9000, scoped, tag = 'internal scratch']
  %s0 = inlined_call_operand.vmem [shape: f32[34,32], index: 0, kind: input, shape index: {}]
  %s1 = inlined_call_operand.hbm [shape: bf16[544,128], index: 1, kind: input, shape index: {}]
  %s2 = inlined_call_operand.hbm [shape: f32[280,128], index: 2, kind: input, shape index: {}]
  %s3 = inlined_call_operand.vmem [shape: f32[8,128], index: 3, kind: output, shape index: {}]
  %s4 = sld [smem:[#allocation0]]
  $region30: #{_lambda_.1} parent=0
    _
  %s6 = ssub.s32 1, %s4
  %s7 = scalar_select 0, %s6, %s4
  $region1: #{_lambda_.1} parent=0
    #allocation2 [shape = 'u8[139264]{0}', space=vmem, size = 0x22000, scoped, tag = 'input window, operand 1, single buffered']
    #allocation3 [shape = 's32[1]{0}', space=sflag, size = 0x4, scoped, tag = 'scoped memory for _lambda_.1']
    #allocation4 [shape = 'u8[143360]{0}', space=vmem, size = 0x23000, scoped, tag = 'input window, operand 2, single buffered']
    #allocation5 [shape = 's32[1]{0}', space=sflag, size = 0x4, scoped, tag = 'scoped memory for _lambda_.1']
    %8 = vsyncpa [#allocation3], 0
    %9 = vsyncpa [#allocation5], 0
    // Predicated region
    $region2: #{_lambda_.1} parent=1 // pred_check
      _
    $region3: #{_lambda_.1} parent=1 // pred_check_branch
      %11 = sbr.rel (0) target = $region5
    $region4: #{_lambda_.1} parent=1 // pred_region
      _
    $region5: #{_lambda_.1} parent=1 // pred_fallthru
      _
    // Predicated region
    $region6: #{_lambda_.1} parent=1 // pred_check
      _
    $region7: #{_lambda_.1} parent=1 // pred_check_branch
      %13 = sbr.rel (0) target = $region9
    $region8: #{_lambda_.1} parent=1 // pred_region
      %15 = vsyncadd [#allocation3], 0
      %s16 = sshll.u32 %s1, 4
      %s17 = int_to_ptr.hbm [resolvable:$true] %s16
      %s18 = sshll.u32 [#allocation2], 4
      %s19 = int_to_ptr.vmem [resolvable:$true] %s18
      %24 = dma.hbm_to_vmem [thread:$0]  %s17, 4352, %s19, [#allocation3], 64, 64, 4
    $region9: #{_lambda_.1} parent=1 // pred_fallthru
      _
    // Predicated region
    $region10: #{_lambda_.1} parent=1 // pred_check
      _
    $region11: #{_lambda_.1} parent=1 // pred_check_branch
      %26 = sbr.rel (0) target = $region13
    $region12: #{_lambda_.1} parent=1 // pred_region
      %28 = vsyncadd [#allocation5], 0
      %s29 = sshll.u32 %s2, 4
      %s30 = int_to_ptr.hbm [resolvable:$true] %s29
      %s31 = sshll.u32 [#allocation4], 4
      %s32 = int_to_ptr.vmem [resolvable:$true] %s31
      %37 = dma.hbm_to_vmem [thread:$0]  %s30, 4480, %s32, [#allocation5], 128, 128, 8
    $region13: #{_lambda_.1} parent=1 // pred_fallthru
      _
    // Predicated region
    $region14: #{_lambda_.1} parent=1 // pred_check
      _
    $region15: #{_lambda_.1} parent=1 // pred_check_branch
      %39 = sbr.rel (0) target = $region17
    $region16: #{_lambda_.1} parent=1 // pred_region
      %41 = dma.done [#allocation3], 4352
    $region17: #{_lambda_.1} parent=1 // pred_fallthru
      _
    // Predicated region
    $region18: #{_lambda_.1} parent=1 // pred_check
      _
    $region19: #{_lambda_.1} parent=1 // pred_check_branch
      %43 = sbr.rel (0) target = $region21
    $region20: #{_lambda_.1} parent=1 // pred_region
      %45 = dma.done [#allocation5], 4480
    $region21: #{_lambda_.1} parent=1 // pred_fallthru
      _
    %v47 = vld [vmem:[%s0] sm:$0xff]
    %v48 = vld [vmem:[%s0 + $0x8] sm:$0xff]
    %v49 = vld [vmem:[%s0 + $0x10] sm:$0xff]
    %v50 = vld [vmem:[%s0 + $0x18] sm:$0xff]
    %v51 = vld [vmem:[%s0 + $0x20] sm:$0x3]
    %v52 = vpack.c.bf16 %v48, %v47
    %v53 = vpack.c.bf16 %v50, %v49
    %v54 = vpack.c.bf16 %v51, %v51
    %v55 = vld [vmem:[#allocation2] sm:$0xf]
    %v56 = vld [vmem:[#allocation2 + $0x4] sm:$0xf]
    %v57 = vld [vmem:[#allocation2 + $0x8] sm:$0xf]
    %v58 = vld [vmem:[#allocation2 + $0xc] sm:$0xf]
    %v59 = vld [vmem:[#allocation4] sm:$0xff]
    %v60 = vld [vmem:[#allocation4 + $0x8] sm:$0xff]
    %v61 = vld [vmem:[#allocation4 + $0x10] sm:$0xff]
    %v62 = vld [vmem:[#allocation4 + $0x18] sm:$0xff]
    %v63 = vld [vmem:[#allocation4 + $0x20] sm:$0x3]
    %v68 = vunpack.c.l.b16 %v55
    %v69 = vunpack.c.l.b16 %v56
    %v70 = vunpack.c.l.b16 %v57
    %v71 = vunpack.c.l.b16 %v58
    %v72 = vpack.c.b16 %v69, %v68
    %v73 = vpack.c.b16 %v71, %v70
    %vm76 = vcmask 261120
    %v78 = vsel %vm76, %v52, 0
    %v81 = vsel %vm76, %v53, 0
    %v84 = vsel %vm76, %v54, 0
    %86 = vmatpush.bf16.msra.mxu0 0
    %87 = vmatpush.bf16.msra.mxu0 0
    %88 = vmatpush.bf16.msra.mxu0 0
    %89 = vmatpush.bf16.msra.mxu0 0
    %90 = vmatpush.bf16.msra.mxu0 0
    %91 = vmatpush.bf16.msra.mxu0 0
    %92 = vmatpush.bf16.msra.mxu0 %v73
    %93 = vmatpush.bf16.msra.mxu0 %v72
    %94 = vmatmul.bf16.gmra.mxu0 %v78
    %v95 = vpop.f32.mrf.mxu0
    %v96 = vadd.f32 %v59, %v95
    %v97 = vpop.f32.mrf.mxu0
    %v98 = vadd.f32 %v60, %v97
    %99 = vmatmul.bf16.gmra.mxu0 %v81
    %v100 = vpop.f32.mrf.mxu0
    %v101 = vadd.f32 %v61, %v100
    %v102 = vpop.f32.mrf.mxu0
    %v103 = vadd.f32 %v62, %v102
    %104 = vmatmul.bf16.gmra.mxu0 %v84
    %v105 = vpop.f32.mrf.mxu0
    %v106 = vadd.f32 %v63, %v105
    %v107 = vpop.f32.mrf.mxu0
    %108 = vdwg.mxu0
    %v109 = vpack.c.bf16 %v96, %v96
    %v110 = vpack.c.bf16 %v98, %v98
    %v111 = vpack.c.bf16 %v101, %v101
    %v112 = vpack.c.bf16 %v103, %v103
    %v113 = vpack.c.bf16 %v106, %v106
    %v119 = vunpack.c.l.b16 %v109
    %v120 = vunpack.c.l.b16 %v110
    %v121 = vunpack.c.l.b16 %v111
    %v122 = vunpack.c.l.b16 %v112
    %v123 = vunpack.c.l.b16 %v113
    %v124 = vpack.c.b16 %v120, %v119
    %v125 = vpack.c.b16 %v122, %v121
    %v126 = vpack.c.b16 %v123, %v123
    %127 = vrot.lane.b32.xlu0 %v124, 96
    %v128 = vpop.permute.xlu0 %127
    %129 = vrot.lane.b32.xlu0 %v125, 96
    %v130 = vpop.permute.xlu0 %129
    %131 = vrot.lane.b32.xlu0 %v126, 96
    %v132 = vpop.permute.xlu0 %131
    %vm133 = vcmask 64512
    %v135 = vsel %vm133, %v124, 0
    %v138 = vsel %vm133, %v125, 0
    %v141 = vsel %vm133, %v126, 0
    %v144 = vsel %vm133, %v128, 0
    %v147 = vsel %vm133, %v130, 0
    %v150 = vsel %vm133, %v132, 0
    %152 = vmatpush.bf16.xpose.msra.mxu0 0
    %153 = vmatpush.bf16.xpose.msra.mxu0 0
    %154 = vmatpush.bf16.xpose.msra.mxu0 0
    %155 = vmatpush.bf16.xpose.msra.mxu0 0
    %156 = vmatpush.bf16.xpose.msra.mxu0 0
    %157 = vmatpush.bf16.xpose.msra.mxu0 %v150
    %158 = vmatpush.bf16.xpose.msra.mxu0 %v147
    %159 = vmatpush.bf16.xpose.msra.mxu0 %v144
    %160 = vmatmul.bf16.gmra.mxu0 %v135
    %v161 = vpop.f32.mrf.mxu0
    %v162 = vadd.f32 0.0, %v161
    %v163 = vpop.f32.mrf.mxu0
    %v164 = vadd.f32 0.0, %v163
    %165 = vmatmul.bf16.gmra.mxu0 %v138
    %v166 = vpop.f32.mrf.mxu0
    %v167 = vadd.f32 0.0, %v166
    %v168 = vpop.f32.mrf.mxu0
    %v169 = vadd.f32 0.0, %v168
    %170 = vmatmul.bf16.gmra.mxu0 %v141
    %v171 = vpop.f32.mrf.mxu0
    %v172 = vadd.f32 0.0, %v171
    %v173 = vpop.f32.mrf.mxu0
    %174 = vdwg.mxu0
    %vm175 = vcmask 277504
    %v176 = vsel %vm175, %v162, -inf
    %177 = vmax.xlane.f32.xlu0 %v176
    %v178 = vpop.xlane.xlu0 %177
    %v179 = vsel %vm175, %v164, -inf
    %180 = vmax.xlane.f32.xlu0 %v179
    %v181 = vpop.xlane.xlu0 %180
    %v182 = vsel %vm175, %v167, -inf
    %183 = vmax.xlane.f32.xlu0 %v182
    %v184 = vpop.xlane.xlu0 %183
    %v185 = vsel %vm175, %v169, -inf
    %186 = vmax.xlane.f32.xlu0 %v185
    %v187 = vpop.xlane.xlu0 %186
    %vm188 = vcmask 271360
    %v189 = vsel %vm188, %v172, -inf
    %190 = vmax.xlane.f32.xlu0 %v189
    %v191 = vpop.xlane.xlu0 %190
    %v192 = vsub.f32 %v162, %v178
    %v193 = vsub.f32 %v164, %v181
    %v194 = vsub.f32 %v167, %v184
    %v195 = vsub.f32 %v169, %v187
    %v196 = vsub.f32 %v172, %v191
    %v197 = vmul.f32 %v192, 1.442695
    %v198 = vpow.pop %v197
    %v199 = vmul.f32 %v193, 1.442695
    %v200 = vpow.pop %v199
    %v201 = vmul.f32 %v194, 1.442695
    %v202 = vpow.pop %v201
    %v203 = vmul.f32 %v195, 1.442695
    %v204 = vpow.pop %v203
    %v205 = vmul.f32 %v196, 1.442695
    %v206 = vpow.pop %v205
    %v207 = vsel %vm175, %v198, 0.0
    %208 = vadd.xlane.f32.xlu0 %v207
    %v209 = vpop.xlane.xlu0 %208
    %v210 = vsel %vm175, %v200, 0.0
    %211 = vadd.xlane.f32.xlu0 %v210
    %v212 = vpop.xlane.xlu0 %211
    %v213 = vsel %vm175, %v202, 0.0
    %214 = vadd.xlane.f32.xlu0 %v213
    %v215 = vpop.xlane.xlu0 %214
    %v216 = vsel %vm175, %v204, 0.0
    %217 = vadd.xlane.f32.xlu0 %v216
    %v218 = vpop.xlane.xlu0 %217
    %v219 = vsel %vm188, %v206, 0.0
    %220 = vadd.xlane.f32.xlu0 %v219
    %v221 = vpop.xlane.xlu0 %220
    %v222 = vrcp.pop %v209
    %v223 = vrcp.pop %v212
    %v224 = vrcp.pop %v215
    %v225 = vrcp.pop %v218
    %v226 = vrcp.pop %v221
    %v227 = vmul.f32 %v198, %v222
    %v228 = vmul.f32 %v200, %v223
    %v229 = vmul.f32 %v202, %v224
    %v230 = vmul.f32 %v204, %v225
    %v231 = vmul.f32 %v206, %v226
    %v232 = vpack.c.bf16 %v228, %v227
    %v233 = vpack.c.bf16 %v230, %v229
    %v234 = vpack.c.bf16 %v231, %v231
    %235 = vrot.lane.b32.xlu0 %v124, 64
    %v236 = vpop.permute.xlu0 %235
    %237 = vrot.lane.b32.xlu0 %v125, 64
    %v238 = vpop.permute.xlu0 %237
    %239 = vrot.lane.b32.xlu0 %v126, 64
    %v240 = vpop.permute.xlu0 %239
    %v244 = vsel %vm175, %v232, 0
    %v247 = vsel %vm175, %v233, 0
    %v250 = vsel %vm175, %v234, 0
    %vm252 = vcmask 1040384
    %v254 = vsel %vm252, %v240, 0
    %256 = vmatpush.bf16.msra.mxu0 0
    %257 = vmatpush.bf16.msra.mxu0 0
    %258 = vmatpush.bf16.msra.mxu0 0
    %259 = vmatpush.bf16.msra.mxu0 0
    %260 = vmatpush.bf16.msra.mxu0 0
    %261 = vmatpush.bf16.msra.mxu0 %v254
    %262 = vmatpush.bf16.msra.mxu0 %v238
    %263 = vmatpush.bf16.msra.mxu0 %v236
    %264 = vmatmul.bf16.gmra.mxu0 %v244
    %v265 = vpop.f32.mrf.mxu0
    %v266 = vadd.f32 0.0, %v265
    %v267 = vpop.f32.mrf.mxu0
    %v268 = vadd.f32 0.0, %v267
    %269 = vmatmul.bf16.gmra.mxu0 %v247
    %v270 = vpop.f32.mrf.mxu0
    %v271 = vadd.f32 0.0, %v270
    %v272 = vpop.f32.mrf.mxu0
    %v273 = vadd.f32 0.0, %v272
    %274 = vmatmul.bf16.gmra.mxu0 %v250
    %v275 = vpop.f32.mrf.mxu0
    %v276 = vadd.f32 0.0, %v275
    %v277 = vpop.f32.mrf.mxu0
    %278 = vdwg.mxu0
    %279 = vrot.lane.b32.xlu0 %v124, 120
    %v280 = vpop.permute.xlu0 %279
    %281 = vrot.lane.b32.xlu0 %v125, 120
    %v282 = vpop.permute.xlu0 %281
    %283 = vrot.lane.b32.xlu0 %v126, 120
    %v284 = vpop.permute.xlu0 %283
    %285 = vrot.lane.b32.xlu0 %v124, 88
    %v286 = vpop.permute.xlu0 %285
    %287 = vrot.lane.b32.xlu0 %v125, 88
    %v288 = vpop.permute.xlu0 %287
    %289 = vrot.lane.b32.xlu0 %v126, 88
    %v290 = vpop.permute.xlu0 %289
    %v292 = vsel %vm133, %v280, 0
    %v295 = vsel %vm133, %v282, 0
    %v298 = vsel %vm133, %v284, 0
    %v301 = vsel %vm133, %v286, 0
    %v304 = vsel %vm133, %v288, 0
    %v307 = vsel %vm133, %v290, 0
    %309 = vmatpush.bf16.xpose.msra.mxu0 0
    %310 = vmatpush.bf16.xpose.msra.mxu0 0
    %311 = vmatpush.bf16.xpose.msra.mxu0 0
    %312 = vmatpush.bf16.xpose.msra.mxu0 0
    %313 = vmatpush.bf16.xpose.msra.mxu0 0
    %314 = vmatpush.bf16.xpose.msra.mxu0 %v307
    %315 = vmatpush.bf16.xpose.msra.mxu0 %v304
    %316 = vmatpush.bf16.xpose.msra.mxu0 %v301
    %317 = vmatmul.bf16.gmra.mxu0 %v292
    %v318 = vpop.f32.mrf.mxu0
    %v319 = vadd.f32 0.0, %v318
    %v320 = vpop.f32.mrf.mxu0
    %v321 = vadd.f32 0.0, %v320
    %322 = vmatmul.bf16.gmra.mxu0 %v295
    %v323 = vpop.f32.mrf.mxu0
    %v324 = vadd.f32 0.0, %v323
    %v325 = vpop.f32.mrf.mxu0
    %v326 = vadd.f32 0.0, %v325
    %327 = vmatmul.bf16.gmra.mxu0 %v298
    %v328 = vpop.f32.mrf.mxu0
    %v329 = vadd.f32 0.0, %v328
    %v330 = vpop.f32.mrf.mxu0
    %331 = vdwg.mxu0
    %v332 = vsel %vm175, %v319, -inf
    %333 = vmax.xlane.f32.xlu0 %v332
    %v334 = vpop.xlane.xlu0 %333
    %v335 = vsel %vm175, %v321, -inf
    %336 = vmax.xlane.f32.xlu0 %v335
    %v337 = vpop.xlane.xlu0 %336
    %v338 = vsel %vm175, %v324, -inf
    %339 = vmax.xlane.f32.xlu0 %v338
    %v340 = vpop.xlane.xlu0 %339
    %v341 = vsel %vm175, %v326, -inf
    %342 = vmax.xlane.f32.xlu0 %v341
    %v343 = vpop.xlane.xlu0 %342
    %v344 = vsel %vm188, %v329, -inf
    %345 = vmax.xlane.f32.xlu0 %v344
    %v346 = vpop.xlane.xlu0 %345
    %v347 = vsub.f32 %v319, %v334
    %v348 = vsub.f32 %v321, %v337
    %v349 = vsub.f32 %v324, %v340
    %v350 = vsub.f32 %v326, %v343
    %v351 = vsub.f32 %v329, %v346
    %v352 = vmul.f32 %v347, 1.442695
    %v353 = vpow.pop %v352
    %v354 = vmul.f32 %v348, 1.442695
    %v355 = vpow.pop %v354
    %v356 = vmul.f32 %v349, 1.442695
    %v357 = vpow.pop %v356
    %v358 = vmul.f32 %v350, 1.442695
    %v359 = vpow.pop %v358
    %v360 = vmul.f32 %v351, 1.442695
    %v361 = vpow.pop %v360
    %v362 = vsel %vm175, %v353, 0.0
    %363 = vadd.xlane.f32.xlu0 %v362
    %v364 = vpop.xlane.xlu0 %363
    %v365 = vsel %vm175, %v355, 0.0
    %366 = vadd.xlane.f32.xlu0 %v365
    %v367 = vpop.xlane.xlu0 %366
    %v368 = vsel %vm175, %v357, 0.0
    %369 = vadd.xlane.f32.xlu0 %v368
    %v370 = vpop.xlane.xlu0 %369
    %v371 = vsel %vm175, %v359, 0.0
    %372 = vadd.xlane.f32.xlu0 %v371
    %v373 = vpop.xlane.xlu0 %372
    %v374 = vsel %vm188, %v361, 0.0
    %375 = vadd.xlane.f32.xlu0 %v374
    %v376 = vpop.xlane.xlu0 %375
    %v377 = vrcp.pop %v364
    %v378 = vrcp.pop %v367
    %v379 = vrcp.pop %v370
    %v380 = vrcp.pop %v373
    %v381 = vrcp.pop %v376
    %v382 = vmul.f32 %v353, %v377
    %v383 = vmul.f32 %v355, %v378
    %v384 = vmul.f32 %v357, %v379
    %v385 = vmul.f32 %v359, %v380
    %v386 = vmul.f32 %v361, %v381
    %v387 = vpack.c.bf16 %v383, %v382
    %v388 = vpack.c.bf16 %v385, %v384
    %v389 = vpack.c.bf16 %v386, %v386
    %390 = vrot.lane.b32.xlu0 %v124, 56
    %v391 = vpop.permute.xlu0 %390
    %392 = vrot.lane.b32.xlu0 %v125, 56
    %v393 = vpop.permute.xlu0 %392
    %394 = vrot.lane.b32.xlu0 %v126, 56
    %v395 = vpop.permute.xlu0 %394
    %v399 = vsel %vm175, %v387, 0
    %v402 = vsel %vm175, %v388, 0
    %v405 = vsel %vm175, %v389, 0
    %v408 = vsel %vm252, %v395, 0
    %410 = vmatpush.bf16.msra.mxu0 0
    %411 = vmatpush.bf16.msra.mxu0 0
    %412 = vmatpush.bf16.msra.mxu0 0
    %413 = vmatpush.bf16.msra.mxu0 0
    %414 = vmatpush.bf16.msra.mxu0 0
    %415 = vmatpush.bf16.msra.mxu0 %v408
    %416 = vmatpush.bf16.msra.mxu0 %v393
    %417 = vmatpush.bf16.msra.mxu0 %v391
    %418 = vmatmul.bf16.gmra.mxu0 %v399
    %v419 = vpop.f32.mrf.mxu0
    %v420 = vadd.f32 0.0, %v419
    %v421 = vpop.f32.mrf.mxu0
    %v422 = vadd.f32 0.0, %v421
    %423 = vmatmul.bf16.gmra.mxu0 %v402
    %v424 = vpop.f32.mrf.mxu0
    %v425 = vadd.f32 0.0, %v424
    %v426 = vpop.f32.mrf.mxu0
    %v427 = vadd.f32 0.0, %v426
    %428 = vmatmul.bf16.gmra.mxu0 %v405
    %v429 = vpop.f32.mrf.mxu0
    %v430 = vadd.f32 0.0, %v429
    %v431 = vpop.f32.mrf.mxu0
    %432 = vdwg.mxu0
    %433 = vrot.lane.b32.xlu0 %v124, 112
    %v434 = vpop.permute.xlu0 %433
    %435 = vrot.lane.b32.xlu0 %v125, 112
    %v436 = vpop.permute.xlu0 %435
    %437 = vrot.lane.b32.xlu0 %v126, 112
    %v438 = vpop.permute.xlu0 %437
    %439 = vrot.lane.b32.xlu0 %v124, 80
    %v440 = vpop.permute.xlu0 %439
    %441 = vrot.lane.b32.xlu0 %v125, 80
    %v442 = vpop.permute.xlu0 %441
    %443 = vrot.lane.b32.xlu0 %v126, 80
    %v444 = vpop.permute.xlu0 %443
    %v446 = vsel %vm133, %v434, 0
    %v449 = vsel %vm133, %v436, 0
    %v452 = vsel %vm133, %v438, 0
    %v455 = vsel %vm133, %v440, 0
    %v458 = vsel %vm133, %v442, 0
    %v461 = vsel %vm133, %v444, 0
    %463 = vmatpush.bf16.xpose.msra.mxu0 0
    %464 = vmatpush.bf16.xpose.msra.mxu0 0
    %465 = vmatpush.bf16.xpose.msra.mxu0 0
    %466 = vmatpush.bf16.xpose.msra.mxu0 0
    %467 = vmatpush.bf16.xpose.msra.mxu0 0
    %468 = vmatpush.bf16.xpose.msra.mxu0 %v461
    %469 = vmatpush.bf16.xpose.msra.mxu0 %v458
    %470 = vmatpush.bf16.xpose.msra.mxu0 %v455
    %471 = vmatmul.bf16.gmra.mxu0 %v446
    %v472 = vpop.f32.mrf.mxu0
    %v473 = vadd.f32 0.0, %v472
    %v474 = vpop.f32.mrf.mxu0
    %v475 = vadd.f32 0.0, %v474
    %476 = vmatmul.bf16.gmra.mxu0 %v449
    %v477 = vpop.f32.mrf.mxu0
    %v478 = vadd.f32 0.0, %v477
    %v479 = vpop.f32.mrf.mxu0
    %v480 = vadd.f32 0.0, %v479
    %481 = vmatmul.bf16.gmra.mxu0 %v452
    %v482 = vpop.f32.mrf.mxu0
    %v483 = vadd.f32 0.0, %v482
    %v484 = vpop.f32.mrf.mxu0
    %485 = vdwg.mxu0
    %v486 = vsel %vm175, %v473, -inf
    %487 = vmax.xlane.f32.xlu0 %v486
    %v488 = vpop.xlane.xlu0 %487
    %v489 = vsel %vm175, %v475, -inf
    %490 = vmax.xlane.f32.xlu0 %v489
    %v491 = vpop.xlane.xlu0 %490
    %v492 = vsel %vm175, %v478, -inf
    %493 = vmax.xlane.f32.xlu0 %v492
    %v494 = vpop.xlane.xlu0 %493
    %v495 = vsel %vm175, %v480, -inf
    %496 = vmax.xlane.f32.xlu0 %v495
    %v497 = vpop.xlane.xlu0 %496
    %v498 = vsel %vm188, %v483, -inf
    %499 = vmax.xlane.f32.xlu0 %v498
    %v500 = vpop.xlane.xlu0 %499
    %v501 = vsub.f32 %v473, %v488
    %v502 = vsub.f32 %v475, %v491
    %v503 = vsub.f32 %v478, %v494
    %v504 = vsub.f32 %v480, %v497
    %v505 = vsub.f32 %v483, %v500
    %v506 = vmul.f32 %v501, 1.442695
    %v507 = vpow.pop %v506
    %v508 = vmul.f32 %v502, 1.442695
    %v509 = vpow.pop %v508
    %v510 = vmul.f32 %v503, 1.442695
    %v511 = vpow.pop %v510
    %v512 = vmul.f32 %v504, 1.442695
    %v513 = vpow.pop %v512
    %v514 = vmul.f32 %v505, 1.442695
    %v515 = vpow.pop %v514
    %v516 = vsel %vm175, %v507, 0.0
    %517 = vadd.xlane.f32.xlu0 %v516
    %v518 = vpop.xlane.xlu0 %517
    %v519 = vsel %vm175, %v509, 0.0
    %520 = vadd.xlane.f32.xlu0 %v519
    %v521 = vpop.xlane.xlu0 %520
    %v522 = vsel %vm175, %v511, 0.0
    %523 = vadd.xlane.f32.xlu0 %v522
    %v524 = vpop.xlane.xlu0 %523
    %v525 = vsel %vm175, %v513, 0.0
    %526 = vadd.xlane.f32.xlu0 %v525
    %v527 = vpop.xlane.xlu0 %526
    %v528 = vsel %vm188, %v515, 0.0
    %529 = vadd.xlane.f32.xlu0 %v528
    %v530 = vpop.xlane.xlu0 %529
    %v531 = vrcp.pop %v518
    %v532 = vrcp.pop %v521
    %v533 = vrcp.pop %v524
    %v534 = vrcp.pop %v527
    %v535 = vrcp.pop %v530
    %v536 = vmul.f32 %v507, %v531
    %v537 = vmul.f32 %v509, %v532
    %v538 = vmul.f32 %v511, %v533
    %v539 = vmul.f32 %v513, %v534
    %v540 = vmul.f32 %v515, %v535
    %v541 = vpack.c.bf16 %v537, %v536
    %v542 = vpack.c.bf16 %v539, %v538
    %v543 = vpack.c.bf16 %v540, %v540
    %544 = vrot.lane.b32.xlu0 %v124, 48
    %v545 = vpop.permute.xlu0 %544
    %546 = vrot.lane.b32.xlu0 %v125, 48
    %v547 = vpop.permute.xlu0 %546
    %548 = vrot.lane.b32.xlu0 %v126, 48
    %v549 = vpop.permute.xlu0 %548
    %v553 = vsel %vm175, %v541, 0
    %v556 = vsel %vm175, %v542, 0
    %v559 = vsel %vm175, %v543, 0
    %v562 = vsel %vm252, %v549, 0
    %564 = vmatpush.bf16.msra.mxu0 0
    %565 = vmatpush.bf16.msra.mxu0 0
    %566 = vmatpush.bf16.msra.mxu0 0
    %567 = vmatpush.bf16.msra.mxu0 0
    %568 = vmatpush.bf16.msra.mxu0 0
    %569 = vmatpush.bf16.msra.mxu0 %v562
    %570 = vmatpush.bf16.msra.mxu0 %v547
    %571 = vmatpush.bf16.msra.mxu0 %v545
    %572 = vmatmul.bf16.gmra.mxu0 %v553
    %v573 = vpop.f32.mrf.mxu0
    %v574 = vadd.f32 0.0, %v573
    %v575 = vpop.f32.mrf.mxu0
    %v576 = vadd.f32 0.0, %v575
    %577 = vmatmul.bf16.gmra.mxu0 %v556
    %v578 = vpop.f32.mrf.mxu0
    %v579 = vadd.f32 0.0, %v578
    %v580 = vpop.f32.mrf.mxu0
    %v581 = vadd.f32 0.0, %v580
    %582 = vmatmul.bf16.gmra.mxu0 %v559
    %v583 = vpop.f32.mrf.mxu0
    %v584 = vadd.f32 0.0, %v583
    %v585 = vpop.f32.mrf.mxu0
    %586 = vdwg.mxu0
    %587 = vrot.lane.b32.xlu0 %v124, 104
    %v588 = vpop.permute.xlu0 %587
    %589 = vrot.lane.b32.xlu0 %v125, 104
    %v590 = vpop.permute.xlu0 %589
    %591 = vrot.lane.b32.xlu0 %v126, 104
    %v592 = vpop.permute.xlu0 %591
    %593 = vrot.lane.b32.xlu0 %v124, 72
    %v594 = vpop.permute.xlu0 %593
    %595 = vrot.lane.b32.xlu0 %v125, 72
    %v596 = vpop.permute.xlu0 %595
    %597 = vrot.lane.b32.xlu0 %v126, 72
    %v598 = vpop.permute.xlu0 %597
    %v600 = vsel %vm133, %v588, 0
    %v603 = vsel %vm133, %v590, 0
    %v606 = vsel %vm133, %v592, 0
    %v609 = vsel %vm133, %v594, 0
    %v612 = vsel %vm133, %v596, 0
    %v615 = vsel %vm133, %v598, 0
    %617 = vmatpush.bf16.xpose.msra.mxu0 0
    %618 = vmatpush.bf16.xpose.msra.mxu0 0
    %619 = vmatpush.bf16.xpose.msra.mxu0 0
    %620 = vmatpush.bf16.xpose.msra.mxu0 0
    %621 = vmatpush.bf16.xpose.msra.mxu0 0
    %622 = vmatpush.bf16.xpose.msra.mxu0 %v615
    %623 = vmatpush.bf16.xpose.msra.mxu0 %v612
    %624 = vmatpush.bf16.xpose.msra.mxu0 %v609
    %625 = vmatmul.bf16.gmra.mxu0 %v600
    %v626 = vpop.f32.mrf.mxu0
    %v627 = vadd.f32 0.0, %v626
    %v628 = vpop.f32.mrf.mxu0
    %v629 = vadd.f32 0.0, %v628
    %630 = vmatmul.bf16.gmra.mxu0 %v603
    %v631 = vpop.f32.mrf.mxu0
    %v632 = vadd.f32 0.0, %v631
    %v633 = vpop.f32.mrf.mxu0
    %v634 = vadd.f32 0.0, %v633
    %635 = vmatmul.bf16.gmra.mxu0 %v606
    %v636 = vpop.f32.mrf.mxu0
    %v637 = vadd.f32 0.0, %v636
    %v638 = vpop.f32.mrf.mxu0
    %639 = vdwg.mxu0
    %v640 = vsel %vm175, %v627, -inf
    %641 = vmax.xlane.f32.xlu0 %v640
    %v642 = vpop.xlane.xlu0 %641
    %v643 = vsel %vm175, %v629, -inf
    %644 = vmax.xlane.f32.xlu0 %v643
    %v645 = vpop.xlane.xlu0 %644
    %v646 = vsel %vm175, %v632, -inf
    %647 = vmax.xlane.f32.xlu0 %v646
    %v648 = vpop.xlane.xlu0 %647
    %v649 = vsel %vm175, %v634, -inf
    %650 = vmax.xlane.f32.xlu0 %v649
    %v651 = vpop.xlane.xlu0 %650
    %v652 = vsel %vm188, %v637, -inf
    %653 = vmax.xlane.f32.xlu0 %v652
    %v654 = vpop.xlane.xlu0 %653
    %v655 = vsub.f32 %v627, %v642
    %v656 = vsub.f32 %v629, %v645
    %v657 = vsub.f32 %v632, %v648
    %v658 = vsub.f32 %v634, %v651
    %v659 = vsub.f32 %v637, %v654
    %v660 = vmul.f32 %v655, 1.442695
    %v661 = vpow.pop %v660
    %v662 = vmul.f32 %v656, 1.442695
    %v663 = vpow.pop %v662
    %v664 = vmul.f32 %v657, 1.442695
    %v665 = vpow.pop %v664
    %v666 = vmul.f32 %v658, 1.442695
    %v667 = vpow.pop %v666
    %v668 = vmul.f32 %v659, 1.442695
    %v669 = vpow.pop %v668
    %v670 = vsel %vm175, %v661, 0.0
    %671 = vadd.xlane.f32.xlu0 %v670
    %v672 = vpop.xlane.xlu0 %671
    %v673 = vsel %vm175, %v663, 0.0
    %674 = vadd.xlane.f32.xlu0 %v673
    %v675 = vpop.xlane.xlu0 %674
    %v676 = vsel %vm175, %v665, 0.0
    %677 = vadd.xlane.f32.xlu0 %v676
    %v678 = vpop.xlane.xlu0 %677
    %v679 = vsel %vm175, %v667, 0.0
    %680 = vadd.xlane.f32.xlu0 %v679
    %v681 = vpop.xlane.xlu0 %680
    %v682 = vsel %vm188, %v669, 0.0
    %683 = vadd.xlane.f32.xlu0 %v682
    %v684 = vpop.xlane.xlu0 %683
    %v685 = vrcp.pop %v672
    %v686 = vrcp.pop %v675
    %v687 = vrcp.pop %v678
    %v688 = vrcp.pop %v681
    %v689 = vrcp.pop %v684
    %v690 = vmul.f32 %v661, %v685
    %v691 = vmul.f32 %v663, %v686
    %v692 = vmul.f32 %v665, %v687
    %v693 = vmul.f32 %v667, %v688
    %v694 = vmul.f32 %v669, %v689
    %v695 = vpack.c.bf16 %v691, %v690
    %v696 = vpack.c.bf16 %v693, %v692
    %v697 = vpack.c.bf16 %v694, %v694
    %698 = vrot.lane.b32.xlu0 %v124, 40
    %v699 = vpop.permute.xlu0 %698
    %700 = vrot.lane.b32.xlu0 %v125, 40
    %v701 = vpop.permute.xlu0 %700
    %702 = vrot.lane.b32.xlu0 %v126, 40
    %v703 = vpop.permute.xlu0 %702
    %v707 = vsel %vm175, %v695, 0
    %v710 = vsel %vm175, %v696, 0
    %v713 = vsel %vm175, %v697, 0
    %v716 = vsel %vm252, %v703, 0
    %718 = vmatpush.bf16.msra.mxu0 0
    %719 = vmatpush.bf16.msra.mxu0 0
    %720 = vmatpush.bf16.msra.mxu0 0
    %721 = vmatpush.bf16.msra.mxu0 0
    %722 = vmatpush.bf16.msra.mxu0 0
    %723 = vmatpush.bf16.msra.mxu0 %v716
    %724 = vmatpush.bf16.msra.mxu0 %v701
    %725 = vmatpush.bf16.msra.mxu0 %v699
    %726 = vmatmul.bf16.gmra.mxu0 %v707
    %v727 = vpop.f32.mrf.mxu0
    %v728 = vadd.f32 0.0, %v727
    %v729 = vpop.f32.mrf.mxu0
    %v730 = vadd.f32 0.0, %v729
    %731 = vmatmul.bf16.gmra.mxu0 %v710
    %v732 = vpop.f32.mrf.mxu0
    %v733 = vadd.f32 0.0, %v732
    %v734 = vpop.f32.mrf.mxu0
    %v735 = vadd.f32 0.0, %v734
    %736 = vmatmul.bf16.gmra.mxu0 %v713
    %v737 = vpop.f32.mrf.mxu0
    %v738 = vadd.f32 0.0, %v737
    %v739 = vpop.f32.mrf.mxu0
    %740 = vdwg.mxu0
    %746 = vrot.lane.b32.xlu0 %v420, 8
    %v747 = vpop.permute.xlu0 %746
    %748 = vrot.lane.b32.xlu0 %v422, 8
    %v749 = vpop.permute.xlu0 %748
    %750 = vrot.lane.b32.xlu0 %v425, 8
    %v751 = vpop.permute.xlu0 %750
    %752 = vrot.lane.b32.xlu0 %v427, 8
    %v753 = vpop.permute.xlu0 %752
    %754 = vrot.lane.b32.xlu0 %v430, 8
    %v755 = vpop.permute.xlu0 %754
    %766 = vrot.lane.b32.xlu0 %v574, 16
    %v767 = vpop.permute.xlu0 %766
    %768 = vrot.lane.b32.xlu0 %v576, 16
    %v769 = vpop.permute.xlu0 %768
    %770 = vrot.lane.b32.xlu0 %v579, 16
    %v771 = vpop.permute.xlu0 %770
    %772 = vrot.lane.b32.xlu0 %v581, 16
    %v773 = vpop.permute.xlu0 %772
    %774 = vrot.lane.b32.xlu0 %v584, 16
    %v775 = vpop.permute.xlu0 %774
    %786 = vrot.lane.b32.xlu0 %v728, 24
    %v787 = vpop.permute.xlu0 %786
    %788 = vrot.lane.b32.xlu0 %v730, 24
    %v789 = vpop.permute.xlu0 %788
    %790 = vrot.lane.b32.xlu0 %v733, 24
    %v791 = vpop.permute.xlu0 %790
    %792 = vrot.lane.b32.xlu0 %v735, 24
    %v793 = vpop.permute.xlu0 %792
    %794 = vrot.lane.b32.xlu0 %v738, 24
    %v795 = vpop.permute.xlu0 %794
    %v801 = vsel %vm133, %v266, %v747
    %v802 = vsel %vm133, %v268, %v749
    %v803 = vsel %vm133, %v271, %v751
    %v804 = vsel %vm133, %v273, %v753
    %v805 = vsel %vm133, %v276, %v755
    %vm806 = vcmask 130048
    %v807 = vsel %vm806, %v801, %v767
    %v808 = vsel %vm806, %v802, %v769
    %v809 = vsel %vm806, %v803, %v771
    %v810 = vsel %vm806, %v804, %v773
    %v811 = vsel %vm806, %v805, %v775
    %vm812 = vcmask 195584
    %v813 = vsel %vm812, %v807, %v787
    %v814 = vsel %vm812, %v808, %v789
    %v815 = vsel %vm812, %v809, %v791
    %v816 = vsel %vm812, %v810, %v793
    %v817 = vsel %vm812, %v811, %v795
    %v818 = vpack.c.bf16 %v814, %v813
    %v819 = vpack.c.bf16 %v816, %v815
    %v820 = vpack.c.bf16 %v817, %v817
    %v821 = vld [vmem:[#allocation2 + $0x10] sm:$0xf]
    %v822 = vld [vmem:[#allocation2 + $0x14] sm:$0xf]
    %v823 = vld [vmem:[#allocation2 + $0x18] sm:$0xf]
    %v824 = vld [vmem:[#allocation2 + $0x1c] sm:$0xf]
    %v825 = vld [vmem:[#allocation4 + $0x28] sm:$0x1]
    %v826 = vperm.slane %v825, 0
    %v831 = vunpack.c.l.b16 %v821
    %v832 = vunpack.c.l.b16 %v822
    %v833 = vunpack.c.l.b16 %v823
    %v834 = vunpack.c.l.b16 %v824
    %v835 = vpack.c.b16 %v832, %v831
    %v836 = vpack.c.b16 %v834, %v833
    %v840 = vsel %vm76, %v818, 0
    %v843 = vsel %vm76, %v819, 0
    %v846 = vsel %vm76, %v820, 0
    %848 = vmatpush.bf16.msra.mxu0 0
    %849 = vmatpush.bf16.msra.mxu0 0
    %850 = vmatpush.bf16.msra.mxu0 0
    %851 = vmatpush.bf16.msra.mxu0 0
    %852 = vmatpush.bf16.msra.mxu0 0
    %853 = vmatpush.bf16.msra.mxu0 0
    %854 = vmatpush.bf16.msra.mxu0 %v836
    %855 = vmatpush.bf16.msra.mxu0 %v835
    %856 = vmatmul.bf16.gmra.mxu0 %v840
    %v857 = vpop.f32.mrf.mxu0
    %v858 = vadd.f32 %v826, %v857
    %v859 = vpop.f32.mrf.mxu0
    %v860 = vadd.f32 %v826, %v859
    %861 = vmatmul.bf16.gmra.mxu0 %v843
    %v862 = vpop.f32.mrf.mxu0
    %v863 = vadd.f32 %v826, %v862
    %v864 = vpop.f32.mrf.mxu0
    %v865 = vadd.f32 %v826, %v864
    %866 = vmatmul.bf16.gmra.mxu0 %v846
    %v867 = vpop.f32.mrf.mxu0
    %v868 = vadd.f32 %v826, %v867
    %v869 = vpop.f32.mrf.mxu0
    %870 = vdwg.mxu0
    %v871 = vadd.f32 %v47, %v858
    %v872 = vadd.f32 %v48, %v860
    %v873 = vadd.f32 %v49, %v863
    %v874 = vadd.f32 %v50, %v865
    %v875 = vadd.f32 %v51, %v868
    %v876 = vld [vmem:[#allocation4 + $0x40] sm:$0x3]
    %v877 = vsel %vm76, %v871, 0.0
    %878 = vadd.xlane.f32.xlu0 %v877
    %v879 = vpop.xlane.xlu0 %878
    %v880 = vsel %vm76, %v872, 0.0
    %881 = vadd.xlane.f32.xlu0 %v880
    %v882 = vpop.xlane.xlu0 %881
    %v883 = vsel %vm76, %v873, 0.0
    %884 = vadd.xlane.f32.xlu0 %v883
    %v885 = vpop.xlane.xlu0 %884
    %v886 = vsel %vm76, %v874, 0.0
    %887 = vadd.xlane.f32.xlu0 %v886
    %v888 = vpop.xlane.xlu0 %887
    %vm889 = vcmask 254976
    %v890 = vsel %vm889, %v875, 0.0
    %891 = vadd.xlane.f32.xlu0 %v890
    %v892 = vpop.xlane.xlu0 %891
    %v893 = vrcp.pop 32.0
    %v894 = vmul.f32 32.0, %v893
    %v895 = vsub.f32 1.0, %v894
    %v896 = vmul.f32 %v893, %v895
    %v897 = vadd.f32 %v893, %v896
    %vm898 = vweird.f32 %v893
    %v899 = vsel %vm898, %v893, %v897
    %v900 = vmul.f32 %v879, %v899
    %v901 = vmul.f32 %v882, %v899
    %v902 = vmul.f32 %v885, %v899
    %v903 = vmul.f32 %v888, %v899
    %v904 = vmul.f32 %v892, %v899
    %v905 = vsub.f32 %v871, %v900
    %v906 = vsub.f32 %v872, %v901
    %v907 = vsub.f32 %v873, %v902
    %v908 = vsub.f32 %v874, %v903
    %v909 = vsub.f32 %v875, %v904
    %v910 = vmul.f32 %v905, %v905
    %v911 = vmul.f32 %v906, %v906
    %v912 = vmul.f32 %v907, %v907
    %v913 = vmul.f32 %v908, %v908
    %v914 = vmul.f32 %v909, %v909
    %v915 = vsel %vm76, %v910, 0.0
    %916 = vadd.xlane.f32.xlu0 %v915
    %v917 = vpop.xlane.xlu0 %916
    %v918 = vsel %vm76, %v911, 0.0
    %919 = vadd.xlane.f32.xlu0 %v918
    %v920 = vpop.xlane.xlu0 %919
    %v921 = vsel %vm76, %v912, 0.0
    %922 = vadd.xlane.f32.xlu0 %v921
    %v923 = vpop.xlane.xlu0 %922
    %v924 = vsel %vm76, %v913, 0.0
    %925 = vadd.xlane.f32.xlu0 %v924
    %v926 = vpop.xlane.xlu0 %925
    %v927 = vsel %vm889, %v914, 0.0
    %928 = vadd.xlane.f32.xlu0 %v927
    %v929 = vpop.xlane.xlu0 %928
    %v930 = vmul.f32 %v917, %v899
    %v931 = vmul.f32 %v920, %v899
    %v932 = vmul.f32 %v923, %v899
    %v933 = vmul.f32 %v926, %v899
    %v934 = vmul.f32 %v929, %v899
    %v935 = vadd.f32 %v930, 1e-05
    %v936 = vadd.f32 %v931, 1e-05
    %v937 = vadd.f32 %v932, 1e-05
    %v938 = vadd.f32 %v933, 1e-05
    %v939 = vadd.f32 %v934, 1e-05
    %v940 = vrsqrt.pop %v935
    %v941 = vmul.f32 %v940, %v935
    %v942 = vmul.f32 %v941, %v940
    %v943 = vmul.f32 0.5, %v942
    %v944 = vsub.f32 1.5, %v943
    %v945 = vmul.f32 %v940, %v944
    %vm946 = vweird.f32 %v935
    %vm947 = vweird.f32 %v940
    %vm948 = vmor %vm946, %vm947
    %v949 = vsel %vm948, %v940, %v945
    %v950 = vrsqrt.pop %v936
    %v951 = vmul.f32 %v950, %v936
    %v952 = vmul.f32 %v951, %v950
    %v953 = vmul.f32 0.5, %v952
    %v954 = vsub.f32 1.5, %v953
    %v955 = vmul.f32 %v950, %v954
    %vm956 = vweird.f32 %v936
    %vm957 = vweird.f32 %v950
    %vm958 = vmor %vm956, %vm957
    %v959 = vsel %vm958, %v950, %v955
    %v960 = vrsqrt.pop %v937
    %v961 = vmul.f32 %v960, %v937
    %v962 = vmul.f32 %v961, %v960
    %v963 = vmul.f32 0.5, %v962
    %v964 = vsub.f32 1.5, %v963
    %v965 = vmul.f32 %v960, %v964
    %vm966 = vweird.f32 %v937
    %vm967 = vweird.f32 %v960
    %vm968 = vmor %vm966, %vm967
    %v969 = vsel %vm968, %v960, %v965
    %v970 = vrsqrt.pop %v938
    %v971 = vmul.f32 %v970, %v938
    %v972 = vmul.f32 %v971, %v970
    %v973 = vmul.f32 0.5, %v972
    %v974 = vsub.f32 1.5, %v973
    %v975 = vmul.f32 %v970, %v974
    %vm976 = vweird.f32 %v938
    %vm977 = vweird.f32 %v970
    %vm978 = vmor %vm976, %vm977
    %v979 = vsel %vm978, %v970, %v975
    %v980 = vrsqrt.pop %v939
    %v981 = vmul.f32 %v980, %v939
    %v982 = vmul.f32 %v981, %v980
    %v983 = vmul.f32 0.5, %v982
    %v984 = vsub.f32 1.5, %v983
    %v985 = vmul.f32 %v980, %v984
    %vm986 = vweird.f32 %v939
    %vm987 = vweird.f32 %v980
    %vm988 = vmor %vm986, %vm987
    %v989 = vsel %vm988, %v980, %v985
    %v990 = vmul.f32 %v905, %v949
    %v991 = vmul.f32 %v906, %v959
    %v992 = vmul.f32 %v907, %v969
    %v993 = vmul.f32 %v908, %v979
    %v994 = vmul.f32 %v909, %v989
    %v995 = vperm.slane %v876, 0
    %v996 = vmul.f32 %v990, %v995
    %v997 = vmul.f32 %v991, %v995
    %v998 = vmul.f32 %v992, %v995
    %v999 = vmul.f32 %v993, %v995
    %v1000 = vmul.f32 %v994, %v995
    %v1001 = vperm.slane %v876, 1
    %v1002 = vadd.f32 %v996, %v1001
    %v1003 = vadd.f32 %v997, %v1001
    %v1004 = vadd.f32 %v998, %v1001
    %v1005 = vadd.f32 %v999, %v1001
    %v1006 = vadd.f32 %v1000, %v1001
    %v1007 = vpack.c.bf16 %v1003, %v1002
    %v1008 = vpack.c.bf16 %v1005, %v1004
    %v1009 = vpack.c.bf16 %v1006, %v1006
    %v1010 = vld [vmem:[#allocation2 + $0x20] sm:$0xf]
    %v1011 = vld [vmem:[#allocation2 + $0x24] sm:$0xf]
    %v1012 = vld [vmem:[#allocation2 + $0x28] sm:$0xf]
    %v1013 = vld [vmem:[#allocation2 + $0x2c] sm:$0xf]
    %v1014 = vld [vmem:[#allocation4 + $0x30] sm:$0x1]
    %v1015 = vperm.slane %v1014, 0
    %v1020 = vunpack.c.l.b16 %v1010
    %v1021 = vunpack.c.l.b16 %v1011
    %v1022 = vunpack.c.l.b16 %v1012
    %v1023 = vunpack.c.l.b16 %v1013
    %v1024 = vpack.c.b16 %v1021, %v1020
    %v1025 = vpack.c.b16 %v1023, %v1022
    %v1029 = vsel %vm76, %v1007, 0
    %v1032 = vsel %vm76, %v1008, 0
    %v1035 = vsel %vm76, %v1009, 0
    %1037 = vmatpush.bf16.msra.mxu0 0
    %1038 = vmatpush.bf16.msra.mxu0 0
    %1039 = vmatpush.bf16.msra.mxu0 0
    %1040 = vmatpush.bf16.msra.mxu0 0
    %1041 = vmatpush.bf16.msra.mxu0 0
    %1042 = vmatpush.bf16.msra.mxu0 0
    %1043 = vmatpush.bf16.msra.mxu0 %v1025
    %1044 = vmatpush.bf16.msra.mxu0 %v1024
    %1045 = vmatmul.bf16.gmra.mxu0 %v1029
    %v1046 = vpop.f32.mrf.mxu0
    %v1047 = vadd.f32 %v1015, %v1046
    %v1048 = vpop.f32.mrf.mxu0
    %v1049 = vadd.f32 %v1015, %v1048
    %1050 = vmatmul.bf16.gmra.mxu0 %v1032
    %v1051 = vpop.f32.mrf.mxu0
    %v1052 = vadd.f32 %v1015, %v1051
    %v1053 = vpop.f32.mrf.mxu0
    %v1054 = vadd.f32 %v1015, %v1053
    %1055 = vmatmul.bf16.gmra.mxu0 %v1035
    %v1056 = vpop.f32.mrf.mxu0
    %v1057 = vadd.f32 %v1015, %v1056
    %v1058 = vpop.f32.mrf.mxu0
    %1059 = vdwg.mxu0
    %v1060 = vmax.f32 %v1047, 0.0
    %v1061 = vmax.f32 %v1049, 0.0
    %v1062 = vmax.f32 %v1052, 0.0
    %v1063 = vmax.f32 %v1054, 0.0
    %v1064 = vmax.f32 %v1057, 0.0
    %v1065 = vpack.c.bf16 %v1061, %v1060
    %v1066 = vpack.c.bf16 %v1063, %v1062
    %v1067 = vpack.c.bf16 %v1064, %v1064
    %v1068 = vld [vmem:[#allocation2 + $0x30] sm:$0xf]
    %v1069 = vld [vmem:[#allocation2 + $0x34] sm:$0xf]
    %v1070 = vld [vmem:[#allocation2 + $0x38] sm:$0xf]
    %v1071 = vld [vmem:[#allocation2 + $0x3c] sm:$0xf]
    %v1072 = vld [vmem:[#allocation2 + $0x40] sm:$0xf]
    %v1073 = vld [vmem:[#allocation2 + $0x44] sm:$0xf]
    %v1074 = vld [vmem:[#allocation2 + $0x48] sm:$0xf]
    %v1075 = vld [vmem:[#allocation2 + $0x4c] sm:$0xf]
    %v1076 = vld [vmem:[#allocation4 + $0x38] sm:$0x1]
    %v1077 = vperm.slane %v1076, 0
    %v1086 = vunpack.c.l.b16 %v1068
    %v1087 = vunpack.c.l.b16 %v1069
    %v1088 = vunpack.c.l.b16 %v1070
    %v1089 = vunpack.c.l.b16 %v1071
    %v1090 = vunpack.c.l.b16 %v1072
    %v1091 = vunpack.c.l.b16 %v1073
    %v1092 = vunpack.c.l.b16 %v1074
    %v1093 = vunpack.c.l.b16 %v1075
    %v1094 = vpack.c.b16 %v1087, %v1086
    %v1095 = vpack.c.b16 %v1089, %v1088
    %v1096 = vpack.c.b16 %v1091, %v1090
    %v1097 = vpack.c.b16 %v1093, %v1092
    %vm1102 = vcmask 523264
    %v1104 = vsel %vm1102, %v1065, 0
    %v1107 = vsel %vm1102, %v1066, 0
    %v1110 = vsel %vm1102, %v1067, 0
    %1112 = vmatpush.bf16.msra.mxu0 0
    %1113 = vmatpush.bf16.msra.mxu0 0
    %1114 = vmatpush.bf16.msra.mxu0 0
    %1115 = vmatpush.bf16.msra.mxu0 0
    %1116 = vmatpush.bf16.msra.mxu0 %v1097
    %1117 = vmatpush.bf16.msra.mxu0 %v1096
    %1118 = vmatpush.bf16.msra.mxu0 %v1095
    %1119 = vmatpush.bf16.msra.mxu0 %v1094
    %1120 = vmatmul.bf16.gmra.mxu0 %v1104
    %v1121 = vpop.f32.mrf.mxu0
    %v1122 = vadd.f32 %v1077, %v1121
    %v1123 = vpop.f32.mrf.mxu0
    %v1124 = vadd.f32 %v1077, %v1123
    %1125 = vmatmul.bf16.gmra.mxu0 %v1107
    %v1126 = vpop.f32.mrf.mxu0
    %v1127 = vadd.f32 %v1077, %v1126
    %v1128 = vpop.f32.mrf.mxu0
    %v1129 = vadd.f32 %v1077, %v1128
    %1130 = vmatmul.bf16.gmra.mxu0 %v1110
    %v1131 = vpop.f32.mrf.mxu0
    %v1132 = vadd.f32 %v1077, %v1131
    %v1133 = vpop.f32.mrf.mxu0
    %1134 = vdwg.mxu0
    %v1135 = vadd.f32 %v1002, %v1122
    %v1136 = vadd.f32 %v1003, %v1124
    %v1137 = vadd.f32 %v1004, %v1127
    %v1138 = vadd.f32 %v1005, %v1129
    %v1139 = vadd.f32 %v1006, %v1132
    %v1140 = vld [vmem:[#allocation4 + $0x48] sm:$0x3]
    %v1141 = vsel %vm76, %v1135, 0.0
    %1142 = vadd.xlane.f32.xlu0 %v1141
    %v1143 = vpop.xlane.xlu0 %1142
    %v1144 = vsel %vm76, %v1136, 0.0
    %1145 = vadd.xlane.f32.xlu0 %v1144
    %v1146 = vpop.xlane.xlu0 %1145
    %v1147 = vsel %vm76, %v1137, 0.0
    %1148 = vadd.xlane.f32.xlu0 %v1147
    %v1149 = vpop.xlane.xlu0 %1148
    %v1150 = vsel %vm76, %v1138, 0.0
    %1151 = vadd.xlane.f32.xlu0 %v1150
    %v1152 = vpop.xlane.xlu0 %1151
    %v1153 = vsel %vm889, %v1139, 0.0
    %1154 = vadd.xlane.f32.xlu0 %v1153
    %v1155 = vpop.xlane.xlu0 %1154
    %v1156 = vmul.f32 %v1143, %v899
    %v1157 = vmul.f32 %v1146, %v899
    %v1158 = vmul.f32 %v1149, %v899
    %v1159 = vmul.f32 %v1152, %v899
    %v1160 = vmul.f32 %v1155, %v899
    %v1161 = vsub.f32 %v1135, %v1156
    %v1162 = vsub.f32 %v1136, %v1157
    %v1163 = vsub.f32 %v1137, %v1158
    %v1164 = vsub.f32 %v1138, %v1159
    %v1165 = vsub.f32 %v1139, %v1160
    %v1166 = vmul.f32 %v1161, %v1161
    %v1167 = vmul.f32 %v1162, %v1162
    %v1168 = vmul.f32 %v1163, %v1163
    %v1169 = vmul.f32 %v1164, %v1164
    %v1170 = vmul.f32 %v1165, %v1165
    %v1171 = vsel %vm76, %v1166, 0.0
    %1172 = vadd.xlane.f32.xlu0 %v1171
    %v1173 = vpop.xlane.xlu0 %1172
    %v1174 = vsel %vm76, %v1167, 0.0
    %1175 = vadd.xlane.f32.xlu0 %v1174
    %v1176 = vpop.xlane.xlu0 %1175
    %v1177 = vsel %vm76, %v1168, 0.0
    %1178 = vadd.xlane.f32.xlu0 %v1177
    %v1179 = vpop.xlane.xlu0 %1178
    %v1180 = vsel %vm76, %v1169, 0.0
    %1181 = vadd.xlane.f32.xlu0 %v1180
    %v1182 = vpop.xlane.xlu0 %1181
    %v1183 = vsel %vm889, %v1170, 0.0
    %1184 = vadd.xlane.f32.xlu0 %v1183
    %v1185 = vpop.xlane.xlu0 %1184
    %v1186 = vmul.f32 %v1173, %v899
    %v1187 = vmul.f32 %v1176, %v899
    %v1188 = vmul.f32 %v1179, %v899
    %v1189 = vmul.f32 %v1182, %v899
    %v1190 = vmul.f32 %v1185, %v899
    %v1191 = vadd.f32 %v1186, 1e-05
    %v1192 = vadd.f32 %v1187, 1e-05
    %v1193 = vadd.f32 %v1188, 1e-05
    %v1194 = vadd.f32 %v1189, 1e-05
    %v1195 = vadd.f32 %v1190, 1e-05
    %v1196 = vrsqrt.pop %v1191
    %v1197 = vmul.f32 %v1196, %v1191
    %v1198 = vmul.f32 %v1197, %v1196
    %v1199 = vmul.f32 0.5, %v1198
    %v1200 = vsub.f32 1.5, %v1199
    %v1201 = vmul.f32 %v1196, %v1200
    %vm1202 = vweird.f32 %v1191
    %vm1203 = vweird.f32 %v1196
    %vm1204 = vmor %vm1202, %vm1203
    %v1205 = vsel %vm1204, %v1196, %v1201
    %v1206 = vrsqrt.pop %v1192
    %v1207 = vmul.f32 %v1206, %v1192
    %v1208 = vmul.f32 %v1207, %v1206
    %v1209 = vmul.f32 0.5, %v1208
    %v1210 = vsub.f32 1.5, %v1209
    %v1211 = vmul.f32 %v1206, %v1210
    %vm1212 = vweird.f32 %v1192
    %vm1213 = vweird.f32 %v1206
    %vm1214 = vmor %vm1212, %vm1213
    %v1215 = vsel %vm1214, %v1206, %v1211
    %v1216 = vrsqrt.pop %v1193
    %v1217 = vmul.f32 %v1216, %v1193
    %v1218 = vmul.f32 %v1217, %v1216
    %v1219 = vmul.f32 0.5, %v1218
    %v1220 = vsub.f32 1.5, %v1219
    %v1221 = vmul.f32 %v1216, %v1220
    %vm1222 = vweird.f32 %v1193
    %vm1223 = vweird.f32 %v1216
    %vm1224 = vmor %vm1222, %vm1223
    %v1225 = vsel %vm1224, %v1216, %v1221
    %v1226 = vrsqrt.pop %v1194
    %v1227 = vmul.f32 %v1226, %v1194
    %v1228 = vmul.f32 %v1227, %v1226
    %v1229 = vmul.f32 0.5, %v1228
    %v1230 = vsub.f32 1.5, %v1229
    %v1231 = vmul.f32 %v1226, %v1230
    %vm1232 = vweird.f32 %v1194
    %vm1233 = vweird.f32 %v1226
    %vm1234 = vmor %vm1232, %vm1233
    %v1235 = vsel %vm1234, %v1226, %v1231
    %v1236 = vrsqrt.pop %v1195
    %v1237 = vmul.f32 %v1236, %v1195
    %v1238 = vmul.f32 %v1237, %v1236
    %v1239 = vmul.f32 0.5, %v1238
    %v1240 = vsub.f32 1.5, %v1239
    %v1241 = vmul.f32 %v1236, %v1240
    %vm1242 = vweird.f32 %v1195
    %vm1243 = vweird.f32 %v1236
    %vm1244 = vmor %vm1242, %vm1243
    %v1245 = vsel %vm1244, %v1236, %v1241
    %v1246 = vmul.f32 %v1161, %v1205
    %v1247 = vmul.f32 %v1162, %v1215
    %v1248 = vmul.f32 %v1163, %v1225
    %v1249 = vmul.f32 %v1164, %v1235
    %v1250 = vmul.f32 %v1165, %v1245
    %v1251 = vperm.slane %v1140, 0
    %v1252 = vmul.f32 %v1246, %v1251
    %v1253 = vmul.f32 %v1247, %v1251
    %v1254 = vmul.f32 %v1248, %v1251
    %v1255 = vmul.f32 %v1249, %v1251
    %v1256 = vmul.f32 %v1250, %v1251
    %v1257 = vperm.slane %v1140, 1
    %v1258 = vadd.f32 %v1252, %v1257
    %v1259 = vadd.f32 %v1253, %v1257
    %v1260 = vadd.f32 %v1254, %v1257
    %v1261 = vadd.f32 %v1255, %v1257
    %v1262 = vadd.f32 %v1256, %v1257
    %v1263 = vpack.c.bf16 %v1259, %v1258
    %v1264 = vpack.c.bf16 %v1261, %v1260
    %v1265 = vpack.c.bf16 %v1262, %v1262
    %v1266 = vld [vmem:[#allocation2 + $0x50] sm:$0xf]
    %v1267 = vld [vmem:[#allocation2 + $0x54] sm:$0xf]
    %v1268 = vld [vmem:[#allocation2 + $0x58] sm:$0xf]
    %v1269 = vld [vmem:[#allocation2 + $0x5c] sm:$0xf]
    %v1270 = vld [vmem:[#allocation4 + $0x50] sm:$0xff]
    %v1271 = vld [vmem:[#allocation4 + $0x58] sm:$0xff]
    %v1272 = vld [vmem:[#allocation4 + $0x60] sm:$0xff]
    %v1273 = vld [vmem:[#allocation4 + $0x68] sm:$0xff]
    %v1274 = vld [vmem:[#allocation4 + $0x70] sm:$0x3]
    %v1279 = vunpack.c.l.b16 %v1266
    %v1280 = vunpack.c.l.b16 %v1267
    %v1281 = vunpack.c.l.b16 %v1268
    %v1282 = vunpack.c.l.b16 %v1269
    %v1283 = vpack.c.b16 %v1280, %v1279
    %v1284 = vpack.c.b16 %v1282, %v1281
    %v1288 = vsel %vm76, %v1263, 0
    %v1291 = vsel %vm76, %v1264, 0
    %v1294 = vsel %vm76, %v1265, 0
    %1296 = vmatpush.bf16.msra.mxu0 0
    %1297 = vmatpush.bf16.msra.mxu0 0
    %1298 = vmatpush.bf16.msra.mxu0 0
    %1299 = vmatpush.bf16.msra.mxu0 0
    %1300 = vmatpush.bf16.msra.mxu0 0
    %1301 = vmatpush.bf16.msra.mxu0 0
    %1302 = vmatpush.bf16.msra.mxu0 %v1284
    %1303 = vmatpush.bf16.msra.mxu0 %v1283
    %1304 = vmatmul.bf16.gmra.mxu0 %v1288
    %v1305 = vpop.f32.mrf.mxu0
    %v1306 = vadd.f32 %v1270, %v1305
    %v1307 = vpop.f32.mrf.mxu0
    %v1308 = vadd.f32 %v1271, %v1307
    %1309 = vmatmul.bf16.gmra.mxu0 %v1291
    %v1310 = vpop.f32.mrf.mxu0
    %v1311 = vadd.f32 %v1272, %v1310
    %v1312 = vpop.f32.mrf.mxu0
    %v1313 = vadd.f32 %v1273, %v1312
    %1314 = vmatmul.bf16.gmra.mxu0 %v1294
    %v1315 = vpop.f32.mrf.mxu0
    %v1316 = vadd.f32 %v1274, %v1315
    %v1317 = vpop.f32.mrf.mxu0
    %1318 = vdwg.mxu0
    %v1319 = vpack.c.bf16 %v1306, %v1306
    %v1320 = vpack.c.bf16 %v1308, %v1308
    %v1321 = vpack.c.bf16 %v1311, %v1311
    %v1322 = vpack.c.bf16 %v1313, %v1313
    %v1323 = vpack.c.bf16 %v1316, %v1316
    %v1329 = vunpack.c.l.b16 %v1319
    %v1330 = vunpack.c.l.b16 %v1320
    %v1331 = vunpack.c.l.b16 %v1321
    %v1332 = vunpack.c.l.b16 %v1322
    %v1333 = vunpack.c.l.b16 %v1323
    %v1334 = vpack.c.b16 %v1330, %v1329
    %v1335 = vpack.c.b16 %v1332, %v1331
    %v1336 = vpack.c.b16 %v1333, %v1333
    %1337 = vrot.lane.b32.xlu0 %v1334, 96
    %v1338 = vpop.permute.xlu0 %1337
    %1339 = vrot.lane.b32.xlu0 %v1335, 96
    %v1340 = vpop.permute.xlu0 %1339
    %1341 = vrot.lane.b32.xlu0 %v1336, 96
    %v1342 = vpop.permute.xlu0 %1341
    %v1344 = vsel %vm133, %v1334, 0
    %v1347 = vsel %vm133, %v1335, 0
    %v1350 = vsel %vm133, %v1336, 0
    %v1353 = vsel %vm133, %v1338, 0
    %v1356 = vsel %vm133, %v1340, 0
    %v1359 = vsel %vm133, %v1342, 0
    %1361 = vmatpush.bf16.xpose.msra.mxu0 0
    %1362 = vmatpush.bf16.xpose.msra.mxu0 0
    %1363 = vmatpush.bf16.xpose.msra.mxu0 0
    %1364 = vmatpush.bf16.xpose.msra.mxu0 0
    %1365 = vmatpush.bf16.xpose.msra.mxu0 0
    %1366 = vmatpush.bf16.xpose.msra.mxu0 %v1359
    %1367 = vmatpush.bf16.xpose.msra.mxu0 %v1356
    %1368 = vmatpush.bf16.xpose.msra.mxu0 %v1353
    %1369 = vmatmul.bf16.gmra.mxu0 %v1344
    %v1370 = vpop.f32.mrf.mxu0
    %v1371 = vadd.f32 0.0, %v1370
    %v1372 = vpop.f32.mrf.mxu0
    %v1373 = vadd.f32 0.0, %v1372
    %1374 = vmatmul.bf16.gmra.mxu0 %v1347
    %v1375 = vpop.f32.mrf.mxu0
    %v1376 = vadd.f32 0.0, %v1375
    %v1377 = vpop.f32.mrf.mxu0
    %v1378 = vadd.f32 0.0, %v1377
    %1379 = vmatmul.bf16.gmra.mxu0 %v1350
    %v1380 = vpop.f32.mrf.mxu0
    %v1381 = vadd.f32 0.0, %v1380
    %v1382 = vpop.f32.mrf.mxu0
    %1383 = vdwg.mxu0
    %v1384 = vsel %vm175, %v1371, -inf
    %1385 = vmax.xlane.f32.xlu0 %v1384
    %v1386 = vpop.xlane.xlu0 %1385
    %v1387 = vsel %vm175, %v1373, -inf
    %1388 = vmax.xlane.f32.xlu0 %v1387
    %v1389 = vpop.xlane.xlu0 %1388
    %v1390 = vsel %vm175, %v1376, -inf
    %1391 = vmax.xlane.f32.xlu0 %v1390
    %v1392 = vpop.xlane.xlu0 %1391
    %v1393 = vsel %vm175, %v1378, -inf
    %1394 = vmax.xlane.f32.xlu0 %v1393
    %v1395 = vpop.xlane.xlu0 %1394
    %v1396 = vsel %vm188, %v1381, -inf
    %1397 = vmax.xlane.f32.xlu0 %v1396
    %v1398 = vpop.xlane.xlu0 %1397
    %v1399 = vsub.f32 %v1371, %v1386
    %v1400 = vsub.f32 %v1373, %v1389
    %v1401 = vsub.f32 %v1376, %v1392
    %v1402 = vsub.f32 %v1378, %v1395
    %v1403 = vsub.f32 %v1381, %v1398
    %v1404 = vmul.f32 %v1399, 1.442695
    %v1405 = vpow.pop %v1404
    %v1406 = vmul.f32 %v1400, 1.442695
    %v1407 = vpow.pop %v1406
    %v1408 = vmul.f32 %v1401, 1.442695
    %v1409 = vpow.pop %v1408
    %v1410 = vmul.f32 %v1402, 1.442695
    %v1411 = vpow.pop %v1410
    %v1412 = vmul.f32 %v1403, 1.442695
    %v1413 = vpow.pop %v1412
    %v1414 = vsel %vm175, %v1405, 0.0
    %1415 = vadd.xlane.f32.xlu0 %v1414
    %v1416 = vpop.xlane.xlu0 %1415
    %v1417 = vsel %vm175, %v1407, 0.0
    %1418 = vadd.xlane.f32.xlu0 %v1417
    %v1419 = vpop.xlane.xlu0 %1418
    %v1420 = vsel %vm175, %v1409, 0.0
    %1421 = vadd.xlane.f32.xlu0 %v1420
    %v1422 = vpop.xlane.xlu0 %1421
    %v1423 = vsel %vm175, %v1411, 0.0
    %1424 = vadd.xlane.f32.xlu0 %v1423
    %v1425 = vpop.xlane.xlu0 %1424
    %v1426 = vsel %vm188, %v1413, 0.0
    %1427 = vadd.xlane.f32.xlu0 %v1426
    %v1428 = vpop.xlane.xlu0 %1427
    %v1429 = vrcp.pop %v1416
    %v1430 = vrcp.pop %v1419
    %v1431 = vrcp.pop %v1422
    %v1432 = vrcp.pop %v1425
    %v1433 = vrcp.pop %v1428
    %v1434 = vmul.f32 %v1405, %v1429
    %v1435 = vmul.f32 %v1407, %v1430
    %v1436 = vmul.f32 %v1409, %v1431
    %v1437 = vmul.f32 %v1411, %v1432
    %v1438 = vmul.f32 %v1413, %v1433
    %v1439 = vpack.c.bf16 %v1435, %v1434
    %v1440 = vpack.c.bf16 %v1437, %v1436
    %v1441 = vpack.c.bf16 %v1438, %v1438
    %1442 = vrot.lane.b32.xlu0 %v1334, 64
    %v1443 = vpop.permute.xlu0 %1442
    %1444 = vrot.lane.b32.xlu0 %v1335, 64
    %v1445 = vpop.permute.xlu0 %1444
    %1446 = vrot.lane.b32.xlu0 %v1336, 64
    %v1447 = vpop.permute.xlu0 %1446
    %v1451 = vsel %vm175, %v1439, 0
    %v1454 = vsel %vm175, %v1440, 0
    %v1457 = vsel %vm175, %v1441, 0
    %v1460 = vsel %vm252, %v1447, 0
    %1462 = vmatpush.bf16.msra.mxu0 0
    %1463 = vmatpush.bf16.msra.mxu0 0
    %1464 = vmatpush.bf16.msra.mxu0 0
    %1465 = vmatpush.bf16.msra.mxu0 0
    %1466 = vmatpush.bf16.msra.mxu0 0
    %1467 = vmatpush.bf16.msra.mxu0 %v1460
    %1468 = vmatpush.bf16.msra.mxu0 %v1445
    %1469 = vmatpush.bf16.msra.mxu0 %v1443
    %1470 = vmatmul.bf16.gmra.mxu0 %v1451
    %v1471 = vpop.f32.mrf.mxu0
    %v1472 = vadd.f32 0.0, %v1471
    %v1473 = vpop.f32.mrf.mxu0
    %v1474 = vadd.f32 0.0, %v1473
    %1475 = vmatmul.bf16.gmra.mxu0 %v1454
    %v1476 = vpop.f32.mrf.mxu0
    %v1477 = vadd.f32 0.0, %v1476
    %v1478 = vpop.f32.mrf.mxu0
    %v1479 = vadd.f32 0.0, %v1478
    %1480 = vmatmul.bf16.gmra.mxu0 %v1457
    %v1481 = vpop.f32.mrf.mxu0
    %v1482 = vadd.f32 0.0, %v1481
    %v1483 = vpop.f32.mrf.mxu0
    %1484 = vdwg.mxu0
    %1485 = vrot.lane.b32.xlu0 %v1334, 120
    %v1486 = vpop.permute.xlu0 %1485
    %1487 = vrot.lane.b32.xlu0 %v1335, 120
    %v1488 = vpop.permute.xlu0 %1487
    %1489 = vrot.lane.b32.xlu0 %v1336, 120
    %v1490 = vpop.permute.xlu0 %1489
    %1491 = vrot.lane.b32.xlu0 %v1334, 88
    %v1492 = vpop.permute.xlu0 %1491
    %1493 = vrot.lane.b32.xlu0 %v1335, 88
    %v1494 = vpop.permute.xlu0 %1493
    %1495 = vrot.lane.b32.xlu0 %v1336, 88
    %v1496 = vpop.permute.xlu0 %1495
    %v1498 = vsel %vm133, %v1486, 0
    %v1501 = vsel %vm133, %v1488, 0
    %v1504 = vsel %vm133, %v1490, 0
    %v1507 = vsel %vm133, %v1492, 0
    %v1510 = vsel %vm133, %v1494, 0
    %v1513 = vsel %vm133, %v1496, 0
    %1515 = vmatpush.bf16.xpose.msra.mxu0 0
    %1516 = vmatpush.bf16.xpose.msra.mxu0 0
    %1517 = vmatpush.bf16.xpose.msra.mxu0 0
    %1518 = vmatpush.bf16.xpose.msra.mxu0 0
    %1519 = vmatpush.bf16.xpose.msra.mxu0 0
    %1520 = vmatpush.bf16.xpose.msra.mxu0 %v1513
    %1521 = vmatpush.bf16.xpose.msra.mxu0 %v1510
    %1522 = vmatpush.bf16.xpose.msra.mxu0 %v1507
    %1523 = vmatmul.bf16.gmra.mxu0 %v1498
    %v1524 = vpop.f32.mrf.mxu0
    %v1525 = vadd.f32 0.0, %v1524
    %v1526 = vpop.f32.mrf.mxu0
    %v1527 = vadd.f32 0.0, %v1526
    %1528 = vmatmul.bf16.gmra.mxu0 %v1501
    %v1529 = vpop.f32.mrf.mxu0
    %v1530 = vadd.f32 0.0, %v1529
    %v1531 = vpop.f32.mrf.mxu0
    %v1532 = vadd.f32 0.0, %v1531
    %1533 = vmatmul.bf16.gmra.mxu0 %v1504
    %v1534 = vpop.f32.mrf.mxu0
    %v1535 = vadd.f32 0.0, %v1534
    %v1536 = vpop.f32.mrf.mxu0
    %1537 = vdwg.mxu0
    %v1538 = vsel %vm175, %v1525, -inf
    %1539 = vmax.xlane.f32.xlu0 %v1538
    %v1540 = vpop.xlane.xlu0 %1539
    %v1541 = vsel %vm175, %v1527, -inf
    %1542 = vmax.xlane.f32.xlu0 %v1541
    %v1543 = vpop.xlane.xlu0 %1542
    %v1544 = vsel %vm175, %v1530, -inf
    %1545 = vmax.xlane.f32.xlu0 %v1544
    %v1546 = vpop.xlane.xlu0 %1545
    %v1547 = vsel %vm175, %v1532, -inf
    %1548 = vmax.xlane.f32.xlu0 %v1547
    %v1549 = vpop.xlane.xlu0 %1548
    %v1550 = vsel %vm188, %v1535, -inf
    %1551 = vmax.xlane.f32.xlu0 %v1550
    %v1552 = vpop.xlane.xlu0 %1551
    %v1553 = vsub.f32 %v1525, %v1540
    %v1554 = vsub.f32 %v1527, %v1543
    %v1555 = vsub.f32 %v1530, %v1546
    %v1556 = vsub.f32 %v1532, %v1549
    %v1557 = vsub.f32 %v1535, %v1552
    %v1558 = vmul.f32 %v1553, 1.442695
    %v1559 = vpow.pop %v1558
    %v1560 = vmul.f32 %v1554, 1.442695
    %v1561 = vpow.pop %v1560
    %v1562 = vmul.f32 %v1555, 1.442695
    %v1563 = vpow.pop %v1562
    %v1564 = vmul.f32 %v1556, 1.442695
    %v1565 = vpow.pop %v1564
    %v1566 = vmul.f32 %v1557, 1.442695
    %v1567 = vpow.pop %v1566
    %v1568 = vsel %vm175, %v1559, 0.0
    %1569 = vadd.xlane.f32.xlu0 %v1568
    %v1570 = vpop.xlane.xlu0 %1569
    %v1571 = vsel %vm175, %v1561, 0.0
    %1572 = vadd.xlane.f32.xlu0 %v1571
    %v1573 = vpop.xlane.xlu0 %1572
    %v1574 = vsel %vm175, %v1563, 0.0
    %1575 = vadd.xlane.f32.xlu0 %v1574
    %v1576 = vpop.xlane.xlu0 %1575
    %v1577 = vsel %vm175, %v1565, 0.0
    %1578 = vadd.xlane.f32.xlu0 %v1577
    %v1579 = vpop.xlane.xlu0 %1578
    %v1580 = vsel %vm188, %v1567, 0.0
    %1581 = vadd.xlane.f32.xlu0 %v1580
    %v1582 = vpop.xlane.xlu0 %1581
    %v1583 = vrcp.pop %v1570
    %v1584 = vrcp.pop %v1573
    %v1585 = vrcp.pop %v1576
    %v1586 = vrcp.pop %v1579
    %v1587 = vrcp.pop %v1582
    %v1588 = vmul.f32 %v1559, %v1583
    %v1589 = vmul.f32 %v1561, %v1584
    %v1590 = vmul.f32 %v1563, %v1585
    %v1591 = vmul.f32 %v1565, %v1586
    %v1592 = vmul.f32 %v1567, %v1587
    %v1593 = vpack.c.bf16 %v1589, %v1588
    %v1594 = vpack.c.bf16 %v1591, %v1590
    %v1595 = vpack.c.bf16 %v1592, %v1592
    %1596 = vrot.lane.b32.xlu0 %v1334, 56
    %v1597 = vpop.permute.xlu0 %1596
    %1598 = vrot.lane.b32.xlu0 %v1335, 56
    %v1599 = vpop.permute.xlu0 %1598
    %1600 = vrot.lane.b32.xlu0 %v1336, 56
    %v1601 = vpop.permute.xlu0 %1600
    %v1605 = vsel %vm175, %v1593, 0
    %v1608 = vsel %vm175, %v1594, 0
    %v1611 = vsel %vm175, %v1595, 0
    %v1614 = vsel %vm252, %v1601, 0
    %1616 = vmatpush.bf16.msra.mxu0 0
    %1617 = vmatpush.bf16.msra.mxu0 0
    %1618 = vmatpush.bf16.msra.mxu0 0
    %1619 = vmatpush.bf16.msra.mxu0 0
    %1620 = vmatpush.bf16.msra.mxu0 0
    %1621 = vmatpush.bf16.msra.mxu0 %v1614
    %1622 = vmatpush.bf16.msra.mxu0 %v1599
    %1623 = vmatpush.bf16.msra.mxu0 %v1597
    %1624 = vmatmul.bf16.gmra.mxu0 %v1605
    %v1625 = vpop.f32.mrf.mxu0
    %v1626 = vadd.f32 0.0, %v1625
    %v1627 = vpop.f32.mrf.mxu0
    %v1628 = vadd.f32 0.0, %v1627
    %1629 = vmatmul.bf16.gmra.mxu0 %v1608
    %v1630 = vpop.f32.mrf.mxu0
    %v1631 = vadd.f32 0.0, %v1630
    %v1632 = vpop.f32.mrf.mxu0
    %v1633 = vadd.f32 0.0, %v1632
    %1634 = vmatmul.bf16.gmra.mxu0 %v1611
    %v1635 = vpop.f32.mrf.mxu0
    %v1636 = vadd.f32 0.0, %v1635
    %v1637 = vpop.f32.mrf.mxu0
    %1638 = vdwg.mxu0
    %1639 = vrot.lane.b32.xlu0 %v1334, 112
    %v1640 = vpop.permute.xlu0 %1639
    %1641 = vrot.lane.b32.xlu0 %v1335, 112
    %v1642 = vpop.permute.xlu0 %1641
    %1643 = vrot.lane.b32.xlu0 %v1336, 112
    %v1644 = vpop.permute.xlu0 %1643
    %1645 = vrot.lane.b32.xlu0 %v1334, 80
    %v1646 = vpop.permute.xlu0 %1645
    %1647 = vrot.lane.b32.xlu0 %v1335, 80
    %v1648 = vpop.permute.xlu0 %1647
    %1649 = vrot.lane.b32.xlu0 %v1336, 80
    %v1650 = vpop.permute.xlu0 %1649
    %v1652 = vsel %vm133, %v1640, 0
    %v1655 = vsel %vm133, %v1642, 0
    %v1658 = vsel %vm133, %v1644, 0
    %v1661 = vsel %vm133, %v1646, 0
    %v1664 = vsel %vm133, %v1648, 0
    %v1667 = vsel %vm133, %v1650, 0
    %1669 = vmatpush.bf16.xpose.msra.mxu0 0
    %1670 = vmatpush.bf16.xpose.msra.mxu0 0
    %1671 = vmatpush.bf16.xpose.msra.mxu0 0
    %1672 = vmatpush.bf16.xpose.msra.mxu0 0
    %1673 = vmatpush.bf16.xpose.msra.mxu0 0
    %1674 = vmatpush.bf16.xpose.msra.mxu0 %v1667
    %1675 = vmatpush.bf16.xpose.msra.mxu0 %v1664
    %1676 = vmatpush.bf16.xpose.msra.mxu0 %v1661
    %1677 = vmatmul.bf16.gmra.mxu0 %v1652
    %v1678 = vpop.f32.mrf.mxu0
    %v1679 = vadd.f32 0.0, %v1678
    %v1680 = vpop.f32.mrf.mxu0
    %v1681 = vadd.f32 0.0, %v1680
    %1682 = vmatmul.bf16.gmra.mxu0 %v1655
    %v1683 = vpop.f32.mrf.mxu0
    %v1684 = vadd.f32 0.0, %v1683
    %v1685 = vpop.f32.mrf.mxu0
    %v1686 = vadd.f32 0.0, %v1685
    %1687 = vmatmul.bf16.gmra.mxu0 %v1658
    %v1688 = vpop.f32.mrf.mxu0
    %v1689 = vadd.f32 0.0, %v1688
    %v1690 = vpop.f32.mrf.mxu0
    %1691 = vdwg.mxu0
    %v1692 = vsel %vm175, %v1679, -inf
    %1693 = vmax.xlane.f32.xlu0 %v1692
    %v1694 = vpop.xlane.xlu0 %1693
    %v1695 = vsel %vm175, %v1681, -inf
    %1696 = vmax.xlane.f32.xlu0 %v1695
    %v1697 = vpop.xlane.xlu0 %1696
    %v1698 = vsel %vm175, %v1684, -inf
    %1699 = vmax.xlane.f32.xlu0 %v1698
    %v1700 = vpop.xlane.xlu0 %1699
    %v1701 = vsel %vm175, %v1686, -inf
    %1702 = vmax.xlane.f32.xlu0 %v1701
    %v1703 = vpop.xlane.xlu0 %1702
    %v1704 = vsel %vm188, %v1689, -inf
    %1705 = vmax.xlane.f32.xlu0 %v1704
    %v1706 = vpop.xlane.xlu0 %1705
    %v1707 = vsub.f32 %v1679, %v1694
    %v1708 = vsub.f32 %v1681, %v1697
    %v1709 = vsub.f32 %v1684, %v1700
    %v1710 = vsub.f32 %v1686, %v1703
    %v1711 = vsub.f32 %v1689, %v1706
    %v1712 = vmul.f32 %v1707, 1.442695
    %v1713 = vpow.pop %v1712
    %v1714 = vmul.f32 %v1708, 1.442695
    %v1715 = vpow.pop %v1714
    %v1716 = vmul.f32 %v1709, 1.442695
    %v1717 = vpow.pop %v1716
    %v1718 = vmul.f32 %v1710, 1.442695
    %v1719 = vpow.pop %v1718
    %v1720 = vmul.f32 %v1711, 1.442695
    %v1721 = vpow.pop %v1720
    %v1722 = vsel %vm175, %v1713, 0.0
    %1723 = vadd.xlane.f32.xlu0 %v1722
    %v1724 = vpop.xlane.xlu0 %1723
    %v1725 = vsel %vm175, %v1715, 0.0
    %1726 = vadd.xlane.f32.xlu0 %v1725
    %v1727 = vpop.xlane.xlu0 %1726
    %v1728 = vsel %vm175, %v1717, 0.0
    %1729 = vadd.xlane.f32.xlu0 %v1728
    %v1730 = vpop.xlane.xlu0 %1729
    %v1731 = vsel %vm175, %v1719, 0.0
    %1732 = vadd.xlane.f32.xlu0 %v1731
    %v1733 = vpop.xlane.xlu0 %1732
    %v1734 = vsel %vm188, %v1721, 0.0
    %1735 = vadd.xlane.f32.xlu0 %v1734
    %v1736 = vpop.xlane.xlu0 %1735
    %v1737 = vrcp.pop %v1724
    %v1738 = vrcp.pop %v1727
    %v1739 = vrcp.pop %v1730
    %v1740 = vrcp.pop %v1733
    %v1741 = vrcp.pop %v1736
    %v1742 = vmul.f32 %v1713, %v1737
    %v1743 = vmul.f32 %v1715, %v1738
    %v1744 = vmul.f32 %v1717, %v1739
    %v1745 = vmul.f32 %v1719, %v1740
    %v1746 = vmul.f32 %v1721, %v1741
    %v1747 = vpack.c.bf16 %v1743, %v1742
    %v1748 = vpack.c.bf16 %v1745, %v1744
    %v1749 = vpack.c.bf16 %v1746, %v1746
    %1750 = vrot.lane.b32.xlu0 %v1334, 48
    %v1751 = vpop.permute.xlu0 %1750
    %1752 = vrot.lane.b32.xlu0 %v1335, 48
    %v1753 = vpop.permute.xlu0 %1752
    %1754 = vrot.lane.b32.xlu0 %v1336, 48
    %v1755 = vpop.permute.xlu0 %1754
    %v1759 = vsel %vm175, %v1747, 0
    %v1762 = vsel %vm175, %v1748, 0
    %v1765 = vsel %vm175, %v1749, 0
    %v1768 = vsel %vm252, %v1755, 0
    %1770 = vmatpush.bf16.msra.mxu0 0
    %1771 = vmatpush.bf16.msra.mxu0 0
    %1772 = vmatpush.bf16.msra.mxu0 0
    %1773 = vmatpush.bf16.msra.mxu0 0
    %1774 = vmatpush.bf16.msra.mxu0 0
    %1775 = vmatpush.bf16.msra.mxu0 %v1768
    %1776 = vmatpush.bf16.msra.mxu0 %v1753
    %1777 = vmatpush.bf16.msra.mxu0 %v1751
    %1778 = vmatmul.bf16.gmra.mxu0 %v1759
    %v1779 = vpop.f32.mrf.mxu0
    %v1780 = vadd.f32 0.0, %v1779
    %v1781 = vpop.f32.mrf.mxu0
    %v1782 = vadd.f32 0.0, %v1781
    %1783 = vmatmul.bf16.gmra.mxu0 %v1762
    %v1784 = vpop.f32.mrf.mxu0
    %v1785 = vadd.f32 0.0, %v1784
    %v1786 = vpop.f32.mrf.mxu0
    %v1787 = vadd.f32 0.0, %v1786
    %1788 = vmatmul.bf16.gmra.mxu0 %v1765
    %v1789 = vpop.f32.mrf.mxu0
    %v1790 = vadd.f32 0.0, %v1789
    %v1791 = vpop.f32.mrf.mxu0
    %1792 = vdwg.mxu0
    %1793 = vrot.lane.b32.xlu0 %v1334, 104
    %v1794 = vpop.permute.xlu0 %1793
    %1795 = vrot.lane.b32.xlu0 %v1335, 104
    %v1796 = vpop.permute.xlu0 %1795
    %1797 = vrot.lane.b32.xlu0 %v1336, 104
    %v1798 = vpop.permute.xlu0 %1797
    %1799 = vrot.lane.b32.xlu0 %v1334, 72
    %v1800 = vpop.permute.xlu0 %1799
    %1801 = vrot.lane.b32.xlu0 %v1335, 72
    %v1802 = vpop.permute.xlu0 %1801
    %1803 = vrot.lane.b32.xlu0 %v1336, 72
    %v1804 = vpop.permute.xlu0 %1803
    %v1806 = vsel %vm133, %v1794, 0
    %v1809 = vsel %vm133, %v1796, 0
    %v1812 = vsel %vm133, %v1798, 0
    %v1815 = vsel %vm133, %v1800, 0
    %v1818 = vsel %vm133, %v1802, 0
    %v1821 = vsel %vm133, %v1804, 0
    %1823 = vmatpush.bf16.xpose.msra.mxu0 0
    %1824 = vmatpush.bf16.xpose.msra.mxu0 0
    %1825 = vmatpush.bf16.xpose.msra.mxu0 0
    %1826 = vmatpush.bf16.xpose.msra.mxu0 0
    %1827 = vmatpush.bf16.xpose.msra.mxu0 0
    %1828 = vmatpush.bf16.xpose.msra.mxu0 %v1821
    %1829 = vmatpush.bf16.xpose.msra.mxu0 %v1818
    %1830 = vmatpush.bf16.xpose.msra.mxu0 %v1815
    %1831 = vmatmul.bf16.gmra.mxu0 %v1806
    %v1832 = vpop.f32.mrf.mxu0
    %v1833 = vadd.f32 0.0, %v1832
    %v1834 = vpop.f32.mrf.mxu0
    %v1835 = vadd.f32 0.0, %v1834
    %1836 = vmatmul.bf16.gmra.mxu0 %v1809
    %v1837 = vpop.f32.mrf.mxu0
    %v1838 = vadd.f32 0.0, %v1837
    %v1839 = vpop.f32.mrf.mxu0
    %v1840 = vadd.f32 0.0, %v1839
    %1841 = vmatmul.bf16.gmra.mxu0 %v1812
    %v1842 = vpop.f32.mrf.mxu0
    %v1843 = vadd.f32 0.0, %v1842
    %v1844 = vpop.f32.mrf.mxu0
    %1845 = vdwg.mxu0
    %v1846 = vsel %vm175, %v1833, -inf
    %1847 = vmax.xlane.f32.xlu0 %v1846
    %v1848 = vpop.xlane.xlu0 %1847
    %v1849 = vsel %vm175, %v1835, -inf
    %1850 = vmax.xlane.f32.xlu0 %v1849
    %v1851 = vpop.xlane.xlu0 %1850
    %v1852 = vsel %vm175, %v1838, -inf
    %1853 = vmax.xlane.f32.xlu0 %v1852
    %v1854 = vpop.xlane.xlu0 %1853
    %v1855 = vsel %vm175, %v1840, -inf
    %1856 = vmax.xlane.f32.xlu0 %v1855
    %v1857 = vpop.xlane.xlu0 %1856
    %v1858 = vsel %vm188, %v1843, -inf
    %1859 = vmax.xlane.f32.xlu0 %v1858
    %v1860 = vpop.xlane.xlu0 %1859
    %v1861 = vsub.f32 %v1833, %v1848
    %v1862 = vsub.f32 %v1835, %v1851
    %v1863 = vsub.f32 %v1838, %v1854
    %v1864 = vsub.f32 %v1840, %v1857
    %v1865 = vsub.f32 %v1843, %v1860
    %v1866 = vmul.f32 %v1861, 1.442695
    %v1867 = vpow.pop %v1866
    %v1868 = vmul.f32 %v1862, 1.442695
    %v1869 = vpow.pop %v1868
    %v1870 = vmul.f32 %v1863, 1.442695
    %v1871 = vpow.pop %v1870
    %v1872 = vmul.f32 %v1864, 1.442695
    %v1873 = vpow.pop %v1872
    %v1874 = vmul.f32 %v1865, 1.442695
    %v1875 = vpow.pop %v1874
    %v1876 = vsel %vm175, %v1867, 0.0
    %1877 = vadd.xlane.f32.xlu0 %v1876
    %v1878 = vpop.xlane.xlu0 %1877
    %v1879 = vsel %vm175, %v1869, 0.0
    %1880 = vadd.xlane.f32.xlu0 %v1879
    %v1881 = vpop.xlane.xlu0 %1880
    %v1882 = vsel %vm175, %v1871, 0.0
    %1883 = vadd.xlane.f32.xlu0 %v1882
    %v1884 = vpop.xlane.xlu0 %1883
    %v1885 = vsel %vm175, %v1873, 0.0
    %1886 = vadd.xlane.f32.xlu0 %v1885
    %v1887 = vpop.xlane.xlu0 %1886
    %v1888 = vsel %vm188, %v1875, 0.0
    %1889 = vadd.xlane.f32.xlu0 %v1888
    %v1890 = vpop.xlane.xlu0 %1889
    %v1891 = vrcp.pop %v1878
    %v1892 = vrcp.pop %v1881
    %v1893 = vrcp.pop %v1884
    %v1894 = vrcp.pop %v1887
    %v1895 = vrcp.pop %v1890
    %v1896 = vmul.f32 %v1867, %v1891
    %v1897 = vmul.f32 %v1869, %v1892
    %v1898 = vmul.f32 %v1871, %v1893
    %v1899 = vmul.f32 %v1873, %v1894
    %v1900 = vmul.f32 %v1875, %v1895
    %v1901 = vpack.c.bf16 %v1897, %v1896
    %v1902 = vpack.c.bf16 %v1899, %v1898
    %v1903 = vpack.c.bf16 %v1900, %v1900
    %1904 = vrot.lane.b32.xlu0 %v1334, 40
    %v1905 = vpop.permute.xlu0 %1904
    %1906 = vrot.lane.b32.xlu0 %v1335, 40
    %v1907 = vpop.permute.xlu0 %1906
    %1908 = vrot.lane.b32.xlu0 %v1336, 40
    %v1909 = vpop.permute.xlu0 %1908
    %v1913 = vsel %vm175, %v1901, 0
    %v1916 = vsel %vm175, %v1902, 0
    %v1919 = vsel %vm175, %v1903, 0
    %v1922 = vsel %vm252, %v1909, 0
    %1924 = vmatpush.bf16.msra.mxu0 0
    %1925 = vmatpush.bf16.msra.mxu0 0
    %1926 = vmatpush.bf16.msra.mxu0 0
    %1927 = vmatpush.bf16.msra.mxu0 0
    %1928 = vmatpush.bf16.msra.mxu0 0
    %1929 = vmatpush.bf16.msra.mxu0 %v1922
    %1930 = vmatpush.bf16.msra.mxu0 %v1907
    %1931 = vmatpush.bf16.msra.mxu0 %v1905
    %1932 = vmatmul.bf16.gmra.mxu0 %v1913
    %v1933 = vpop.f32.mrf.mxu0
    %v1934 = vadd.f32 0.0, %v1933
    %v1935 = vpop.f32.mrf.mxu0
    %v1936 = vadd.f32 0.0, %v1935
    %1937 = vmatmul.bf16.gmra.mxu0 %v1916
    %v1938 = vpop.f32.mrf.mxu0
    %v1939 = vadd.f32 0.0, %v1938
    %v1940 = vpop.f32.mrf.mxu0
    %v1941 = vadd.f32 0.0, %v1940
    %1942 = vmatmul.bf16.gmra.mxu0 %v1919
    %v1943 = vpop.f32.mrf.mxu0
    %v1944 = vadd.f32 0.0, %v1943
    %v1945 = vpop.f32.mrf.mxu0
    %1946 = vdwg.mxu0
    %1952 = vrot.lane.b32.xlu0 %v1626, 8
    %v1953 = vpop.permute.xlu0 %1952
    %1954 = vrot.lane.b32.xlu0 %v1628, 8
    %v1955 = vpop.permute.xlu0 %1954
    %1956 = vrot.lane.b32.xlu0 %v1631, 8
    %v1957 = vpop.permute.xlu0 %1956
    %1958 = vrot.lane.b32.xlu0 %v1633, 8
    %v1959 = vpop.permute.xlu0 %1958
    %1960 = vrot.lane.b32.xlu0 %v1636, 8
    %v1961 = vpop.permute.xlu0 %1960
    %1972 = vrot.lane.b32.xlu0 %v1780, 16
    %v1973 = vpop.permute.xlu0 %1972
    %1974 = vrot.lane.b32.xlu0 %v1782, 16
    %v1975 = vpop.permute.xlu0 %1974
    %1976 = vrot.lane.b32.xlu0 %v1785, 16
    %v1977 = vpop.permute.xlu0 %1976
    %1978 = vrot.lane.b32.xlu0 %v1787, 16
    %v1979 = vpop.permute.xlu0 %1978
    %1980 = vrot.lane.b32.xlu0 %v1790, 16
    %v1981 = vpop.permute.xlu0 %1980
    %1992 = vrot.lane.b32.xlu0 %v1934, 24
    %v1993 = vpop.permute.xlu0 %1992
    %1994 = vrot.lane.b32.xlu0 %v1936, 24
    %v1995 = vpop.permute.xlu0 %1994
    %1996 = vrot.lane.b32.xlu0 %v1939, 24
    %v1997 = vpop.permute.xlu0 %1996
    %1998 = vrot.lane.b32.xlu0 %v1941, 24
    %v1999 = vpop.permute.xlu0 %1998
    %2000 = vrot.lane.b32.xlu0 %v1944, 24
    %v2001 = vpop.permute.xlu0 %2000
    %v2007 = vsel %vm133, %v1472, %v1953
    %v2008 = vsel %vm133, %v1474, %v1955
    %v2009 = vsel %vm133, %v1477, %v1957
    %v2010 = vsel %vm133, %v1479, %v1959
    %v2011 = vsel %vm133, %v1482, %v1961
    %v2012 = vsel %vm806, %v2007, %v1973
    %v2013 = vsel %vm806, %v2008, %v1975
    %v2014 = vsel %vm806, %v2009, %v1977
    %v2015 = vsel %vm806, %v2010, %v1979
    %v2016 = vsel %vm806, %v2011, %v1981
    %v2017 = vsel %vm812, %v2012, %v1993
    %v2018 = vsel %vm812, %v2013, %v1995
    %v2019 = vsel %vm812, %v2014, %v1997
    %v2020 = vsel %vm812, %v2015, %v1999
    %v2021 = vsel %vm812, %v2016, %v2001
    %v2022 = vpack.c.bf16 %v2018, %v2017
    %v2023 = vpack.c.bf16 %v2020, %v2019
    %v2024 = vpack.c.bf16 %v2021, %v2021
    %v2025 = vld [vmem:[#allocation2 + $0x60] sm:$0xf]
    %v2026 = vld [vmem:[#allocation2 + $0x64] sm:$0xf]
    %v2027 = vld [vmem:[#allocation2 + $0x68] sm:$0xf]
    %v2028 = vld [vmem:[#allocation2 + $0x6c] sm:$0xf]
    %v2029 = vld [vmem:[#allocation4 + $0x78] sm:$0x1]
    %v2030 = vperm.slane %v2029, 0
    %v2035 = vunpack.c.l.b16 %v2025
    %v2036 = vunpack.c.l.b16 %v2026
    %v2037 = vunpack.c.l.b16 %v2027
    %v2038 = vunpack.c.l.b16 %v2028
    %v2039 = vpack.c.b16 %v2036, %v2035
    %v2040 = vpack.c.b16 %v2038, %v2037
    %v2044 = vsel %vm76, %v2022, 0
    %v2047 = vsel %vm76, %v2023, 0
    %v2050 = vsel %vm76, %v2024, 0
    %2052 = vmatpush.bf16.msra.mxu0 0
    %2053 = vmatpush.bf16.msra.mxu0 0
    %2054 = vmatpush.bf16.msra.mxu0 0
    %2055 = vmatpush.bf16.msra.mxu0 0
    %2056 = vmatpush.bf16.msra.mxu0 0
    %2057 = vmatpush.bf16.msra.mxu0 0
    %2058 = vmatpush.bf16.msra.mxu0 %v2040
    %2059 = vmatpush.bf16.msra.mxu0 %v2039
    %2060 = vmatmul.bf16.gmra.mxu0 %v2044
    %v2061 = vpop.f32.mrf.mxu0
    %v2062 = vadd.f32 %v2030, %v2061
    %v2063 = vpop.f32.mrf.mxu0
    %v2064 = vadd.f32 %v2030, %v2063
    %2065 = vmatmul.bf16.gmra.mxu0 %v2047
    %v2066 = vpop.f32.mrf.mxu0
    %v2067 = vadd.f32 %v2030, %v2066
    %v2068 = vpop.f32.mrf.mxu0
    %v2069 = vadd.f32 %v2030, %v2068
    %2070 = vmatmul.bf16.gmra.mxu0 %v2050
    %v2071 = vpop.f32.mrf.mxu0
    %v2072 = vadd.f32 %v2030, %v2071
    %v2073 = vpop.f32.mrf.mxu0
    %2074 = vdwg.mxu0
    %v2075 = vadd.f32 %v1258, %v2062
    %v2076 = vadd.f32 %v1259, %v2064
    %v2077 = vadd.f32 %v1260, %v2067
    %v2078 = vadd.f32 %v1261, %v2069
    %v2079 = vadd.f32 %v1262, %v2072
    %v2080 = vld [vmem:[#allocation4 + $0x90] sm:$0x3]
    %v2081 = vsel %vm76, %v2075, 0.0
    %2082 = vadd.xlane.f32.xlu0 %v2081
    %v2083 = vpop.xlane.xlu0 %2082
    %v2084 = vsel %vm76, %v2076, 0.0
    %2085 = vadd.xlane.f32.xlu0 %v2084
    %v2086 = vpop.xlane.xlu0 %2085
    %v2087 = vsel %vm76, %v2077, 0.0
    %2088 = vadd.xlane.f32.xlu0 %v2087
    %v2089 = vpop.xlane.xlu0 %2088
    %v2090 = vsel %vm76, %v2078, 0.0
    %2091 = vadd.xlane.f32.xlu0 %v2090
    %v2092 = vpop.xlane.xlu0 %2091
    %v2093 = vsel %vm889, %v2079, 0.0
    %2094 = vadd.xlane.f32.xlu0 %v2093
    %v2095 = vpop.xlane.xlu0 %2094
    %v2096 = vmul.f32 %v2083, %v899
    %v2097 = vmul.f32 %v2086, %v899
    %v2098 = vmul.f32 %v2089, %v899
    %v2099 = vmul.f32 %v2092, %v899
    %v2100 = vmul.f32 %v2095, %v899
    %v2101 = vsub.f32 %v2075, %v2096
    %v2102 = vsub.f32 %v2076, %v2097
    %v2103 = vsub.f32 %v2077, %v2098
    %v2104 = vsub.f32 %v2078, %v2099
    %v2105 = vsub.f32 %v2079, %v2100
    %v2106 = vmul.f32 %v2101, %v2101
    %v2107 = vmul.f32 %v2102, %v2102
    %v2108 = vmul.f32 %v2103, %v2103
    %v2109 = vmul.f32 %v2104, %v2104
    %v2110 = vmul.f32 %v2105, %v2105
    %v2111 = vsel %vm76, %v2106, 0.0
    %2112 = vadd.xlane.f32.xlu0 %v2111
    %v2113 = vpop.xlane.xlu0 %2112
    %v2114 = vsel %vm76, %v2107, 0.0
    %2115 = vadd.xlane.f32.xlu0 %v2114
    %v2116 = vpop.xlane.xlu0 %2115
    %v2117 = vsel %vm76, %v2108, 0.0
    %2118 = vadd.xlane.f32.xlu0 %v2117
    %v2119 = vpop.xlane.xlu0 %2118
    %v2120 = vsel %vm76, %v2109, 0.0
    %2121 = vadd.xlane.f32.xlu0 %v2120
    %v2122 = vpop.xlane.xlu0 %2121
    %v2123 = vsel %vm889, %v2110, 0.0
    %2124 = vadd.xlane.f32.xlu0 %v2123
    %v2125 = vpop.xlane.xlu0 %2124
    %v2126 = vmul.f32 %v2113, %v899
    %v2127 = vmul.f32 %v2116, %v899
    %v2128 = vmul.f32 %v2119, %v899
    %v2129 = vmul.f32 %v2122, %v899
    %v2130 = vmul.f32 %v2125, %v899
    %v2131 = vadd.f32 %v2126, 1e-05
    %v2132 = vadd.f32 %v2127, 1e-05
    %v2133 = vadd.f32 %v2128, 1e-05
    %v2134 = vadd.f32 %v2129, 1e-05
    %v2135 = vadd.f32 %v2130, 1e-05
    %v2136 = vrsqrt.pop %v2131
    %v2137 = vmul.f32 %v2136, %v2131
    %v2138 = vmul.f32 %v2137, %v2136
    %v2139 = vmul.f32 0.5, %v2138
    %v2140 = vsub.f32 1.5, %v2139
    %v2141 = vmul.f32 %v2136, %v2140
    %vm2142 = vweird.f32 %v2131
    %vm2143 = vweird.f32 %v2136
    %vm2144 = vmor %vm2142, %vm2143
    %v2145 = vsel %vm2144, %v2136, %v2141
    %v2146 = vrsqrt.pop %v2132
    %v2147 = vmul.f32 %v2146, %v2132
    %v2148 = vmul.f32 %v2147, %v2146
    %v2149 = vmul.f32 0.5, %v2148
    %v2150 = vsub.f32 1.5, %v2149
    %v2151 = vmul.f32 %v2146, %v2150
    %vm2152 = vweird.f32 %v2132
    %vm2153 = vweird.f32 %v2146
    %vm2154 = vmor %vm2152, %vm2153
    %v2155 = vsel %vm2154, %v2146, %v2151
    %v2156 = vrsqrt.pop %v2133
    %v2157 = vmul.f32 %v2156, %v2133
    %v2158 = vmul.f32 %v2157, %v2156
    %v2159 = vmul.f32 0.5, %v2158
    %v2160 = vsub.f32 1.5, %v2159
    %v2161 = vmul.f32 %v2156, %v2160
    %vm2162 = vweird.f32 %v2133
    %vm2163 = vweird.f32 %v2156
    %vm2164 = vmor %vm2162, %vm2163
    %v2165 = vsel %vm2164, %v2156, %v2161
    %v2166 = vrsqrt.pop %v2134
    %v2167 = vmul.f32 %v2166, %v2134
    %v2168 = vmul.f32 %v2167, %v2166
    %v2169 = vmul.f32 0.5, %v2168
    %v2170 = vsub.f32 1.5, %v2169
    %v2171 = vmul.f32 %v2166, %v2170
    %vm2172 = vweird.f32 %v2134
    %vm2173 = vweird.f32 %v2166
    %vm2174 = vmor %vm2172, %vm2173
    %v2175 = vsel %vm2174, %v2166, %v2171
    %v2176 = vrsqrt.pop %v2135
    %v2177 = vmul.f32 %v2176, %v2135
    %v2178 = vmul.f32 %v2177, %v2176
    %v2179 = vmul.f32 0.5, %v2178
    %v2180 = vsub.f32 1.5, %v2179
    %v2181 = vmul.f32 %v2176, %v2180
    %vm2182 = vweird.f32 %v2135
    %vm2183 = vweird.f32 %v2176
    %vm2184 = vmor %vm2182, %vm2183
    %v2185 = vsel %vm2184, %v2176, %v2181
    %v2186 = vmul.f32 %v2101, %v2145
    %v2187 = vmul.f32 %v2102, %v2155
    %v2188 = vmul.f32 %v2103, %v2165
    %v2189 = vmul.f32 %v2104, %v2175
    %v2190 = vmul.f32 %v2105, %v2185
    %v2191 = vperm.slane %v2080, 0
    %v2192 = vmul.f32 %v2186, %v2191
    %v2193 = vmul.f32 %v2187, %v2191
    %v2194 = vmul.f32 %v2188, %v2191
    %v2195 = vmul.f32 %v2189, %v2191
    %v2196 = vmul.f32 %v2190, %v2191
    %v2197 = vperm.slane %v2080, 1
    %v2198 = vadd.f32 %v2192, %v2197
    %v2199 = vadd.f32 %v2193, %v2197
    %v2200 = vadd.f32 %v2194, %v2197
    %v2201 = vadd.f32 %v2195, %v2197
    %v2202 = vadd.f32 %v2196, %v2197
    %v2203 = vpack.c.bf16 %v2199, %v2198
    %v2204 = vpack.c.bf16 %v2201, %v2200
    %v2205 = vpack.c.bf16 %v2202, %v2202
    %v2206 = vld [vmem:[#allocation2 + $0x70] sm:$0xf]
    %v2207 = vld [vmem:[#allocation2 + $0x74] sm:$0xf]
    %v2208 = vld [vmem:[#allocation2 + $0x78] sm:$0xf]
    %v2209 = vld [vmem:[#allocation2 + $0x7c] sm:$0xf]
    %v2210 = vld [vmem:[#allocation4 + $0x80] sm:$0x1]
    %v2211 = vperm.slane %v2210, 0
    %v2216 = vunpack.c.l.b16 %v2206
    %v2217 = vunpack.c.l.b16 %v2207
    %v2218 = vunpack.c.l.b16 %v2208
    %v2219 = vunpack.c.l.b16 %v2209
    %v2220 = vpack.c.b16 %v2217, %v2216
    %v2221 = vpack.c.b16 %v2219, %v2218
    %v2225 = vsel %vm76, %v2203, 0
    %v2228 = vsel %vm76, %v2204, 0
    %v2231 = vsel %vm76, %v2205, 0
    %2233 = vmatpush.bf16.msra.mxu0 0
    %2234 = vmatpush.bf16.msra.mxu0 0
    %2235 = vmatpush.bf16.msra.mxu0 0
    %2236 = vmatpush.bf16.msra.mxu0 0
    %2237 = vmatpush.bf16.msra.mxu0 0
    %2238 = vmatpush.bf16.msra.mxu0 0
    %2239 = vmatpush.bf16.msra.mxu0 %v2221
    %2240 = vmatpush.bf16.msra.mxu0 %v2220
    %2241 = vmatmul.bf16.gmra.mxu0 %v2225
    %v2242 = vpop.f32.mrf.mxu0
    %v2243 = vadd.f32 %v2211, %v2242
    %v2244 = vpop.f32.mrf.mxu0
    %v2245 = vadd.f32 %v2211, %v2244
    %2246 = vmatmul.bf16.gmra.mxu0 %v2228
    %v2247 = vpop.f32.mrf.mxu0
    %v2248 = vadd.f32 %v2211, %v2247
    %v2249 = vpop.f32.mrf.mxu0
    %v2250 = vadd.f32 %v2211, %v2249
    %2251 = vmatmul.bf16.gmra.mxu0 %v2231
    %v2252 = vpop.f32.mrf.mxu0
    %v2253 = vadd.f32 %v2211, %v2252
    %v2254 = vpop.f32.mrf.mxu0
    %2255 = vdwg.mxu0
    %v2256 = vmax.f32 %v2243, 0.0
    %v2257 = vmax.f32 %v2245, 0.0
    %v2258 = vmax.f32 %v2248, 0.0
    %v2259 = vmax.f32 %v2250, 0.0
    %v2260 = vmax.f32 %v2253, 0.0
    %v2261 = vpack.c.bf16 %v2257, %v2256
    %v2262 = vpack.c.bf16 %v2259, %v2258
    %v2263 = vpack.c.bf16 %v2260, %v2260
    %v2264 = vld [vmem:[#allocation2 + $0x80] sm:$0xf]
    %v2265 = vld [vmem:[#allocation2 + $0x84] sm:$0xf]
    %v2266 = vld [vmem:[#allocation2 + $0x88] sm:$0xf]
    %v2267 = vld [vmem:[#allocation2 + $0x8c] sm:$0xf]
    %v2268 = vld [vmem:[#allocation2 + $0x90] sm:$0xf]
    %v2269 = vld [vmem:[#allocation2 + $0x94] sm:$0xf]
    %v2270 = vld [vmem:[#allocation2 + $0x98] sm:$0xf]
    %v2271 = vld [vmem:[#allocation2 + $0x9c] sm:$0xf]
    %v2272 = vld [vmem:[#allocation4 + $0x88] sm:$0x1]
    %v2273 = vperm.slane %v2272, 0
    %v2282 = vunpack.c.l.b16 %v2264
    %v2283 = vunpack.c.l.b16 %v2265
    %v2284 = vunpack.c.l.b16 %v2266
    %v2285 = vunpack.c.l.b16 %v2267
    %v2286 = vunpack.c.l.b16 %v2268
    %v2287 = vunpack.c.l.b16 %v2269
    %v2288 = vunpack.c.l.b16 %v2270
    %v2289 = vunpack.c.l.b16 %v2271
    %v2290 = vpack.c.b16 %v2283, %v2282
    %v2291 = vpack.c.b16 %v2285, %v2284
    %v2292 = vpack.c.b16 %v2287, %v2286
    %v2293 = vpack.c.b16 %v2289, %v2288
    %v2299 = vsel %vm1102, %v2261, 0
    %v2302 = vsel %vm1102, %v2262, 0
    %v2305 = vsel %vm1102, %v2263, 0
    %2307 = vmatpush.bf16.msra.mxu0 0
    %2308 = vmatpush.bf16.msra.mxu0 0
    %2309 = vmatpush.bf16.msra.mxu0 0
    %2310 = vmatpush.bf16.msra.mxu0 0
    %2311 = vmatpush.bf16.msra.mxu0 %v2293
    %2312 = vmatpush.bf16.msra.mxu0 %v2292
    %2313 = vmatpush.bf16.msra.mxu0 %v2291
    %2314 = vmatpush.bf16.msra.mxu0 %v2290
    %2315 = vmatmul.bf16.gmra.mxu0 %v2299
    %v2316 = vpop.f32.mrf.mxu0
    %v2317 = vadd.f32 %v2273, %v2316
    %v2318 = vpop.f32.mrf.mxu0
    %v2319 = vadd.f32 %v2273, %v2318
    %2320 = vmatmul.bf16.gmra.mxu0 %v2302
    %v2321 = vpop.f32.mrf.mxu0
    %v2322 = vadd.f32 %v2273, %v2321
    %v2323 = vpop.f32.mrf.mxu0
    %v2324 = vadd.f32 %v2273, %v2323
    %2325 = vmatmul.bf16.gmra.mxu0 %v2305
    %v2326 = vpop.f32.mrf.mxu0
    %v2327 = vadd.f32 %v2273, %v2326
    %v2328 = vpop.f32.mrf.mxu0
    %2329 = vdwg.mxu0
    %v2330 = vadd.f32 %v2198, %v2317
    %v2331 = vadd.f32 %v2199, %v2319
    %v2332 = vadd.f32 %v2200, %v2322
    %v2333 = vadd.f32 %v2201, %v2324
    %v2334 = vadd.f32 %v2202, %v2327
    %v2335 = vld [vmem:[#allocation4 + $0x98] sm:$0x3]
    %v2336 = vsel %vm76, %v2330, 0.0
    %2337 = vadd.xlane.f32.xlu0 %v2336
    %v2338 = vpop.xlane.xlu0 %2337
    %v2339 = vsel %vm76, %v2331, 0.0
    %2340 = vadd.xlane.f32.xlu0 %v2339
    %v2341 = vpop.xlane.xlu0 %2340
    %v2342 = vsel %vm76, %v2332, 0.0
    %2343 = vadd.xlane.f32.xlu0 %v2342
    %v2344 = vpop.xlane.xlu0 %2343
    %v2345 = vsel %vm76, %v2333, 0.0
    %2346 = vadd.xlane.f32.xlu0 %v2345
    %v2347 = vpop.xlane.xlu0 %2346
    %v2348 = vsel %vm889, %v2334, 0.0
    %2349 = vadd.xlane.f32.xlu0 %v2348
    %v2350 = vpop.xlane.xlu0 %2349
    %v2351 = vmul.f32 %v2338, %v899
    %v2352 = vmul.f32 %v2341, %v899
    %v2353 = vmul.f32 %v2344, %v899
    %v2354 = vmul.f32 %v2347, %v899
    %v2355 = vmul.f32 %v2350, %v899
    %v2356 = vsub.f32 %v2330, %v2351
    %v2357 = vsub.f32 %v2331, %v2352
    %v2358 = vsub.f32 %v2332, %v2353
    %v2359 = vsub.f32 %v2333, %v2354
    %v2360 = vsub.f32 %v2334, %v2355
    %v2361 = vmul.f32 %v2356, %v2356
    %v2362 = vmul.f32 %v2357, %v2357
    %v2363 = vmul.f32 %v2358, %v2358
    %v2364 = vmul.f32 %v2359, %v2359
    %v2365 = vmul.f32 %v2360, %v2360
    %v2366 = vsel %vm76, %v2361, 0.0
    %2367 = vadd.xlane.f32.xlu0 %v2366
    %v2368 = vpop.xlane.xlu0 %2367
    %v2369 = vsel %vm76, %v2362, 0.0
    %2370 = vadd.xlane.f32.xlu0 %v2369
    %v2371 = vpop.xlane.xlu0 %2370
    %v2372 = vsel %vm76, %v2363, 0.0
    %2373 = vadd.xlane.f32.xlu0 %v2372
    %v2374 = vpop.xlane.xlu0 %2373
    %v2375 = vsel %vm76, %v2364, 0.0
    %2376 = vadd.xlane.f32.xlu0 %v2375
    %v2377 = vpop.xlane.xlu0 %2376
    %v2378 = vsel %vm889, %v2365, 0.0
    %2379 = vadd.xlane.f32.xlu0 %v2378
    %v2380 = vpop.xlane.xlu0 %2379
    %v2381 = vmul.f32 %v2368, %v899
    %v2382 = vmul.f32 %v2371, %v899
    %v2383 = vmul.f32 %v2374, %v899
    %v2384 = vmul.f32 %v2377, %v899
    %v2385 = vmul.f32 %v2380, %v899
    %v2386 = vadd.f32 %v2381, 1e-05
    %v2387 = vadd.f32 %v2382, 1e-05
    %v2388 = vadd.f32 %v2383, 1e-05
    %v2389 = vadd.f32 %v2384, 1e-05
    %v2390 = vadd.f32 %v2385, 1e-05
    %v2391 = vrsqrt.pop %v2386
    %v2392 = vmul.f32 %v2391, %v2386
    %v2393 = vmul.f32 %v2392, %v2391
    %v2394 = vmul.f32 0.5, %v2393
    %v2395 = vsub.f32 1.5, %v2394
    %v2396 = vmul.f32 %v2391, %v2395
    %vm2397 = vweird.f32 %v2386
    %vm2398 = vweird.f32 %v2391
    %vm2399 = vmor %vm2397, %vm2398
    %v2400 = vsel %vm2399, %v2391, %v2396
    %v2401 = vrsqrt.pop %v2387
    %v2402 = vmul.f32 %v2401, %v2387
    %v2403 = vmul.f32 %v2402, %v2401
    %v2404 = vmul.f32 0.5, %v2403
    %v2405 = vsub.f32 1.5, %v2404
    %v2406 = vmul.f32 %v2401, %v2405
    %vm2407 = vweird.f32 %v2387
    %vm2408 = vweird.f32 %v2401
    %vm2409 = vmor %vm2407, %vm2408
    %v2410 = vsel %vm2409, %v2401, %v2406
    %v2411 = vrsqrt.pop %v2388
    %v2412 = vmul.f32 %v2411, %v2388
    %v2413 = vmul.f32 %v2412, %v2411
    %v2414 = vmul.f32 0.5, %v2413
    %v2415 = vsub.f32 1.5, %v2414
    %v2416 = vmul.f32 %v2411, %v2415
    %vm2417 = vweird.f32 %v2388
    %vm2418 = vweird.f32 %v2411
    %vm2419 = vmor %vm2417, %vm2418
    %v2420 = vsel %vm2419, %v2411, %v2416
    %v2421 = vrsqrt.pop %v2389
    %v2422 = vmul.f32 %v2421, %v2389
    %v2423 = vmul.f32 %v2422, %v2421
    %v2424 = vmul.f32 0.5, %v2423
    %v2425 = vsub.f32 1.5, %v2424
    %v2426 = vmul.f32 %v2421, %v2425
    %vm2427 = vweird.f32 %v2389
    %vm2428 = vweird.f32 %v2421
    %vm2429 = vmor %vm2427, %vm2428
    %v2430 = vsel %vm2429, %v2421, %v2426
    %v2431 = vrsqrt.pop %v2390
    %v2432 = vmul.f32 %v2431, %v2390
    %v2433 = vmul.f32 %v2432, %v2431
    %v2434 = vmul.f32 0.5, %v2433
    %v2435 = vsub.f32 1.5, %v2434
    %v2436 = vmul.f32 %v2431, %v2435
    %vm2437 = vweird.f32 %v2390
    %vm2438 = vweird.f32 %v2431
    %vm2439 = vmor %vm2437, %vm2438
    %v2440 = vsel %vm2439, %v2431, %v2436
    %v2441 = vmul.f32 %v2356, %v2400
    %v2442 = vmul.f32 %v2357, %v2410
    %v2443 = vmul.f32 %v2358, %v2420
    %v2444 = vmul.f32 %v2359, %v2430
    %v2445 = vmul.f32 %v2360, %v2440
    %v2446 = vperm.slane %v2335, 0
    %v2447 = vmul.f32 %v2441, %v2446
    %v2448 = vmul.f32 %v2442, %v2446
    %v2449 = vmul.f32 %v2443, %v2446
    %v2450 = vmul.f32 %v2444, %v2446
    %v2451 = vmul.f32 %v2445, %v2446
    %v2452 = vperm.slane %v2335, 1
    %v2453 = vadd.f32 %v2447, %v2452
    %v2454 = vadd.f32 %v2448, %v2452
    %v2455 = vadd.f32 %v2449, %v2452
    %v2456 = vadd.f32 %v2450, %v2452
    %v2457 = vadd.f32 %v2451, %v2452
    %v2458 = vld [vmem:[#allocation4 + $0xa0] sm:$0x1]
    %v2459 = vperm.slane %v2458, 0
    %v2460 = vld [vmem:[#allocation4 + $0xf0] sm:$0x3]
    %v2461 = vsel %vm76, %v2459, 0.0
    %2462 = vadd.xlane.f32.xlu0 %v2461
    %v2463 = vpop.xlane.xlu0 %2462
    %v2464 = vmul.f32 %v2463, %v899
    %v2465 = vsub.f32 %v2459, %v2464
    %v2466 = vmul.f32 %v2465, %v2465
    %v2467 = vsel %vm76, %v2466, 0.0
    %2468 = vadd.xlane.f32.xlu0 %v2467
    %v2469 = vpop.xlane.xlu0 %2468
    %v2470 = vmul.f32 %v2469, %v899
    %v2471 = vadd.f32 %v2470, 1e-05
    %v2472 = vrsqrt.pop %v2471
    %v2473 = vmul.f32 %v2472, %v2471
    %v2474 = vmul.f32 %v2473, %v2472
    %v2475 = vmul.f32 0.5, %v2474
    %v2476 = vsub.f32 1.5, %v2475
    %v2477 = vmul.f32 %v2472, %v2476
    %vm2478 = vweird.f32 %v2471
    %vm2479 = vweird.f32 %v2472
    %vm2480 = vmor %vm2478, %vm2479
    %v2481 = vsel %vm2480, %v2472, %v2477
    %v2482 = vmul.f32 %v2465, %v2481
    %v2483 = vperm.slane %v2460, 0
    %v2484 = vmul.f32 %v2482, %v2483
    %v2485 = vperm.slane %v2460, 1
    %v2486 = vadd.f32 %v2484, %v2485
    %v2487 = vpack.c.bf16 %v2486, %v2486
    %v2488 = vld [vmem:[#allocation2 + $0xa0] sm:$0xf]
    %v2489 = vld [vmem:[#allocation2 + $0xa4] sm:$0xf]
    %v2490 = vld [vmem:[#allocation2 + $0xa8] sm:$0xf]
    %v2491 = vld [vmem:[#allocation2 + $0xac] sm:$0xf]
    %v2492 = vld [vmem:[#allocation4 + $0xa8] sm:$0xff]
    %v2497 = vunpack.c.l.b16 %v2488
    %v2498 = vunpack.c.l.b16 %v2489
    %v2499 = vunpack.c.l.b16 %v2490
    %v2500 = vunpack.c.l.b16 %v2491
    %v2501 = vpack.c.b16 %v2498, %v2497
    %v2502 = vpack.c.b16 %v2500, %v2499
    %v2506 = vsel %vm76, %v2487, 0
    %2508 = vmatpush.bf16.msra.mxu0 0
    %2509 = vmatpush.bf16.msra.mxu0 0
    %2510 = vmatpush.bf16.msra.mxu0 0
    %2511 = vmatpush.bf16.msra.mxu0 0
    %2512 = vmatpush.bf16.msra.mxu0 0
    %2513 = vmatpush.bf16.msra.mxu0 0
    %2514 = vmatpush.bf16.msra.mxu0 %v2502
    %2515 = vmatpush.bf16.msra.mxu0 %v2501
    %2516 = vmatmul.bf16.gmra.mxu0 %v2506
    %v2517 = vpop.f32.mrf.mxu0
    %v2518 = vadd.f32 %v2492, %v2517
    %v2519 = vpop.f32.mrf.mxu0
    %2520 = vdwg.mxu0
    %v2521 = vpack.c.bf16 %v2518, %v2518
    %v2522 = vpack.c.bf16 %v2454, %v2453
    %v2523 = vpack.c.bf16 %v2456, %v2455
    %v2524 = vpack.c.bf16 %v2457, %v2457
    %v2525 = vld [vmem:[#allocation2 + $0xb0] sm:$0xf]
    %v2526 = vld [vmem:[#allocation2 + $0xb4] sm:$0xf]
    %v2527 = vld [vmem:[#allocation2 + $0xb8] sm:$0xf]
    %v2528 = vld [vmem:[#allocation2 + $0xbc] sm:$0xf]
    %v2529 = vld [vmem:[#allocation4 + $0xb0] sm:$0xff]
    %v2530 = vld [vmem:[#allocation4 + $0xb8] sm:$0xff]
    %v2531 = vld [vmem:[#allocation4 + $0xc0] sm:$0xff]
    %v2532 = vld [vmem:[#allocation4 + $0xc8] sm:$0xff]
    %v2533 = vld [vmem:[#allocation4 + $0xd0] sm:$0x3]
    %v2538 = vunpack.c.l.b16 %v2525
    %v2539 = vunpack.c.l.b16 %v2526
    %v2540 = vunpack.c.l.b16 %v2527
    %v2541 = vunpack.c.l.b16 %v2528
    %v2542 = vpack.c.b16 %v2539, %v2538
    %v2543 = vpack.c.b16 %v2541, %v2540
    %v2547 = vsel %vm76, %v2522, 0
    %v2550 = vsel %vm76, %v2523, 0
    %v2553 = vsel %vm76, %v2524, 0
    %2555 = vmatpush.bf16.msra.mxu0 0
    %2556 = vmatpush.bf16.msra.mxu0 0
    %2557 = vmatpush.bf16.msra.mxu0 0
    %2558 = vmatpush.bf16.msra.mxu0 0
    %2559 = vmatpush.bf16.msra.mxu0 0
    %2560 = vmatpush.bf16.msra.mxu0 0
    %2561 = vmatpush.bf16.msra.mxu0 %v2543
    %2562 = vmatpush.bf16.msra.mxu0 %v2542
    %2563 = vmatmul.bf16.gmra.mxu0 %v2547
    %v2564 = vpop.f32.mrf.mxu0
    %v2565 = vadd.f32 %v2529, %v2564
    %v2566 = vpop.f32.mrf.mxu0
    %v2567 = vadd.f32 %v2530, %v2566
    %2568 = vmatmul.bf16.gmra.mxu0 %v2550
    %v2569 = vpop.f32.mrf.mxu0
    %v2570 = vadd.f32 %v2531, %v2569
    %v2571 = vpop.f32.mrf.mxu0
    %v2572 = vadd.f32 %v2532, %v2571
    %2573 = vmatmul.bf16.gmra.mxu0 %v2553
    %v2574 = vpop.f32.mrf.mxu0
    %v2575 = vadd.f32 %v2533, %v2574
    %v2576 = vpop.f32.mrf.mxu0
    %2577 = vdwg.mxu0
    %v2578 = vpack.c.bf16 %v2565, %v2565
    %v2579 = vpack.c.bf16 %v2567, %v2567
    %v2580 = vpack.c.bf16 %v2570, %v2570
    %v2581 = vpack.c.bf16 %v2572, %v2572
    %v2582 = vpack.c.bf16 %v2575, %v2575
    %v2588 = vunpack.c.l.b16 %v2578
    %v2589 = vunpack.c.l.b16 %v2579
    %v2590 = vunpack.c.l.b16 %v2580
    %v2591 = vunpack.c.l.b16 %v2581
    %v2592 = vunpack.c.l.b16 %v2582
    %v2593 = vpack.c.b16 %v2589, %v2588
    %v2594 = vpack.c.b16 %v2591, %v2590
    %v2595 = vpack.c.b16 %v2592, %v2592
    %v2597 = vsel %vm133, %v2521, 0
    %v2600 = vsel %vm133, %v2593, 0
    %v2603 = vsel %vm133, %v2594, 0
    %v2606 = vsel %vm133, %v2595, 0
    %2608 = vmatpush.bf16.xpose.msra.mxu0 0
    %2609 = vmatpush.bf16.xpose.msra.mxu0 0
    %2610 = vmatpush.bf16.xpose.msra.mxu0 0
    %2611 = vmatpush.bf16.xpose.msra.mxu0 0
    %2612 = vmatpush.bf16.xpose.msra.mxu0 0
    %2613 = vmatpush.bf16.xpose.msra.mxu0 %v2606
    %2614 = vmatpush.bf16.xpose.msra.mxu0 %v2603
    %2615 = vmatpush.bf16.xpose.msra.mxu0 %v2600
    %2616 = vmatmul.bf16.gmra.mxu0 %v2597
    %v2617 = vpop.f32.mrf.mxu0
    %v2618 = vadd.f32 0.0, %v2617
    %v2619 = vpop.f32.mrf.mxu0
    %2620 = vdwg.mxu0
    %v2621 = vsel %vm175, %v2618, -inf
    %2622 = vmax.xlane.f32.xlu0 %v2621
    %v2623 = vpop.xlane.xlu0 %2622
    %v2624 = vsub.f32 %v2618, %v2623
    %v2625 = vmul.f32 %v2624, 1.442695
    %v2626 = vpow.pop %v2625
    %v2627 = vsel %vm175, %v2626, 0.0
    %2628 = vadd.xlane.f32.xlu0 %v2627
    %v2629 = vpop.xlane.xlu0 %2628
    %v2630 = vrcp.pop %v2629
    %v2631 = vmul.f32 %v2626, %v2630
    %v2632 = vpack.c.bf16 %v2631, %v2631
    %2633 = vrot.lane.b32.xlu0 %v2593, 96
    %v2634 = vpop.permute.xlu0 %2633
    %2635 = vrot.lane.b32.xlu0 %v2594, 96
    %v2636 = vpop.permute.xlu0 %2635
    %2637 = vrot.lane.b32.xlu0 %v2595, 96
    %v2638 = vpop.permute.xlu0 %2637
    %v2642 = vsel %vm175, %v2632, 0
    %v2645 = vsel %vm252, %v2638, 0
    %2647 = vmatpush.bf16.msra.mxu0 0
    %2648 = vmatpush.bf16.msra.mxu0 0
    %2649 = vmatpush.bf16.msra.mxu0 0
    %2650 = vmatpush.bf16.msra.mxu0 0
    %2651 = vmatpush.bf16.msra.mxu0 0
    %2652 = vmatpush.bf16.msra.mxu0 %v2645
    %2653 = vmatpush.bf16.msra.mxu0 %v2636
    %2654 = vmatpush.bf16.msra.mxu0 %v2634
    %2655 = vmatmul.bf16.gmra.mxu0 %v2642
    %v2656 = vpop.f32.mrf.mxu0
    %v2657 = vadd.f32 0.0, %v2656
    %v2658 = vpop.f32.mrf.mxu0
    %2659 = vdwg.mxu0
    %v2661 = vunpack.c.l.b16 %v2521
    %v2662 = vpack.c.b16 %v2661, %v2661
    %2663 = vrot.lane.b32.xlu0 %v2662, 120
    %v2664 = vpop.permute.xlu0 %2663
    %2665 = vrot.lane.b32.xlu0 %v2593, 120
    %v2666 = vpop.permute.xlu0 %2665
    %2667 = vrot.lane.b32.xlu0 %v2594, 120
    %v2668 = vpop.permute.xlu0 %2667
    %2669 = vrot.lane.b32.xlu0 %v2595, 120
    %v2670 = vpop.permute.xlu0 %2669
    %v2672 = vsel %vm133, %v2664, 0
    %v2675 = vsel %vm133, %v2666, 0
    %v2678 = vsel %vm133, %v2668, 0
    %v2681 = vsel %vm133, %v2670, 0
    %2683 = vmatpush.bf16.xpose.msra.mxu0 0
    %2684 = vmatpush.bf16.xpose.msra.mxu0 0
    %2685 = vmatpush.bf16.xpose.msra.mxu0 0
    %2686 = vmatpush.bf16.xpose.msra.mxu0 0
    %2687 = vmatpush.bf16.xpose.msra.mxu0 0
    %2688 = vmatpush.bf16.xpose.msra.mxu0 %v2681
    %2689 = vmatpush.bf16.xpose.msra.mxu0 %v2678
    %2690 = vmatpush.bf16.xpose.msra.mxu0 %v2675
    %2691 = vmatmul.bf16.gmra.mxu0 %v2672
    %v2692 = vpop.f32.mrf.mxu0
    %v2693 = vadd.f32 0.0, %v2692
    %v2694 = vpop.f32.mrf.mxu0
    %2695 = vdwg.mxu0
    %v2696 = vsel %vm175, %v2693, -inf
    %2697 = vmax.xlane.f32.xlu0 %v2696
    %v2698 = vpop.xlane.xlu0 %2697
    %v2699 = vsub.f32 %v2693, %v2698
    %v2700 = vmul.f32 %v2699, 1.442695
    %v2701 = vpow.pop %v2700
    %v2702 = vsel %vm175, %v2701, 0.0
    %2703 = vadd.xlane.f32.xlu0 %v2702
    %v2704 = vpop.xlane.xlu0 %2703
    %v2705 = vrcp.pop %v2704
    %v2706 = vmul.f32 %v2701, %v2705
    %v2707 = vpack.c.bf16 %v2706, %v2706
    %2708 = vrot.lane.b32.xlu0 %v2593, 88
    %v2709 = vpop.permute.xlu0 %2708
    %2710 = vrot.lane.b32.xlu0 %v2594, 88
    %v2711 = vpop.permute.xlu0 %2710
    %2712 = vrot.lane.b32.xlu0 %v2595, 88
    %v2713 = vpop.permute.xlu0 %2712
    %v2717 = vsel %vm175, %v2707, 0
    %v2720 = vsel %vm252, %v2713, 0
    %2722 = vmatpush.bf16.msra.mxu0 0
    %2723 = vmatpush.bf16.msra.mxu0 0
    %2724 = vmatpush.bf16.msra.mxu0 0
    %2725 = vmatpush.bf16.msra.mxu0 0
    %2726 = vmatpush.bf16.msra.mxu0 0
    %2727 = vmatpush.bf16.msra.mxu0 %v2720
    %2728 = vmatpush.bf16.msra.mxu0 %v2711
    %2729 = vmatpush.bf16.msra.mxu0 %v2709
    %2730 = vmatmul.bf16.gmra.mxu0 %v2717
    %v2731 = vpop.f32.mrf.mxu0
    %v2732 = vadd.f32 0.0, %v2731
    %v2733 = vpop.f32.mrf.mxu0
    %2734 = vdwg.mxu0
    %2735 = vrot.lane.b32.xlu0 %v2662, 112
    %v2736 = vpop.permute.xlu0 %2735
    %2737 = vrot.lane.b32.xlu0 %v2593, 112
    %v2738 = vpop.permute.xlu0 %2737
    %2739 = vrot.lane.b32.xlu0 %v2594, 112
    %v2740 = vpop.permute.xlu0 %2739
    %2741 = vrot.lane.b32.xlu0 %v2595, 112
    %v2742 = vpop.permute.xlu0 %2741
    %v2744 = vsel %vm133, %v2736, 0
    %v2747 = vsel %vm133, %v2738, 0
    %v2750 = vsel %vm133, %v2740, 0
    %v2753 = vsel %vm133, %v2742, 0
    %2755 = vmatpush.bf16.xpose.msra.mxu0 0
    %2756 = vmatpush.bf16.xpose.msra.mxu0 0
    %2757 = vmatpush.bf16.xpose.msra.mxu0 0
    %2758 = vmatpush.bf16.xpose.msra.mxu0 0
    %2759 = vmatpush.bf16.xpose.msra.mxu0 0
    %2760 = vmatpush.bf16.xpose.msra.mxu0 %v2753
    %2761 = vmatpush.bf16.xpose.msra.mxu0 %v2750
    %2762 = vmatpush.bf16.xpose.msra.mxu0 %v2747
    %2763 = vmatmul.bf16.gmra.mxu0 %v2744
    %v2764 = vpop.f32.mrf.mxu0
    %v2765 = vadd.f32 0.0, %v2764
    %v2766 = vpop.f32.mrf.mxu0
    %2767 = vdwg.mxu0
    %v2768 = vsel %vm175, %v2765, -inf
    %2769 = vmax.xlane.f32.xlu0 %v2768
    %v2770 = vpop.xlane.xlu0 %2769
    %v2771 = vsub.f32 %v2765, %v2770
    %v2772 = vmul.f32 %v2771, 1.442695
    %v2773 = vpow.pop %v2772
    %v2774 = vsel %vm175, %v2773, 0.0
    %2775 = vadd.xlane.f32.xlu0 %v2774
    %v2776 = vpop.xlane.xlu0 %2775
    %v2777 = vrcp.pop %v2776
    %v2778 = vmul.f32 %v2773, %v2777
    %v2779 = vpack.c.bf16 %v2778, %v2778
    %2780 = vrot.lane.b32.xlu0 %v2593, 80
    %v2781 = vpop.permute.xlu0 %2780
    %2782 = vrot.lane.b32.xlu0 %v2594, 80
    %v2783 = vpop.permute.xlu0 %2782
    %2784 = vrot.lane.b32.xlu0 %v2595, 80
    %v2785 = vpop.permute.xlu0 %2784
    %v2789 = vsel %vm175, %v2779, 0
    %v2792 = vsel %vm252, %v2785, 0
    %2794 = vmatpush.bf16.msra.mxu0 0
    %2795 = vmatpush.bf16.msra.mxu0 0
    %2796 = vmatpush.bf16.msra.mxu0 0
    %2797 = vmatpush.bf16.msra.mxu0 0
    %2798 = vmatpush.bf16.msra.mxu0 0
    %2799 = vmatpush.bf16.msra.mxu0 %v2792
    %2800 = vmatpush.bf16.msra.mxu0 %v2783
    %2801 = vmatpush.bf16.msra.mxu0 %v2781
    %2802 = vmatmul.bf16.gmra.mxu0 %v2789
    %v2803 = vpop.f32.mrf.mxu0
    %v2804 = vadd.f32 0.0, %v2803
    %v2805 = vpop.f32.mrf.mxu0
    %2806 = vdwg.mxu0
    %2807 = vrot.lane.b32.xlu0 %v2662, 104
    %v2808 = vpop.permute.xlu0 %2807
    %2809 = vrot.lane.b32.xlu0 %v2593, 104
    %v2810 = vpop.permute.xlu0 %2809
    %2811 = vrot.lane.b32.xlu0 %v2594, 104
    %v2812 = vpop.permute.xlu0 %2811
    %2813 = vrot.lane.b32.xlu0 %v2595, 104
    %v2814 = vpop.permute.xlu0 %2813
    %v2816 = vsel %vm133, %v2808, 0
    %v2819 = vsel %vm133, %v2810, 0
    %v2822 = vsel %vm133, %v2812, 0
    %v2825 = vsel %vm133, %v2814, 0
    %2827 = vmatpush.bf16.xpose.msra.mxu0 0
    %2828 = vmatpush.bf16.xpose.msra.mxu0 0
    %2829 = vmatpush.bf16.xpose.msra.mxu0 0
    %2830 = vmatpush.bf16.xpose.msra.mxu0 0
    %2831 = vmatpush.bf16.xpose.msra.mxu0 0
    %2832 = vmatpush.bf16.xpose.msra.mxu0 %v2825
    %2833 = vmatpush.bf16.xpose.msra.mxu0 %v2822
    %2834 = vmatpush.bf16.xpose.msra.mxu0 %v2819
    %2835 = vmatmul.bf16.gmra.mxu0 %v2816
    %v2836 = vpop.f32.mrf.mxu0
    %v2837 = vadd.f32 0.0, %v2836
    %v2838 = vpop.f32.mrf.mxu0
    %2839 = vdwg.mxu0
    %v2840 = vsel %vm175, %v2837, -inf
    %2841 = vmax.xlane.f32.xlu0 %v2840
    %v2842 = vpop.xlane.xlu0 %2841
    %v2843 = vsub.f32 %v2837, %v2842
    %v2844 = vmul.f32 %v2843, 1.442695
    %v2845 = vpow.pop %v2844
    %v2846 = vsel %vm175, %v2845, 0.0
    %2847 = vadd.xlane.f32.xlu0 %v2846
    %v2848 = vpop.xlane.xlu0 %2847
    %v2849 = vrcp.pop %v2848
    %v2850 = vmul.f32 %v2845, %v2849
    %v2851 = vpack.c.bf16 %v2850, %v2850
    %2852 = vrot.lane.b32.xlu0 %v2593, 72
    %v2853 = vpop.permute.xlu0 %2852
    %2854 = vrot.lane.b32.xlu0 %v2594, 72
    %v2855 = vpop.permute.xlu0 %2854
    %2856 = vrot.lane.b32.xlu0 %v2595, 72
    %v2857 = vpop.permute.xlu0 %2856
    %v2861 = vsel %vm175, %v2851, 0
    %v2864 = vsel %vm252, %v2857, 0
    %2866 = vmatpush.bf16.msra.mxu0 0
    %2867 = vmatpush.bf16.msra.mxu0 0
    %2868 = vmatpush.bf16.msra.mxu0 0
    %2869 = vmatpush.bf16.msra.mxu0 0
    %2870 = vmatpush.bf16.msra.mxu0 0
    %2871 = vmatpush.bf16.msra.mxu0 %v2864
    %2872 = vmatpush.bf16.msra.mxu0 %v2855
    %2873 = vmatpush.bf16.msra.mxu0 %v2853
    %2874 = vmatmul.bf16.gmra.mxu0 %v2861
    %v2875 = vpop.f32.mrf.mxu0
    %v2876 = vadd.f32 0.0, %v2875
    %v2877 = vpop.f32.mrf.mxu0
    %2878 = vdwg.mxu0
    %2880 = vrot.lane.b32.xlu0 %v2732, 8
    %v2881 = vpop.permute.xlu0 %2880
    %2884 = vrot.lane.b32.xlu0 %v2804, 16
    %v2885 = vpop.permute.xlu0 %2884
    %2888 = vrot.lane.b32.xlu0 %v2876, 24
    %v2889 = vpop.permute.xlu0 %2888
    %v2891 = vsel %vm133, %v2657, %v2881
    %v2892 = vsel %vm806, %v2891, %v2885
    %v2893 = vsel %vm812, %v2892, %v2889
    %v2894 = vpack.c.bf16 %v2893, %v2893
    %v2895 = vld [vmem:[#allocation2 + $0xc0] sm:$0xf]
    %v2896 = vld [vmem:[#allocation2 + $0xc4] sm:$0xf]
    %v2897 = vld [vmem:[#allocation2 + $0xc8] sm:$0xf]
    %v2898 = vld [vmem:[#allocation2 + $0xcc] sm:$0xf]
    %v2899 = vld [vmem:[#allocation4 + $0xd8] sm:$0x1]
    %v2900 = vperm.slane %v2899, 0
    %v2905 = vunpack.c.l.b16 %v2895
    %v2906 = vunpack.c.l.b16 %v2896
    %v2907 = vunpack.c.l.b16 %v2897
    %v2908 = vunpack.c.l.b16 %v2898
    %v2909 = vpack.c.b16 %v2906, %v2905
    %v2910 = vpack.c.b16 %v2908, %v2907
    %v2914 = vsel %vm76, %v2894, 0
    %2916 = vmatpush.bf16.msra.mxu0 0
    %2917 = vmatpush.bf16.msra.mxu0 0
    %2918 = vmatpush.bf16.msra.mxu0 0
    %2919 = vmatpush.bf16.msra.mxu0 0
    %2920 = vmatpush.bf16.msra.mxu0 0
    %2921 = vmatpush.bf16.msra.mxu0 0
    %2922 = vmatpush.bf16.msra.mxu0 %v2910
    %2923 = vmatpush.bf16.msra.mxu0 %v2909
    %2924 = vmatmul.bf16.gmra.mxu0 %v2914
    %v2925 = vpop.f32.mrf.mxu0
    %v2926 = vadd.f32 %v2900, %v2925
    %v2927 = vpop.f32.mrf.mxu0
    %2928 = vdwg.mxu0
    %v2929 = vadd.f32 %v2486, %v2926
    %v2930 = vld [vmem:[#allocation4 + $0xf8] sm:$0x3]
    %v2931 = vsel %vm76, %v2929, 0.0
    %2932 = vadd.xlane.f32.xlu0 %v2931
    %v2933 = vpop.xlane.xlu0 %2932
    %v2934 = vmul.f32 %v2933, %v899
    %v2935 = vsub.f32 %v2929, %v2934
    %v2936 = vmul.f32 %v2935, %v2935
    %v2937 = vsel %vm76, %v2936, 0.0
    %2938 = vadd.xlane.f32.xlu0 %v2937
    %v2939 = vpop.xlane.xlu0 %2938
    %v2940 = vmul.f32 %v2939, %v899
    %v2941 = vadd.f32 %v2940, 1e-05
    %v2942 = vrsqrt.pop %v2941
    %v2943 = vmul.f32 %v2942, %v2941
    %v2944 = vmul.f32 %v2943, %v2942
    %v2945 = vmul.f32 0.5, %v2944
    %v2946 = vsub.f32 1.5, %v2945
    %v2947 = vmul.f32 %v2942, %v2946
    %vm2948 = vweird.f32 %v2941
    %vm2949 = vweird.f32 %v2942
    %vm2950 = vmor %vm2948, %vm2949
    %v2951 = vsel %vm2950, %v2942, %v2947
    %v2952 = vmul.f32 %v2935, %v2951
    %v2953 = vperm.slane %v2930, 0
    %v2954 = vmul.f32 %v2952, %v2953
    %v2955 = vperm.slane %v2930, 1
    %v2956 = vadd.f32 %v2954, %v2955
    %v2957 = vpack.c.bf16 %v2956, %v2956
    %v2958 = vld [vmem:[#allocation2 + $0xd0] sm:$0xf]
    %v2959 = vld [vmem:[#allocation2 + $0xd4] sm:$0xf]
    %v2960 = vld [vmem:[#allocation2 + $0xd8] sm:$0xf]
    %v2961 = vld [vmem:[#allocation2 + $0xdc] sm:$0xf]
    %v2962 = vld [vmem:[#allocation4 + $0xe0] sm:$0x1]
    %v2963 = vperm.slane %v2962, 0
    %v2968 = vunpack.c.l.b16 %v2958
    %v2969 = vunpack.c.l.b16 %v2959
    %v2970 = vunpack.c.l.b16 %v2960
    %v2971 = vunpack.c.l.b16 %v2961
    %v2972 = vpack.c.b16 %v2969, %v2968
    %v2973 = vpack.c.b16 %v2971, %v2970
    %v2977 = vsel %vm76, %v2957, 0
    %2979 = vmatpush.bf16.msra.mxu0 0
    %2980 = vmatpush.bf16.msra.mxu0 0
    %2981 = vmatpush.bf16.msra.mxu0 0
    %2982 = vmatpush.bf16.msra.mxu0 0
    %2983 = vmatpush.bf16.msra.mxu0 0
    %2984 = vmatpush.bf16.msra.mxu0 0
    %2985 = vmatpush.bf16.msra.mxu0 %v2973
    %2986 = vmatpush.bf16.msra.mxu0 %v2972
    %2987 = vmatmul.bf16.gmra.mxu0 %v2977
    %v2988 = vpop.f32.mrf.mxu0
    %v2989 = vadd.f32 %v2963, %v2988
    %v2990 = vpop.f32.mrf.mxu0
    %2991 = vdwg.mxu0
    %v2992 = vmax.f32 %v2989, 0.0
    %v2993 = vpack.c.bf16 %v2992, %v2992
    %v2994 = vld [vmem:[#allocation2 + $0xe0] sm:$0xf]
    %v2995 = vld [vmem:[#allocation2 + $0xe4] sm:$0xf]
    %v2996 = vld [vmem:[#allocation2 + $0xe8] sm:$0xf]
    %v2997 = vld [vmem:[#allocation2 + $0xec] sm:$0xf]
    %v2998 = vld [vmem:[#allocation2 + $0xf0] sm:$0xf]
    %v2999 = vld [vmem:[#allocation2 + $0xf4] sm:$0xf]
    %v3000 = vld [vmem:[#allocation2 + $0xf8] sm:$0xf]
    %v3001 = vld [vmem:[#allocation2 + $0xfc] sm:$0xf]
    %v3002 = vld [vmem:[#allocation4 + $0xe8] sm:$0x1]
    %v3003 = vperm.slane %v3002, 0
    %v3012 = vunpack.c.l.b16 %v2994
    %v3013 = vunpack.c.l.b16 %v2995
    %v3014 = vunpack.c.l.b16 %v2996
    %v3015 = vunpack.c.l.b16 %v2997
    %v3016 = vunpack.c.l.b16 %v2998
    %v3017 = vunpack.c.l.b16 %v2999
    %v3018 = vunpack.c.l.b16 %v3000
    %v3019 = vunpack.c.l.b16 %v3001
    %v3020 = vpack.c.b16 %v3013, %v3012
    %v3021 = vpack.c.b16 %v3015, %v3014
    %v3022 = vpack.c.b16 %v3017, %v3016
    %v3023 = vpack.c.b16 %v3019, %v3018
    %v3029 = vsel %vm1102, %v2993, 0
    %3031 = vmatpush.bf16.msra.mxu0 0
    %3032 = vmatpush.bf16.msra.mxu0 0
    %3033 = vmatpush.bf16.msra.mxu0 0
    %3034 = vmatpush.bf16.msra.mxu0 0
    %3035 = vmatpush.bf16.msra.mxu0 %v3023
    %3036 = vmatpush.bf16.msra.mxu0 %v3022
    %3037 = vmatpush.bf16.msra.mxu0 %v3021
    %3038 = vmatpush.bf16.msra.mxu0 %v3020
    %3039 = vmatmul.bf16.gmra.mxu0 %v3029
    %v3040 = vpop.f32.mrf.mxu0
    %v3041 = vadd.f32 %v3003, %v3040
    %v3042 = vpop.f32.mrf.mxu0
    %3043 = vdwg.mxu0
    %v3044 = vadd.f32 %v2956, %v3041
    %v3045 = vld [vmem:[#allocation4 + $0x100] sm:$0x3]
    %v3046 = vsel %vm76, %v3044, 0.0
    %3047 = vadd.xlane.f32.xlu0 %v3046
    %v3048 = vpop.xlane.xlu0 %3047
    %v3049 = vmul.f32 %v3048, %v899
    %v3050 = vsub.f32 %v3044, %v3049
    %v3051 = vmul.f32 %v3050, %v3050
    %v3052 = vsel %vm76, %v3051, 0.0
    %3053 = vadd.xlane.f32.xlu0 %v3052
    %v3054 = vpop.xlane.xlu0 %3053
    %v3055 = vmul.f32 %v3054, %v899
    %v3056 = vadd.f32 %v3055, 1e-05
    %v3057 = vrsqrt.pop %v3056
    %v3058 = vmul.f32 %v3057, %v3056
    %v3059 = vmul.f32 %v3058, %v3057
    %v3060 = vmul.f32 0.5, %v3059
    %v3061 = vsub.f32 1.5, %v3060
    %v3062 = vmul.f32 %v3057, %v3061
    %vm3063 = vweird.f32 %v3056
    %vm3064 = vweird.f32 %v3057
    %vm3065 = vmor %vm3063, %vm3064
    %v3066 = vsel %vm3065, %v3057, %v3062
    %v3067 = vmul.f32 %v3050, %v3066
    %v3068 = vperm.slane %v3045, 0
    %v3069 = vmul.f32 %v3067, %v3068
    %v3070 = vperm.slane %v3045, 1
    %v3071 = vadd.f32 %v3069, %v3070
    %v3072 = vld [vmem:[#allocation4 + $0x108] sm:$0x3]
    %v3073 = vsel %vm76, %v3071, 0.0
    %3074 = vadd.xlane.f32.xlu0 %v3073
    %v3075 = vpop.xlane.xlu0 %3074
    %v3076 = vmul.f32 %v3075, %v899
    %v3077 = vsub.f32 %v3071, %v3076
    %v3078 = vmul.f32 %v3077, %v3077
    %v3079 = vsel %vm76, %v3078, 0.0
    %3080 = vadd.xlane.f32.xlu0 %v3079
    %v3081 = vpop.xlane.xlu0 %3080
    %v3082 = vmul.f32 %v3081, %v899
    %v3083 = vadd.f32 %v3082, 1e-05
    %v3084 = vrsqrt.pop %v3083
    %v3085 = vmul.f32 %v3084, %v3083
    %v3086 = vmul.f32 %v3085, %v3084
    %v3087 = vmul.f32 0.5, %v3086
    %v3088 = vsub.f32 1.5, %v3087
    %v3089 = vmul.f32 %v3084, %v3088
    %vm3090 = vweird.f32 %v3083
    %vm3091 = vweird.f32 %v3084
    %vm3092 = vmor %vm3090, %vm3091
    %v3093 = vsel %vm3092, %v3084, %v3089
    %v3094 = vmul.f32 %v3077, %v3093
    %v3095 = vperm.slane %v3072, 0
    %v3096 = vmul.f32 %v3094, %v3095
    %v3097 = vperm.slane %v3072, 1
    %v3098 = vadd.f32 %v3096, %v3097
    %v3099 = vpack.c.bf16 %v3098, %v3098
    %v3100 = vld [vmem:[#allocation2 + $0x100] sm:$0xf]
    %v3101 = vld [vmem:[#allocation2 + $0x104] sm:$0xf]
    %v3102 = vld [vmem:[#allocation2 + $0x108] sm:$0xf]
    %v3103 = vld [vmem:[#allocation2 + $0x10c] sm:$0xf]
    %v3104 = vld [vmem:[#allocation4 + $0x110] sm:$0x1]
    %v3105 = vperm.slane %v3104, 0
    %v3110 = vunpack.c.l.b16 %v3100
    %v3111 = vunpack.c.l.b16 %v3101
    %v3112 = vunpack.c.l.b16 %v3102
    %v3113 = vunpack.c.l.b16 %v3103
    %v3114 = vpack.c.b16 %v3111, %v3110
    %v3115 = vpack.c.b16 %v3113, %v3112
    %v3119 = vsel %vm76, %v3099, 0
    %3121 = vmatpush.bf16.msra.mxu0 0
    %3122 = vmatpush.bf16.msra.mxu0 0
    %3123 = vmatpush.bf16.msra.mxu0 0
    %3124 = vmatpush.bf16.msra.mxu0 0
    %3125 = vmatpush.bf16.msra.mxu0 0
    %3126 = vmatpush.bf16.msra.mxu0 0
    %3127 = vmatpush.bf16.msra.mxu0 %v3115
    %3128 = vmatpush.bf16.msra.mxu0 %v3114
    %3129 = vmatmul.bf16.gmra.mxu0 %v3119
    %v3130 = vpop.f32.mrf.mxu0
    %v3131 = vadd.f32 %v3105, %v3130
    %v3132 = vpop.f32.mrf.mxu0
    %3133 = vdwg.mxu0
    %3134 = vst [vmem:[%s3] sm:$0xff] %v3131
    // Predicated region
    $region22: #{_lambda_.1} parent=1 // pred_check
      _
    $region23: #{_lambda_.1} parent=1 // pred_check_branch
      %3136 = sbr.rel (0) target = $region25
    $region24: #{_lambda_.1} parent=1 // pred_region
      _
    $region25: #{_lambda_.1} parent=1 // pred_fallthru
      _
    // Predicated region
    $region26: #{_lambda_.1} parent=1 // pred_check
      _
    $region27: #{_lambda_.1} parent=1 // pred_check_branch
      %3138 = sbr.rel (0) target = $region29
    $region28: #{_lambda_.1} parent=1 // pred_region
      _
    $region29: #{_lambda_.1} parent=1 // pred_fallthru
      _
    %3139 = vsyncpa [#allocation3], 1
    %3140 = vsyncpa [#allocation5], 1

</llo_original>
